<compile_context>
chip_gen: v7x
topology: tpu7x:2x2x1
jax: 0.10.0
libtpu: 0.0.40
codegen_flags: <defaults>
</compile_context>

<pallas_src>
import functools

import jax
import jax.numpy as jnp
import numpy as np
from jax import lax
from jax.experimental import pallas as pl
from jax.experimental.pallas import tpu as pltpu

EPS = 1e-5      # PyTorch BatchNorm2d default eps
LANE = 128      # TPU lane width


def _ru(x, m):
    return ((x + m - 1) // m) * m


def _pad2(a, rows, cols):
    return jnp.pad(a, ((0, rows - a.shape[0]), (0, cols - a.shape[1])))


def _pad1(a, cols):
    return jnp.pad(a, (0, cols - a.shape[0]))


def _pick_tm(m, tm_max):
    """Largest multiple of 8 <= tm_max that divides m (prefers >= 2 grid steps)."""
    cap = min(tm_max, m)
    divs = [t for t in range(8, cap + 1, 8) if m % t == 0]
    if not divs:
        return _ru(cap, 8), False            # fallback: row padding + masking
    small = [t for t in divs if t < m] or divs
    return max(small), True


# ---------------------------------------------------------------------------
# Kernels
# ---------------------------------------------------------------------------
def _mm_stats_kernel(x_ref, w_ref, y_ref, s_ref):
    """1x1 conv tile: y = x @ w ; per-tile partial sum / sum-of-squares."""
    y = jnp.dot(x_ref[...], w_ref[...], preferred_element_type=jnp.float32)
    y_ref[...] = y.astype(y_ref.dtype)
    s_ref[0, 0:1, :] = jnp.sum(y, axis=0, keepdims=True)
    s_ref[0, 1:2, :] = jnp.sum(y * y, axis=0, keepdims=True)


def _bn_relu_conv3x3_kernel(y1_ref, sc_ref, bi_ref, w_ref, y2_ref, s_ref,
                            pad_ref, *, h, w, cin, cout):
    """Fused BN1-apply + ReLU + zero-pad (in VMEM) + 3x3 conv + partial stats.

    The 3x3 is computed as 3 matmuls (one per kh) with K = 3*cin: the kw taps
    are folded into the contraction via a lane-dim concat of shifted views.
    """
    sc = sc_ref[...].reshape(1, 1, 1, cin)
    bi = bi_ref[...].reshape(1, 1, 1, cin)
    a = jnp.maximum(y1_ref[...].astype(jnp.float32) * sc + bi, 0.0)

    pad_ref[...] = jnp.zeros_like(pad_ref)                       # zero border
    pad_ref[0:1, 1:h + 1, 1:w + 1, :] = a.astype(pad_ref.dtype)  # interior

    acc = jnp.zeros((h * w, cout), jnp.float32)
    for kh in range(3):
        cols = jnp.concatenate(
            [pad_ref[0, kh:kh + h, 0:w, :],
             pad_ref[0, kh:kh + h, 1:w + 1, :],
             pad_ref[0, kh:kh + h, 2:w + 2, :]], axis=-1)        # (h, w, 3*cin)
        acc = acc + jnp.dot(cols.reshape(h * w, 3 * cin), w_ref[kh],
                            preferred_element_type=jnp.float32)

    y2_ref[...] = acc.reshape(1, h, w, cout).astype(y2_ref.dtype)
    s_ref[0, 0:1, :] = jnp.sum(acc, axis=0, keepdims=True)
    s_ref[0, 1:2, :] = jnp.sum(acc * acc, axis=0, keepdims=True)


def _bn_relu_mm_stats_kernel(y_in_ref, sc_ref, bi_ref, w_ref, y_ref, s_ref,
                             *, tm, m_valid, need_mask, cdt):
    """Fused: a = relu(BN2(y2)) ; y3 = a @ w3 ; partial stats (masked if padded)."""
    a = jnp.maximum(
        y_in_ref[...].astype(jnp.float32) * sc_ref[...] + bi_ref[...], 0.0)
    y = jnp.dot(a.astype(cdt), w_ref[...], preferred_element_type=jnp.float32)
    y_ref[...] = y.astype(y_ref.dtype)
    if need_mask:   # only emitted when M had to be padded up to Mp
        row = pl.program_id(0) * tm + lax.broadcasted_iota(jnp.int32, (tm, 1), 0)
        y = jnp.where(row < m_valid, y, 0.0)
    s_ref[0, 0:1, :] = jnp.sum(y, axis=0, keepdims=True)
    s_ref[0, 1:2, :] = jnp.sum(y * y, axis=0, keepdims=True)


def _bn_res_relu_kernel(y_ref, sc_ref, bi_ref, r_ref, o_ref):
    """Final: BN3-apply + residual add (reuses bf16 x_p) + ReLU, fp32 math."""
    o = (y_ref[...].astype(jnp.float32) * sc_ref[...] + bi_ref[...]
         + r_ref[...].astype(jnp.float32))
    o_ref[...] = jnp.maximum(o, 0.0).astype(o_ref.dtype)


# ---------------------------------------------------------------------------
# Tiny JAX glue: reduce per-tile stats (a few KB) into BN scale / bias
# ---------------------------------------------------------------------------
def _bn_scale_bias(partial_stats, count, gamma_p, beta_p):
    tot = jnp.sum(partial_stats, axis=0)                       # (2, Cp)
    mean = tot[0] / count
    var = jnp.maximum(tot[1] / count - mean * mean, 0.0)       # biased (train BN)
    scale = gamma_p * lax.rsqrt(var + EPS)
    bias = beta_p - mean * scale
    return scale.reshape(1, -1), bias.reshape(1, -1)


# ---------------------------------------------------------------------------
# Bottleneck forward (stride=1, downsample=None)
# ---------------------------------------------------------------------------
def bottleneck_forward(x_nchw, params, *, compute_dtype=jnp.bfloat16, tm=512):
    N, Cin, H, W = x_nchw.shape
    planes = params["w1"].shape[0]
    assert Cin == 4 * planes, "identity shortcut requires inplanes == planes*4"
    C1, C3 = planes, 4 * planes

    # lane-dense padded channel sizes
    Kp = _ru(Cin, LANE)
    C1p = _ru(C1, LANE)
    C2p = C1p
    C3p = _ru(C3, LANE)
    assert Kp == C3p                      # lets x_p double as the residual

    M = N * H * W
    TM, exact = _pick_tm(M, tm)
    Mp = M if exact else _ru(M, TM)
    nt = Mp // TM
    par = pltpu.CompilerParams(dimension_semantics=("parallel",))
    itm = np.dtype(compute_dtype).itemsize

    # ---- layout / weight prep (tiny XLA glue) ------------------------------
    x_flat = jnp.transpose(x_nchw, (0, 2, 3, 1)).reshape(M, Cin)
    x_p = _pad2(x_flat, Mp, Kp).astype(compute_dtype)   # MXU input AND residual

    w1 = _pad2(params["w1"][:, :, 0, 0].T, Kp, C1p).astype(compute_dtype)
    w2 = jnp.transpose(params["w2"], (2, 3, 1, 0))               # (3,3,C1,C1)
    w2 = jnp.pad(w2, ((0, 0), (0, 0), (0, C1p - C1), (0, C2p - C1)))
    w2 = w2.reshape(3, 3 * C1p, C2p).astype(compute_dtype)       # kw folded into K
    w3 = _pad2(params["w3"][:, :, 0, 0].T, C2p, C3p).astype(compute_dtype)

    g1 = _pad1(params["g1"].astype(jnp.float32), C1p)
    b1 = _pad1(params["b1"].astype(jnp.float32), C1p)
    g2 = _pad1(params["g2"].astype(jnp.float32), C2p)
    b2 = _pad1(params["b2"].astype(jnp.float32), C2p)
    g3 = _pad1(params["g3"].astype(jnp.float32), C3p)
    b3 = _pad1(params["b3"].astype(jnp.float32), C3p)

    # ---- conv1 (1x1): M-tiled matmul + partial BN stats --------------------
    y1, st1 = pl.pallas_call(
        _mm_stats_kernel,
        grid=(nt,),
        in_specs=[pl.BlockSpec((TM, Kp), lambda i: (i, 0)),
                  pl.BlockSpec((Kp, C1p), lambda i: (0, 0))],
        out_specs=[pl.BlockSpec((TM, C1p), lambda i: (i, 0)),
                   pl.BlockSpec((1, 2, C1p), lambda i: (i, 0, 0))],
        out_shape=[jax.ShapeDtypeStruct((Mp, C1p), compute_dtype),
                   jax.ShapeDtypeStruct((nt, 2, C1p), jnp.float32)],
        compiler_params=par,
        cost_estimate=pl.CostEstimate(
            flops=2 * Mp * Kp * C1p, transcendentals=0,
            bytes_accessed=(Mp * Kp + Kp * C1p + Mp * C1p) * itm),
    )(x_p, w1)
    sc1, bi1 = _bn_scale_bias(st1, M, g1, b1)

    # ---- conv2 (3x3, pad=1): BN1 + ReLU + pad fused, per-image grid --------
    y1_img = (y1 if Mp == M else y1[:M]).reshape(N, H, W, C1p)
    conv2_kernel = functools.partial(_bn_relu_conv3x3_kernel,
                                     h=H, w=W, cin=C1p, cout=C2p)
    y2, st2 = pl.pallas_call(
        conv2_kernel,
        grid=(N,),
        in_specs=[pl.BlockSpec((1, H, W, C1p), lambda n: (n, 0, 0, 0)),
                  pl.BlockSpec((1, C1p), lambda n: (0, 0)),
                  pl.BlockSpec((1, C1p), lambda n: (0, 0)),
                  pl.BlockSpec((3, 3 * C1p, C2p), lambda n: (0, 0, 0))],
        out_specs=[pl.BlockSpec((1, H, W, C2p), lambda n: (n, 0, 0, 0)),
                   pl.BlockSpec((1, 2, C2p), lambda n: (n, 0, 0))],
        out_shape=[jax.ShapeDtypeStruct((N, H, W, C2p), compute_dtype),
                   jax.ShapeDtypeStruct((N, 2, C2p), jnp.float32)],
        scratch_shapes=[pltpu.VMEM((1, H + 2, W + 2, C1p), compute_dtype)],
        compiler_params=par,
        cost_estimate=pl.CostEstimate(
            flops=2 * M * 9 * C1p * C2p, transcendentals=0,
            bytes_accessed=(M * C1p + 9 * C1p * C2p + M * C2p) * itm),
    )(y1_img, sc1, bi1, w2)
    sc2, bi2 = _bn_scale_bias(st2, M, g2, b2)

    # ---- conv3 (1x1): BN2-apply + ReLU fused onto its input ----------------
    y2_flat = y2.reshape(M, C2p)
    if Mp != M:
        y2_flat = jnp.pad(y2_flat, ((0, Mp - M), (0, 0)))
    conv3_kernel = functools.partial(_bn_relu_mm_stats_kernel,
                                     tm=TM, m_valid=M, need_mask=(Mp != M),
                                     cdt=compute_dtype)
    y3, st3 = pl.pallas_call(
        conv3_kernel,
        grid=(nt,),
        in_specs=[pl.BlockSpec((TM, C2p), lambda i: (i, 0)),
                  pl.BlockSpec((1, C2p), lambda i: (0, 0)),
                  pl.BlockSpec((1, C2p), lambda i: (0, 0)),
                  pl.BlockSpec((C2p, C3p), lambda i: (0, 0))],
        out_specs=[pl.BlockSpec((TM, C3p), lambda i: (i, 0)),
                   pl.BlockSpec((1, 2, C3p), lambda i: (i, 0, 0))],
        out_shape=[jax.ShapeDtypeStruct((Mp, C3p), compute_dtype),
                   jax.ShapeDtypeStruct((nt, 2, C3p), jnp.float32)],
        compiler_params=par,
        cost_estimate=pl.CostEstimate(
            flops=2 * Mp * C2p * C3p, transcendentals=0,
            bytes_accessed=(Mp * C2p + C2p * C3p + Mp * C3p) * itm),
    )(y2_flat, sc2, bi2, w3)
    sc3, bi3 = _bn_scale_bias(st3, M, g3, b3)

    # ---- BN3 apply + residual (reuses x_p) + ReLU ---------------------------
    out_p = pl.pallas_call(
        _bn_res_relu_kernel,
        grid=(nt,),
        in_specs=[pl.BlockSpec((TM, C3p), lambda i: (i, 0)),
                  pl.BlockSpec((1, C3p), lambda i: (0, 0)),
                  pl.BlockSpec((1, C3p), lambda i: (0, 0)),
                  pl.BlockSpec((TM, C3p), lambda i: (i, 0))],
        out_specs=pl.BlockSpec((TM, C3p), lambda i: (i, 0)),
        out_shape=jax.ShapeDtypeStruct((Mp, C3p), jnp.float32),
        compiler_params=par,
    )(y3, sc3, bi3, x_p)

    out = out_p[:M, :C3].reshape(N, H, W, C3)
    return jnp.transpose(out, (0, 3, 1, 2))            # module semantics: NCHW


# ---------------------------------------------------------------------------
# Pure-JAX reference (mirrors the PyTorch module, training-mode BN)
# ---------------------------------------------------------------------------
def bottleneck_ref(x, params):
    def conv(x, w, pad=0):
        return jax.lax.conv_general_dilated(
            x, w, (1, 1), ((pad, pad), (pad, pad)),
            dimension_numbers=("NCHW", "OIHW", "NCHW"))

    def bn(x, g, b):
        mean = jnp.mean(x, axis=(0, 2, 3), keepdims=True)
        var = jnp.mean(jnp.square(x - mean), axis=(0, 2, 3), keepdims=True)
        xhat = (x - mean) * jax.lax.rsqrt(var + EPS)
        return xhat * g.reshape(1, -1, 1, 1) + b.reshape(1, -1, 1, 1)

    out = jax.nn.relu(bn(conv(x, params["w1"]), params["g1"], params["b1"]))
    out = jax.nn.relu(bn(conv(out, params["w2"], pad=1), params["g2"], params["b2"]))
    out = bn(conv(out, params["w3"]), params["g3"], params["b3"])
    return jax.nn.relu(out + x)


# ---------------------------------------------------------------------------
def init_params(key, inplanes, planes):
    ks = jax.random.split(key, 9)

    def conv_w(k, cout, cin, kh, kw):
        fan_in = cin * kh * kw
        return jax.random.normal(k, (cout, cin, kh, kw), jnp.float32) / np.sqrt(fan_in)

    return {
        "w1": conv_w(ks[0], planes, inplanes, 1, 1),
        "g1": 1.0 + 0.1 * jax.random.normal(ks[1], (planes,), jnp.float32),
        "b1": 0.1 * jax.random.normal(ks[2], (planes,), jnp.float32),
        "w2": conv_w(ks[3], planes, planes, 3, 3),
        "g2": 1.0 + 0.1 * jax.random.normal(ks[4], (planes,), jnp.float32),
        "b2": 0.1 * jax.random.normal(ks[5], (planes,), jnp.float32),
        "w3": conv_w(ks[6], planes * 4, planes, 1, 1),
        "g3": 1.0 + 0.1 * jax.random.normal(ks[7], (planes * 4,), jnp.float32),
        "b3": 0.1 * jax.random.normal(ks[8], (planes * 4,), jnp.float32),
    }


if __name__ == "__main__":
    key = jax.random.PRNGKey(0)
    k_x, k_p = jax.random.split(key)

    N, planes, H, W = 2, 4, 16, 16
    inplanes = planes * 4                      # = 16, identity shortcut valid
    x = jax.random.normal(k_x, (N, inplanes, H, W), jnp.float32)
    params = init_params(k_p, inplanes, planes)

    ref = jax.block_until_ready(bottleneck_ref(x, params))

    # fp32 MXU-operand path: tight correctness check of the tiled pipeline.
    fwd32 = jax.jit(functools.partial(bottleneck_forward, params=params,
                                      compute_dtype=jnp.float32))
    out32 = jax.block_until_ready(fwd32(x))
    np.testing.assert_allclose(np.asarray(out32), np.asarray(ref),
                               rtol=1e-3, atol=1e-3)

    # bf16 MXU-operand / bf16-intermediate path (performance configuration).
    fwd16 = jax.jit(functools.partial(bottleneck_forward, params=params,
                                      compute_dtype=jnp.bfloat16))
    out16 = jax.block_until_ready(fwd16(x))
    assert out16.shape == (N, inplanes, H, W)
    np.testing.assert_allclose(np.asarray(out16), np.asarray(ref),
                               rtol=1e-1, atol=1e-1)

    print("KERNEL_OK")
</pallas_src>

<mosaic_0001>
module attributes {stable_mosaic.version = 11 : i64} {
  func.func @_mm_stats_kernel(%arg0: i32, %arg1: memref<256x128xf32, #tpu.memory_space<vmem>>, %arg2: memref<128x128xf32, #tpu.memory_space<vmem>>, %arg3: memref<256x128xf32, #tpu.memory_space<vmem>>, %arg4: memref<1x2x128xf32, #tpu.memory_space<vmem>>) attributes {dimension_semantics = [#tpu.dimension_semantics<parallel>], iteration_bounds = array<i64: 2>, scalar_prefetch = 0 : i64, scratch_operands = 0 : i64, tpu.core_type = #tpu.core_type<tc>, window_params = [{transform_indices = @transform_0, window_bounds = array<i64: 256, 128>}, {pipeline_mode = #tpu.pipeline_mode<synchronous>, transform_indices = @transform_1, window_bounds = array<i64: 128, 128>}, {transform_indices = @transform_2, window_bounds = array<i64: 256, 128>}, {transform_indices = @transform_3, window_bounds = array<i64: 1, 2, 128>}]} {
    %c0 = arith.constant 0 : index
    %c0_0 = arith.constant 0 : index
    %0 = vector.load %arg1[%c0, %c0_0] : memref<256x128xf32, #tpu.memory_space<vmem>>, vector<256x128xf32>
    %c0_1 = arith.constant 0 : index
    %c0_2 = arith.constant 0 : index
    %1 = vector.load %arg2[%c0_1, %c0_2] : memref<128x128xf32, #tpu.memory_space<vmem>>, vector<128x128xf32>
    %cst = arith.constant dense<0.000000e+00> : vector<256x128xf32>
    %2 = tpu.matmul %0, %1, %cst {dimension_numbers = #tpu.dot_dimension_numbers<[1], [0], [0], [1], [0, 0, 1, 1], [], []>} : vector<256x128xf32>, vector<128x128xf32>, vector<256x128xf32> -> vector<256x128xf32>
    %c0_3 = arith.constant 0 : index
    %c0_4 = arith.constant 0 : index
    %3 = vector.load %arg3[%c0_3, %c0_4] : memref<256x128xf32, #tpu.memory_space<vmem>>, vector<256x128xf32>
    tpu.vector_store %arg3[%c0_3, %c0_4], %2 {strides = array<i32>} : memref<256x128xf32, #tpu.memory_space<vmem>>, vector<256x128xf32>,
    %cst_5 = arith.constant dense<0.000000e+00> : vector<128xf32>
    %4 = vector.multi_reduction <add>, %2, %cst_5 [0] : vector<256x128xf32> to vector<128xf32>
    %5 = vector.shape_cast %4 : vector<128xf32> to vector<1x128xf32>
    %c0_6 = arith.constant 0 : index
    %c0_7 = arith.constant 0 : index
    %c0_8 = arith.constant 0 : index
    %6 = vector.load %arg4[%c0_6, %c0_7, %c0_8] : memref<1x2x128xf32, #tpu.memory_space<vmem>>, vector<1x1x128xf32>
    %7 = vector.shape_cast %6 : vector<1x1x128xf32> to vector<1x128xf32>
    %8 = vector.shape_cast %5 : vector<1x128xf32> to vector<1x1x128xf32>
    tpu.vector_store %arg4[%c0_6, %c0_7, %c0_8], %8 {strides = array<i32>} : memref<1x2x128xf32, #tpu.memory_space<vmem>>, vector<1x1x128xf32>,
    %9 = arith.mulf %2, %2 : vector<256x128xf32>
    %cst_9 = arith.constant dense<0.000000e+00> : vector<128xf32>
    %10 = vector.multi_reduction <add>, %9, %cst_9 [0] : vector<256x128xf32> to vector<128xf32>
    %11 = vector.shape_cast %10 : vector<128xf32> to vector<1x128xf32>
    %c0_10 = arith.constant 0 : index
    %c1 = arith.constant 1 : index
    %c0_11 = arith.constant 0 : index
    %12 = vector.load %arg4[%c0_10, %c1, %c0_11] : memref<1x2x128xf32, #tpu.memory_space<vmem>>, vector<1x1x128xf32>
    %13 = vector.shape_cast %12 : vector<1x1x128xf32> to vector<1x128xf32>
    %14 = vector.shape_cast %11 : vector<1x128xf32> to vector<1x1x128xf32>
    tpu.vector_store %arg4[%c0_10, %c1, %c0_11], %14 {strides = array<i32>} : memref<1x2x128xf32, #tpu.memory_space<vmem>>, vector<1x1x128xf32>,
    return
  }
  func.func @transform_0(%arg0: i32) -> (i32, i32) {
    %c0_i32 = arith.constant 0 : i32
    %c0_i32_0 = arith.constant 0 : i32
    return %arg0, %c0_i32 : i32, i32
  }
  func.func @transform_1(%arg0: i32) -> (i32, i32) {
    %c0_i32 = arith.constant 0 : i32
    %c0_i32_0 = arith.constant 0 : i32
    %c0_i32_1 = arith.constant 0 : i32
    return %c0_i32, %c0_i32_0 : i32, i32
  }
  func.func @transform_2(%arg0: i32) -> (i32, i32) {
    %c0_i32 = arith.constant 0 : i32
    %c0_i32_0 = arith.constant 0 : i32
    return %arg0, %c0_i32 : i32, i32
  }
  func.func @transform_3(%arg0: i32) -> (i32, i32, i32) {
    %c0_i32 = arith.constant 0 : i32
    %c0_i32_0 = arith.constant 0 : i32
    %c0_i32_1 = arith.constant 0 : i32
    return %arg0, %c0_i32, %c0_i32_0 : i32, i32, i32
  }
}

module attributes {stable_mosaic.version = 11 : i64} {
  func.func @_bn_relu_mm_stats_kernel(%arg0: i32, %arg1: memref<256x128xf32, #tpu.memory_space<vmem>>, %arg2: memref<1x128xf32, #tpu.memory_space<vmem>>, %arg3: memref<1x128xf32, #tpu.memory_space<vmem>>, %arg4: memref<128x128xf32, #tpu.memory_space<vmem>>, %arg5: memref<256x128xf32, #tpu.memory_space<vmem>>, %arg6: memref<1x2x128xf32, #tpu.memory_space<vmem>>) attributes {dimension_semantics = [#tpu.dimension_semantics<parallel>], iteration_bounds = array<i64: 2>, scalar_prefetch = 0 : i64, scratch_operands = 0 : i64, tpu.core_type = #tpu.core_type<tc>, window_params = [{transform_indices = @transform_0, window_bounds = array<i64: 256, 128>}, {pipeline_mode = #tpu.pipeline_mode<synchronous>, transform_indices = @transform_1, window_bounds = array<i64: 1, 128>}, {pipeline_mode = #tpu.pipeline_mode<synchronous>, transform_indices = @transform_2, window_bounds = array<i64: 1, 128>}, {pipeline_mode = #tpu.pipeline_mode<synchronous>, transform_indices = @transform_3, window_bounds = array<i64: 128, 128>}, {transform_indices = @transform_4, window_bounds = array<i64: 256, 128>}, {transform_indices = @transform_5, window_bounds = array<i64: 1, 2, 128>}]} {
    %c0 = arith.constant 0 : index
    %c0_0 = arith.constant 0 : index
    %0 = vector.load %arg1[%c0, %c0_0] : memref<256x128xf32, #tpu.memory_space<vmem>>, vector<256x128xf32>
    %c0_1 = arith.constant 0 : index
    %c0_2 = arith.constant 0 : index
    %1 = vector.load %arg2[%c0_1, %c0_2] : memref<1x128xf32, #tpu.memory_space<vmem>>, vector<1x128xf32>
    %2 = vector.broadcast %1 : vector<1x128xf32> to vector<256x128xf32>
    %3 = arith.mulf %0, %2 : vector<256x128xf32>
    %c0_3 = arith.constant 0 : index
    %c0_4 = arith.constant 0 : index
    %4 = vector.load %arg3[%c0_3, %c0_4] : memref<1x128xf32, #tpu.memory_space<vmem>>, vector<1x128xf32>
    %5 = vector.broadcast %4 : vector<1x128xf32> to vector<256x128xf32>
    %6 = arith.addf %3, %5 : vector<256x128xf32>
    %cst = arith.constant 0.000000e+00 : f32
    %7 = vector.broadcast %cst : f32 to vector<256x128xf32>
    %8 = arith.maximumf %6, %7 : vector<256x128xf32>
    %c0_5 = arith.constant 0 : index
    %c0_6 = arith.constant 0 : index
    %9 = vector.load %arg4[%c0_5, %c0_6] : memref<128x128xf32, #tpu.memory_space<vmem>>, vector<128x128xf32>
    %cst_7 = arith.constant dense<0.000000e+00> : vector<256x128xf32>
    %10 = tpu.matmul %8, %9, %cst_7 {dimension_numbers = #tpu.dot_dimension_numbers<[1], [0], [0], [1], [0, 0, 1, 1], [], []>} : vector<256x128xf32>, vector<128x128xf32>, vector<256x128xf32> -> vector<256x128xf32>
    %c0_8 = arith.constant 0 : index
    %c0_9 = arith.constant 0 : index
    %11 = vector.load %arg5[%c0_8, %c0_9] : memref<256x128xf32, #tpu.memory_space<vmem>>, vector<256x128xf32>
    tpu.vector_store %arg5[%c0_8, %c0_9], %10 {strides = array<i32>} : memref<256x128xf32, #tpu.memory_space<vmem>>, vector<256x128xf32>,
    %cst_10 = arith.constant dense<0.000000e+00> : vector<128xf32>
    %12 = vector.multi_reduction <add>, %10, %cst_10 [0] : vector<256x128xf32> to vector<128xf32>
    %13 = vector.shape_cast %12 : vector<128xf32> to vector<1x128xf32>
    %c0_11 = arith.constant 0 : index
    %c0_12 = arith.constant 0 : index
    %c0_13 = arith.constant 0 : index
    %14 = vector.load %arg6[%c0_11, %c0_12, %c0_13] : memref<1x2x128xf32, #tpu.memory_space<vmem>>, vector<1x1x128xf32>
    %15 = vector.shape_cast %14 : vector<1x1x128xf32> to vector<1x128xf32>
    %16 = vector.shape_cast %13 : vector<1x128xf32> to vector<1x1x128xf32>
    tpu.vector_store %arg6[%c0_11, %c0_12, %c0_13], %16 {strides = array<i32>} : memref<1x2x128xf32, #tpu.memory_space<vmem>>, vector<1x1x128xf32>,
    %17 = arith.mulf %10, %10 : vector<256x128xf32>
    %cst_14 = arith.constant dense<0.000000e+00> : vector<128xf32>
    %18 = vector.multi_reduction <add>, %17, %cst_14 [0] : vector<256x128xf32> to vector<128xf32>
    %19 = vector.shape_cast %18 : vector<128xf32> to vector<1x128xf32>
    %c0_15 = arith.constant 0 : index
    %c1 = arith.constant 1 : index
    %c0_16 = arith.constant 0 : index
    %20 = vector.load %arg6[%c0_15, %c1, %c0_16] : memref<1x2x128xf32, #tpu.memory_space<vmem>>, vector<1x1x128xf32>
    %21 = vector.shape_cast %20 : vector<1x1x128xf32> to vector<1x128xf32>
    %22 = vector.shape_cast %19 : vector<1x128xf32> to vector<1x1x128xf32>
    tpu.vector_store %arg6[%c0_15, %c1, %c0_16], %22 {strides = array<i32>} : memref<1x2x128xf32, #tpu.memory_space<vmem>>, vector<1x1x128xf32>,
    return
  }
  func.func @transform_0(%arg0: i32) -> (i32, i32) {
    %c0_i32 = arith.constant 0 : i32
    %c0_i32_0 = arith.constant 0 : i32
    return %arg0, %c0_i32 : i32, i32
  }
  func.func @transform_1(%arg0: i32) -> (i32, i32) {
    %c0_i32 = arith.constant 0 : i32
    %c0_i32_0 = arith.constant 0 : i32
    %c0_i32_1 = arith.constant 0 : i32
    return %c0_i32, %c0_i32_0 : i32, i32
  }
  func.func @transform_2(%arg0: i32) -> (i32, i32) {
    %c0_i32 = arith.constant 0 : i32
    %c0_i32_0 = arith.constant 0 : i32
    %c0_i32_1 = arith.constant 0 : i32
    return %c0_i32, %c0_i32_0 : i32, i32
  }
  func.func @transform_3(%arg0: i32) -> (i32, i32) {
    %c0_i32 = arith.constant 0 : i32
    %c0_i32_0 = arith.constant 0 : i32
    %c0_i32_1 = arith.constant 0 : i32
    return %c0_i32, %c0_i32_0 : i32, i32
  }
  func.func @transform_4(%arg0: i32) -> (i32, i32) {
    %c0_i32 = arith.constant 0 : i32
    %c0_i32_0 = arith.constant 0 : i32
    return %arg0, %c0_i32 : i32, i32
  }
  func.func @transform_5(%arg0: i32) -> (i32, i32, i32) {
    %c0_i32 = arith.constant 0 : i32
    %c0_i32_0 = arith.constant 0 : i32
    %c0_i32_1 = arith.constant 0 : i32
    return %arg0, %c0_i32, %c0_i32_0 : i32, i32, i32
  }
}

module attributes {stable_mosaic.version = 11 : i64} {
  func.func @_bn_relu_conv3x3_kernel(%arg0: i32, %arg1: memref<1x16x16x128xf32, #tpu.memory_space<vmem>>, %arg2: memref<1x128xf32, #tpu.memory_space<vmem>>, %arg3: memref<1x128xf32, #tpu.memory_space<vmem>>, %arg4: memref<3x384x128xf32, #tpu.memory_space<vmem>>, %arg5: memref<1x16x16x128xf32, #tpu.memory_space<vmem>>, %arg6: memref<1x2x128xf32, #tpu.memory_space<vmem>>, %arg7: memref<1x18x18x128xf32, #tpu.memory_space<vmem>>) attributes {dimension_semantics = [#tpu.dimension_semantics<parallel>], iteration_bounds = array<i64: 2>, scalar_prefetch = 0 : i64, scratch_operands = 1 : i64, tpu.core_type = #tpu.core_type<tc>, window_params = [{transform_indices = @transform_0, window_bounds = array<i64: 1, 16, 16, 128>}, {pipeline_mode = #tpu.pipeline_mode<synchronous>, transform_indices = @transform_1, window_bounds = array<i64: 1, 128>}, {pipeline_mode = #tpu.pipeline_mode<synchronous>, transform_indices = @transform_2, window_bounds = array<i64: 1, 128>}, {pipeline_mode = #tpu.pipeline_mode<synchronous>, transform_indices = @transform_3, window_bounds = array<i64: 3, 384, 128>}, {transform_indices = @transform_4, window_bounds = array<i64: 1, 16, 16, 128>}, {transform_indices = @transform_5, window_bounds = array<i64: 1, 2, 128>}]} {
    %c0 = arith.constant 0 : index
    %c0_0 = arith.constant 0 : index
    %0 = vector.load %arg2[%c0, %c0_0] : memref<1x128xf32, #tpu.memory_space<vmem>>, vector<1x128xf32>
    %1 = vector.shape_cast %0 : vector<1x128xf32> to vector<1x1x1x128xf32>
    %c0_1 = arith.constant 0 : index
    %c0_2 = arith.constant 0 : index
    %2 = vector.load %arg3[%c0_1, %c0_2] : memref<1x128xf32, #tpu.memory_space<vmem>>, vector<1x128xf32>
    %3 = vector.shape_cast %2 : vector<1x128xf32> to vector<1x1x1x128xf32>
    %c0_3 = arith.constant 0 : index
    %c0_4 = arith.constant 0 : index
    %c0_5 = arith.constant 0 : index
    %c0_6 = arith.constant 0 : index
    %4 = vector.load %arg1[%c0_3, %c0_4, %c0_5, %c0_6] : memref<1x16x16x128xf32, #tpu.memory_space<vmem>>, vector<1x16x16x128xf32>
    %5 = vector.broadcast %1 : vector<1x1x1x128xf32> to vector<1x16x16x128xf32>
    %6 = arith.mulf %4, %5 : vector<1x16x16x128xf32>
    %7 = vector.broadcast %3 : vector<1x1x1x128xf32> to vector<1x16x16x128xf32>
    %8 = arith.addf %6, %7 : vector<1x16x16x128xf32>
    %cst = arith.constant 0.000000e+00 : f32
    %9 = vector.broadcast %cst : f32 to vector<1x16x16x128xf32>
    %10 = arith.maximumf %8, %9 : vector<1x16x16x128xf32>
    %cst_7 = arith.constant 0.000000e+00 : f32
    %11 = vector.broadcast %cst_7 : f32 to vector<1x18x18x128xf32>
    %c0_8 = arith.constant 0 : index
    %c0_9 = arith.constant 0 : index
    %c0_10 = arith.constant 0 : index
    %c0_11 = arith.constant 0 : index
    %12 = vector.load %arg7[%c0_8, %c0_9, %c0_10, %c0_11] : memref<1x18x18x128xf32, #tpu.memory_space<vmem>>, vector<1x18x18x128xf32>
    tpu.vector_store %arg7[%c0_8, %c0_9, %c0_10, %c0_11], %11 {strides = array<i32>} : memref<1x18x18x128xf32, #tpu.memory_space<vmem>>, vector<1x18x18x128xf32>,
    %c0_12 = arith.constant 0 : index
    %c1 = arith.constant 1 : index
    %c1_13 = arith.constant 1 : index
    %c0_14 = arith.constant 0 : index
    %13 = vector.load %arg7[%c0_12, %c1, %c1_13, %c0_14] : memref<1x18x18x128xf32, #tpu.memory_space<vmem>>, vector<1x16x16x128xf32>
    tpu.vector_store %arg7[%c0_12, %c1, %c1_13, %c0_14], %10 {strides = array<i32>} : memref<1x18x18x128xf32, #tpu.memory_space<vmem>>, vector<1x16x16x128xf32>,
    %cst_15 = arith.constant 0.000000e+00 : f32
    %14 = vector.broadcast %cst_15 : f32 to vector<256x128xf32>
    %c0_16 = arith.constant 0 : index
    %c0_17 = arith.constant 0 : index
    %c0_18 = arith.constant 0 : index
    %c0_19 = arith.constant 0 : index
    %15 = vector.load %arg7[%c0_16, %c0_17, %c0_18, %c0_19] : memref<1x18x18x128xf32, #tpu.memory_space<vmem>>, vector<1x16x16x128xf32>
    %16 = vector.shape_cast %15 : vector<1x16x16x128xf32> to vector<16x16x128xf32>
    %c0_20 = arith.constant 0 : index
    %c0_21 = arith.constant 0 : index
    %c1_22 = arith.constant 1 : index
    %c0_23 = arith.constant 0 : index
    %17 = vector.load %arg7[%c0_20, %c0_21, %c1_22, %c0_23] : memref<1x18x18x128xf32, #tpu.memory_space<vmem>>, vector<1x16x16x128xf32>
    %18 = vector.shape_cast %17 : vector<1x16x16x128xf32> to vector<16x16x128xf32>
    %c0_24 = arith.constant 0 : index
    %c0_25 = arith.constant 0 : index
    %c2 = arith.constant 2 : index
    %c0_26 = arith.constant 0 : index
    %19 = vector.load %arg7[%c0_24, %c0_25, %c2, %c0_26] : memref<1x18x18x128xf32, #tpu.memory_space<vmem>>, vector<1x16x16x128xf32>
    %20 = vector.shape_cast %19 : vector<1x16x16x128xf32> to vector<16x16x128xf32>
    %21 = tpu.concatenate %16, %18, %20 in 2 : vector<16x16x128xf32>, vector<16x16x128xf32>, vector<16x16x128xf32> -> vector<16x16x384xf32>
    %22 = vector.shape_cast %21 : vector<16x16x384xf32> to vector<256x384xf32>
    %c0_27 = arith.constant 0 : index
    %c0_28 = arith.constant 0 : index
    %c0_29 = arith.constant 0 : index
    %23 = vector.load %arg4[%c0_27, %c0_28, %c0_29] : memref<3x384x128xf32, #tpu.memory_space<vmem>>, vector<1x384x128xf32>
    %24 = vector.shape_cast %23 : vector<1x384x128xf32> to vector<384x128xf32>
    %cst_30 = arith.constant dense<0.000000e+00> : vector<256x128xf32>
    %25 = tpu.matmul %22, %24, %cst_30 {dimension_numbers = #tpu.dot_dimension_numbers<[1], [0], [0], [1], [0, 0, 1, 1], [], []>} : vector<256x384xf32>, vector<384x128xf32>, vector<256x128xf32> -> vector<256x128xf32>
    %26 = arith.addf %14, %25 : vector<256x128xf32>
    %c0_31 = arith.constant 0 : index
    %c1_32 = arith.constant 1 : index
    %c0_33 = arith.constant 0 : index
    %c0_34 = arith.constant 0 : index
    %27 = vector.load %arg7[%c0_31, %c1_32, %c0_33, %c0_34] : memref<1x18x18x128xf32, #tpu.memory_space<vmem>>, vector<1x16x16x128xf32>
    %28 = vector.shape_cast %27 : vector<1x16x16x128xf32> to vector<16x16x128xf32>
    %c0_35 = arith.constant 0 : index
    %c1_36 = arith.constant 1 : index
    %c1_37 = arith.constant 1 : index
    %c0_38 = arith.constant 0 : index
    %29 = vector.load %arg7[%c0_35, %c1_36, %c1_37, %c0_38] : memref<1x18x18x128xf32, #tpu.memory_space<vmem>>, vector<1x16x16x128xf32>
    %30 = vector.shape_cast %29 : vector<1x16x16x128xf32> to vector<16x16x128xf32>
    %c0_39 = arith.constant 0 : index
    %c1_40 = arith.constant 1 : index
    %c2_41 = arith.constant 2 : index
    %c0_42 = arith.constant 0 : index
    %31 = vector.load %arg7[%c0_39, %c1_40, %c2_41, %c0_42] : memref<1x18x18x128xf32, #tpu.memory_space<vmem>>, vector<1x16x16x128xf32>
    %32 = vector.shape_cast %31 : vector<1x16x16x128xf32> to vector<16x16x128xf32>
    %33 = tpu.concatenate %28, %30, %32 in 2 : vector<16x16x128xf32>, vector<16x16x128xf32>, vector<16x16x128xf32> -> vector<16x16x384xf32>
    %34 = vector.shape_cast %33 : vector<16x16x384xf32> to vector<256x384xf32>
    %c1_43 = arith.constant 1 : index
    %c0_44 = arith.constant 0 : index
    %c0_45 = arith.constant 0 : index
    %35 = vector.load %arg4[%c1_43, %c0_44, %c0_45] : memref<3x384x128xf32, #tpu.memory_space<vmem>>, vector<1x384x128xf32>
    %36 = vector.shape_cast %35 : vector<1x384x128xf32> to vector<384x128xf32>
    %cst_46 = arith.constant dense<0.000000e+00> : vector<256x128xf32>
    %37 = tpu.matmul %34, %36, %cst_46 {dimension_numbers = #tpu.dot_dimension_numbers<[1], [0], [0], [1], [0, 0, 1, 1], [], []>} : vector<256x384xf32>, vector<384x128xf32>, vector<256x128xf32> -> vector<256x128xf32>
    %38 = arith.addf %26, %37 : vector<256x128xf32>
    %c0_47 = arith.constant 0 : index
    %c2_48 = arith.constant 2 : index
    %c0_49 = arith.constant 0 : index
    %c0_50 = arith.constant 0 : index
    %39 = vector.load %arg7[%c0_47, %c2_48, %c0_49, %c0_50] : memref<1x18x18x128xf32, #tpu.memory_space<vmem>>, vector<1x16x16x128xf32>
    %40 = vector.shape_cast %39 : vector<1x16x16x128xf32> to vector<16x16x128xf32>
    %c0_51 = arith.constant 0 : index
    %c2_52 = arith.constant 2 : index
    %c1_53 = arith.constant 1 : index
    %c0_54 = arith.constant 0 : index
    %41 = vector.load %arg7[%c0_51, %c2_52, %c1_53, %c0_54] : memref<1x18x18x128xf32, #tpu.memory_space<vmem>>, vector<1x16x16x128xf32>
    %42 = vector.shape_cast %41 : vector<1x16x16x128xf32> to vector<16x16x128xf32>
    %c0_55 = arith.constant 0 : index
    %c2_56 = arith.constant 2 : index
    %c2_57 = arith.constant 2 : index
    %c0_58 = arith.constant 0 : index
    %43 = vector.load %arg7[%c0_55, %c2_56, %c2_57, %c0_58] : memref<1x18x18x128xf32, #tpu.memory_space<vmem>>, vector<1x16x16x128xf32>
    %44 = vector.shape_cast %43 : vector<1x16x16x128xf32> to vector<16x16x128xf32>
    %45 = tpu.concatenate %40, %42, %44 in 2 : vector<16x16x128xf32>, vector<16x16x128xf32>, vector<16x16x128xf32> -> vector<16x16x384xf32>
    %46 = vector.shape_cast %45 : vector<16x16x384xf32> to vector<256x384xf32>
    %c2_59 = arith.constant 2 : index
    %c0_60 = arith.constant 0 : index
    %c0_61 = arith.constant 0 : index
    %47 = vector.load %arg4[%c2_59, %c0_60, %c0_61] : memref<3x384x128xf32, #tpu.memory_space<vmem>>, vector<1x384x128xf32>
    %48 = vector.shape_cast %47 : vector<1x384x128xf32> to vector<384x128xf32>
    %cst_62 = arith.constant dense<0.000000e+00> : vector<256x128xf32>
    %49 = tpu.matmul %46, %48, %cst_62 {dimension_numbers = #tpu.dot_dimension_numbers<[1], [0], [0], [1], [0, 0, 1, 1], [], []>} : vector<256x384xf32>, vector<384x128xf32>, vector<256x128xf32> -> vector<256x128xf32>
    %50 = arith.addf %38, %49 : vector<256x128xf32>
    %51 = vector.shape_cast %50 : vector<256x128xf32> to vector<1x16x16x128xf32>
    %c0_63 = arith.constant 0 : index
    %c0_64 = arith.constant 0 : index
    %c0_65 = arith.constant 0 : index
    %c0_66 = arith.constant 0 : index
    %52 = vector.load %arg5[%c0_63, %c0_64, %c0_65, %c0_66] : memref<1x16x16x128xf32, #tpu.memory_space<vmem>>, vector<1x16x16x128xf32>
    tpu.vector_store %arg5[%c0_63, %c0_64, %c0_65, %c0_66], %51 {strides = array<i32>} : memref<1x16x16x128xf32, #tpu.memory_space<vmem>>, vector<1x16x16x128xf32>,
    %cst_67 = arith.constant dense<0.000000e+00> : vector<128xf32>
    %53 = vector.multi_reduction <add>, %50, %cst_67 [0] : vector<256x128xf32> to vector<128xf32>
    %54 = vector.shape_cast %53 : vector<128xf32> to vector<1x128xf32>
    %c0_68 = arith.constant 0 : index
    %c0_69 = arith.constant 0 : index
    %c0_70 = arith.constant 0 : index
    %55 = vector.load %arg6[%c0_68, %c0_69, %c0_70] : memref<1x2x128xf32, #tpu.memory_space<vmem>>, vector<1x1x128xf32>
    %56 = vector.shape_cast %55 : vector<1x1x128xf32> to vector<1x128xf32>
    %57 = vector.shape_cast %54 : vector<1x128xf32> to vector<1x1x128xf32>
    tpu.vector_store %arg6[%c0_68, %c0_69, %c0_70], %57 {strides = array<i32>} : memref<1x2x128xf32, #tpu.memory_space<vmem>>, vector<1x1x128xf32>,
    %58 = arith.mulf %50, %50 : vector<256x128xf32>
    %cst_71 = arith.constant dense<0.000000e+00> : vector<128xf32>
    %59 = vector.multi_reduction <add>, %58, %cst_71 [0] : vector<256x128xf32> to vector<128xf32>
    %60 = vector.shape_cast %59 : vector<128xf32> to vector<1x128xf32>
    %c0_72 = arith.constant 0 : index
    %c1_73 = arith.constant 1 : index
    %c0_74 = arith.constant 0 : index
    %61 = vector.load %arg6[%c0_72, %c1_73, %c0_74] : memref<1x2x128xf32, #tpu.memory_space<vmem>>, vector<1x1x128xf32>
    %62 = vector.shape_cast %61 : vector<1x1x128xf32> to vector<1x128xf32>
    %63 = vector.shape_cast %60 : vector<1x128xf32> to vector<1x1x128xf32>
    tpu.vector_store %arg6[%c0_72, %c1_73, %c0_74], %63 {strides = array<i32>} : memref<1x2x128xf32, #tpu.memory_space<vmem>>, vector<1x1x128xf32>,
    return
  }
  func.func @transform_0(%arg0: i32) -> (i32, i32, i32, i32) {
    %c0_i32 = arith.constant 0 : i32
    %c0_i32_0 = arith.constant 0 : i32
    %c0_i32_1 = arith.constant 0 : i32
    %c0_i32_2 = arith.constant 0 : i32
    return %arg0, %c0_i32, %c0_i32_0, %c0_i32_1 : i32, i32, i32, i32
  }
  func.func @transform_1(%arg0: i32) -> (i32, i32) {
    %c0_i32 = arith.constant 0 : i32
    %c0_i32_0 = arith.constant 0 : i32
    %c0_i32_1 = arith.constant 0 : i32
    return %c0_i32, %c0_i32_0 : i32, i32
  }
  func.func @transform_2(%arg0: i32) -> (i32, i32) {
    %c0_i32 = arith.constant 0 : i32
    %c0_i32_0 = arith.constant 0 : i32
    %c0_i32_1 = arith.constant 0 : i32
    return %c0_i32, %c0_i32_0 : i32, i32
  }
  func.func @transform_3(%arg0: i32) -> (i32, i32, i32) {
    %c0_i32 = arith.constant 0 : i32
    %c0_i32_0 = arith.constant 0 : i32
    %c0_i32_1 = arith.constant 0 : i32
    %c0_i32_2 = arith.constant 0 : i32
    return %c0_i32, %c0_i32_0, %c0_i32_1 : i32, i32, i32
  }
  func.func @transform_4(%arg0: i32) -> (i32, i32, i32, i32) {
    %c0_i32 = arith.constant 0 : i32
    %c0_i32_0 = arith.constant 0 : i32
    %c0_i32_1 = arith.constant 0 : i32
    %c0_i32_2 = arith.constant 0 : i32
    return %arg0, %c0_i32, %c0_i32_0, %c0_i32_1 : i32, i32, i32, i32
  }
  func.func @transform_5(%arg0: i32) -> (i32, i32, i32) {
    %c0_i32 = arith.constant 0 : i32
    %c0_i32_0 = arith.constant 0 : i32
    %c0_i32_1 = arith.constant 0 : i32
    return %arg0, %c0_i32, %c0_i32_0 : i32, i32, i32
  }
}

module attributes {stable_mosaic.version = 11 : i64} {
  func.func @_bn_res_relu_kernel(%arg0: i32, %arg1: memref<256x128xf32, #tpu.memory_space<vmem>>, %arg2: memref<1x128xf32, #tpu.memory_space<vmem>>, %arg3: memref<1x128xf32, #tpu.memory_space<vmem>>, %arg4: memref<256x128xf32, #tpu.memory_space<vmem>>, %arg5: memref<256x128xf32, #tpu.memory_space<vmem>>) attributes {dimension_semantics = [#tpu.dimension_semantics<parallel>], iteration_bounds = array<i64: 2>, scalar_prefetch = 0 : i64, scratch_operands = 0 : i64, tpu.core_type = #tpu.core_type<tc>, window_params = [{transform_indices = @transform_0, window_bounds = array<i64: 256, 128>}, {pipeline_mode = #tpu.pipeline_mode<synchronous>, transform_indices = @transform_1, window_bounds = array<i64: 1, 128>}, {pipeline_mode = #tpu.pipeline_mode<synchronous>, transform_indices = @transform_2, window_bounds = array<i64: 1, 128>}, {transform_indices = @transform_3, window_bounds = array<i64: 256, 128>}, {transform_indices = @transform_4, window_bounds = array<i64: 256, 128>}]} {
    %c0 = arith.constant 0 : index
    %c0_0 = arith.constant 0 : index
    %0 = vector.load %arg1[%c0, %c0_0] : memref<256x128xf32, #tpu.memory_space<vmem>>, vector<256x128xf32>
    %c0_1 = arith.constant 0 : index
    %c0_2 = arith.constant 0 : index
    %1 = vector.load %arg2[%c0_1, %c0_2] : memref<1x128xf32, #tpu.memory_space<vmem>>, vector<1x128xf32>
    %2 = vector.broadcast %1 : vector<1x128xf32> to vector<256x128xf32>
    %3 = arith.mulf %0, %2 : vector<256x128xf32>
    %c0_3 = arith.constant 0 : index
    %c0_4 = arith.constant 0 : index
    %4 = vector.load %arg3[%c0_3, %c0_4] : memref<1x128xf32, #tpu.memory_space<vmem>>, vector<1x128xf32>
    %5 = vector.broadcast %4 : vector<1x128xf32> to vector<256x128xf32>
    %6 = arith.addf %3, %5 : vector<256x128xf32>
    %c0_5 = arith.constant 0 : index
    %c0_6 = arith.constant 0 : index
    %7 = vector.load %arg4[%c0_5, %c0_6] : memref<256x128xf32, #tpu.memory_space<vmem>>, vector<256x128xf32>
    %8 = arith.addf %6, %7 : vector<256x128xf32>
    %cst = arith.constant 0.000000e+00 : f32
    %9 = vector.broadcast %cst : f32 to vector<256x128xf32>
    %10 = arith.maximumf %8, %9 : vector<256x128xf32>
    %c0_7 = arith.constant 0 : index
    %c0_8 = arith.constant 0 : index
    %11 = vector.load %arg5[%c0_7, %c0_8] : memref<256x128xf32, #tpu.memory_space<vmem>>, vector<256x128xf32>
    tpu.vector_store %arg5[%c0_7, %c0_8], %10 {strides = array<i32>} : memref<256x128xf32, #tpu.memory_space<vmem>>, vector<256x128xf32>,
    return
  }
  func.func @transform_0(%arg0: i32) -> (i32, i32) {
    %c0_i32 = arith.constant 0 : i32
    %c0_i32_0 = arith.constant 0 : i32
    return %arg0, %c0_i32 : i32, i32
  }
  func.func @transform_1(%arg0: i32) -> (i32, i32) {
    %c0_i32 = arith.constant 0 : i32
    %c0_i32_0 = arith.constant 0 : i32
    %c0_i32_1 = arith.constant 0 : i32
    return %c0_i32, %c0_i32_0 : i32, i32
  }
  func.func @transform_2(%arg0: i32) -> (i32, i32) {
    %c0_i32 = arith.constant 0 : i32
    %c0_i32_0 = arith.constant 0 : i32
    %c0_i32_1 = arith.constant 0 : i32
    return %c0_i32, %c0_i32_0 : i32, i32
  }
  func.func @transform_3(%arg0: i32) -> (i32, i32) {
    %c0_i32 = arith.constant 0 : i32
    %c0_i32_0 = arith.constant 0 : i32
    return %arg0, %c0_i32 : i32, i32
  }
  func.func @transform_4(%arg0: i32) -> (i32, i32) {
    %c0_i32 = arith.constant 0 : i32
    %c0_i32_0 = arith.constant 0 : i32
    return %arg0, %c0_i32 : i32, i32
  }
}

</mosaic_0001>

<llo_original>
// kernel: bottleneck_forward.4
$region0: #{bottleneck_forward.4}
  #allocation0 [shape = 'u32[]', space=smem, size = 0x4, offset = 0x4, fixed_abs, tag = 'smem constant byte address 0x4 - core index']
  #allocation1 [shape = 'u32[144,128]{1,0:T(1,128)}', space=vmem, size = 0x12000, scoped, tag = 'internal scratch']
  %s0 = inlined_call_operand.vmem [shape: f32[512,128], index: 0, kind: input, shape index: {}]
  %s1 = inlined_call_operand.vmem [shape: f32[128,128], index: 1, kind: input, shape index: {}]
  %s2 = inlined_call_operand.vmem [shape: f32[512,128], index: 2, kind: output, shape index: {0}]
  %s3 = inlined_call_operand.vmem [shape: f32[2,2,128], index: 3, kind: output, shape index: {1}]
  %4 = xla_tuple %s2, %s3
  %s5 = sld [smem:[#allocation0]]
  $region49: #{bottleneck_forward.4} parent=0
    _
  %s7 = ssub.s32 1, %s5
  %s8 = scalar_select 0, %s7, %s5
  loop: start=0, step=1, limit=4
  $region2: #{bottleneck_forward.4} parent=0 // loop_pre_header
    _
  $region3: #{bottleneck_forward.4} parent=0 // loop_header
    %s10 = sphi 0, %s14
    %p11 = scmp.ge.s32.totalorder %s10, 4
    %s20 = sphi 0, %s22
    %s23 = sphi 0, %s20
    %s24 = sphi 0, %s23
    %s40 = sphi 0, %s24
    %s44 = sphi 0, %s44
    %s46 = sphi 0, %s44
    %s47 = sphi 0, %s46
    %s61 = sphi 0, %s47
    %s67 = sphi 0, %s69
    %s70 = sphi 0, %s67
    %s71 = sphi 0, %s70
    %s87 = sphi 0, %s71
    %s93 = sphi 0, %s95
    %s96 = sphi 0, %s93
    %s97 = sphi 0, %s96
    %s113 = sphi 0, %s97
  $region4: #{bottleneck_forward.4} parent=0 // loop_header_branch
    %13 = sbr.rel (%p11) target = $region8
  $region5: #{bottleneck_forward.4} parent=0 // loop_body
    %s15 = ssub.s32 %s10, 1
    %s16 = ssub.s32 %s10, 2
    %s17 = sadd.s32 %s10, 1
    %s18 = ssub.s32 %s10, %s17
    %p19 = scmp.eq.s32.totalorder %s18, 0
    %s21 = sadd.s32 %s20, 1
    %s22 = scalar_select %p19, %s20, %s21
    %p25 = pneg %p19
    %p26 = scmp.eq.s32.totalorder %s10, 1
    %p27 = por %p25, %p26
    %p28 = scmp.ne.s32.totalorder %s20, %s23
    %p29 = scmp.eq.s32.totalorder %s10, 0
    %p30 = por %p28, %p29
    %p31 = scmp.ne.s32.totalorder %s20, %s23
    %p32 = scmp.eq.s32.totalorder %s15, 1
    %p33 = por %p31, %p32
    %p34 = scmp.ne.s32.totalorder %s23, %s24
    %p35 = scmp.eq.s32.totalorder %s15, 0
    %p36 = por %p34, %p35
    %p37 = scmp.ne.s32.totalorder %s23, %s24
    %p38 = scmp.eq.s32.totalorder %s16, 1
    %p39 = por %p37, %p38
    %p41 = scmp.ne.s32.totalorder %s24, %s40
    %p42 = scmp.eq.s32.totalorder %s16, 0
    %p43 = por %p41, %p42
    %s45 = sadd.s32 %s44, 1
    %p48 = scmp.eq.s32.totalorder %s10, 1
    %p49 = scmp.ne.s32.totalorder %s44, %s46
    %p50 = scmp.eq.s32.totalorder %s10, 0
    %p51 = por %p49, %p50
    %p52 = scmp.ne.s32.totalorder %s44, %s46
    %p53 = scmp.eq.s32.totalorder %s15, 1
    %p54 = por %p52, %p53
    %p55 = scmp.ne.s32.totalorder %s46, %s47
    %p56 = scmp.eq.s32.totalorder %s15, 0
    %p57 = por %p55, %p56
    %p58 = scmp.ne.s32.totalorder %s46, %s47
    %p59 = scmp.eq.s32.totalorder %s16, 1
    %p60 = por %p58, %p59
    %p62 = scmp.ne.s32.totalorder %s47, %s61
    %p63 = scmp.eq.s32.totalorder %s16, 0
    %p64 = por %p62, %p63
    %s65 = ssub.s32 %s10, %s17
    %p66 = scmp.eq.s32.totalorder %s65, 0
    %s68 = sadd.s32 %s67, 1
    %s69 = scalar_select %p66, %s67, %s68
    %p72 = pneg %p66
    %p73 = scmp.eq.s32.totalorder %s10, 1
    %p74 = por %p72, %p73
    %p75 = scmp.ne.s32.totalorder %s67, %s70
    %p76 = scmp.eq.s32.totalorder %s10, 0
    %p77 = por %p75, %p76
    %p78 = scmp.ne.s32.totalorder %s67, %s70
    %p79 = scmp.eq.s32.totalorder %s15, 1
    %p80 = por %p78, %p79
    %p81 = scmp.ne.s32.totalorder %s70, %s71
    %p82 = scmp.eq.s32.totalorder %s15, 0
    %p83 = por %p81, %p82
    %p84 = scmp.ne.s32.totalorder %s70, %s71
    %p85 = scmp.eq.s32.totalorder %s16, 1
    %p86 = por %p84, %p85
    %p88 = scmp.ne.s32.totalorder %s71, %s87
    %p89 = scmp.eq.s32.totalorder %s16, 0
    %p90 = por %p88, %p89
    %s91 = ssub.s32 %s10, %s17
    %p92 = scmp.eq.s32.totalorder %s91, 0
    %s94 = sadd.s32 %s93, 1
    %s95 = scalar_select %p92, %s93, %s94
    %p98 = pneg %p92
    %p99 = scmp.eq.s32.totalorder %s10, 1
    %p100 = por %p98, %p99
    %p101 = scmp.ne.s32.totalorder %s93, %s96
    %p102 = scmp.eq.s32.totalorder %s10, 0
    %p103 = por %p101, %p102
    %p104 = scmp.ne.s32.totalorder %s93, %s96
    %p105 = scmp.eq.s32.totalorder %s15, 1
    %p106 = por %p104, %p105
    %p107 = scmp.ne.s32.totalorder %s96, %s97
    %p108 = scmp.eq.s32.totalorder %s15, 0
    %p109 = por %p107, %p108
    %p110 = scmp.ne.s32.totalorder %s96, %s97
    %p111 = scmp.eq.s32.totalorder %s16, 1
    %p112 = por %p110, %p111
    %p114 = scmp.ne.s32.totalorder %s97, %s113
    %p115 = scmp.eq.s32.totalorder %s16, 0
    %p116 = por %p114, %p115
    %p117 = scmp.le.s32.totalorder 1, %s10
    %p118 = scmp.lt.s32.totalorder %s10, 3
    %p119 = pnand %p117, %p118
    %p120 = pneg %p119
    // Predicated region
    $region9: #{bottleneck_forward.4} parent=5 // pred_check
      _
    $region10: #{bottleneck_forward.4} parent=5 // pred_check_branch
      %122 = sbr.rel (%p119) target = $region12
    $region11: #{bottleneck_forward.4} parent=5 // pred_region
      %s123 = ssub.s32 %s10, 1
      // Predicated region
      $region13: #{bottleneck_forward.4} parent=11 // pred_check
        %p124 = pneg %p57
      $region14: #{bottleneck_forward.4} parent=11 // pred_check_branch
        %126 = sbr.rel (%p124) target = $region16
      $region15: #{bottleneck_forward.4} parent=11 // pred_region
        _
      $region16: #{bottleneck_forward.4} parent=11 // pred_fallthru
        _
    $region12: #{bottleneck_forward.4} parent=5 // pred_fallthru
      _
    %p127 = scmp.lt.s32.totalorder %s10, 2
    // Predicated region
    $region17: #{bottleneck_forward.4} parent=5 // pred_check
      %p128 = pneg %p127
    $region18: #{bottleneck_forward.4} parent=5 // pred_check_branch
      %130 = sbr.rel (%p128) target = $region20
    $region19: #{bottleneck_forward.4} parent=5 // pred_region
      // Predicated region
      $region21: #{bottleneck_forward.4} parent=19 // pred_check
        %p131 = pneg %p30
      $region22: #{bottleneck_forward.4} parent=19 // pred_check_branch
        %133 = sbr.rel (%p131) target = $region24
      $region23: #{bottleneck_forward.4} parent=19 // pred_region
        %s134 = smul.u32 32, %s10
        %p135 = scmp.lt.s32.totalorder %s134, 63
        %s136 = scalar_select %p135, %s134, 63
        %s137 = smul.addr %s136, 8
        %s138 = scalar_lea.vmem %s0, %s137
        %s139 = smul.u32 32, %s10
      $region24: #{bottleneck_forward.4} parent=19 // pred_fallthru
        _
    $region20: #{bottleneck_forward.4} parent=5 // pred_fallthru
      _
    %p140 = scmp.le.s32.totalorder 1, %s10
    %p141 = scmp.lt.s32.totalorder %s10, 3
    %p142 = pnand %p140, %p141
    %p143 = pneg %p142
    // Predicated region
    $region25: #{bottleneck_forward.4} parent=5 // pred_check
      _
    $region26: #{bottleneck_forward.4} parent=5 // pred_check_branch
      %145 = sbr.rel (%p142) target = $region28
    $region27: #{bottleneck_forward.4} parent=5 // pred_region
      %s146 = ssub.s32 %s10, 1
      %s147 = smul.u32 32, %s15
      %p148 = scmp.lt.s32.totalorder %s147, 63
      %s149 = scalar_select %p148, %s147, 63
      %s150 = smul.addr %s149, 8
      %s151 = scalar_lea.vmem %s0, %s150
      %p152 = pneg %p36
      %p153 = pneg %p33
      %p154 = pneg %p57
      %p155 = pneg %p54
      %p156 = pneg %p83
      %p157 = pneg %p80
      %s158 = smul.u32 32, %s15
      %p159 = scmp.lt.s32.totalorder %s158, 63
      %s160 = scalar_select %p159, %s158, 63
      %s161 = smul.addr %s160, 8
      %s162 = scalar_lea.vmem %s2, %s161
      %p163 = pneg %p109
      %p164 = pneg %p106
      %p165 = scmp.lt.s32.totalorder %s15, 1
      %s166 = scalar_select %p165, %s15, 1
      %s167 = smul.addr %s166, 2
      %s168 = scalar_lea.vmem %s3, %s167
      %s169 = smul.u32 32, %s15
      %p170 = scmp.lt.s32.totalorder %s169, 63
      %s171 = scalar_select %p170, %s169, 63
      %s172 = smul.addr %s171, 8
      %s173 = scalar_lea.vmem %s0, %s172
      %s174 = smul.u32 32, %s15
      %s175 = smul.u32 32, %s15
      %p176 = scmp.lt.s32.totalorder %s175, 63
      %s177 = scalar_select %p176, %s175, 63
      %s178 = smul.addr %s177, 8
      %s179 = scalar_lea.vmem %s2, %s178
      %s180 = smul.u32 32, %s15
      %p181 = scmp.lt.s32.totalorder %s15, 1
      %s182 = scalar_select %p181, %s15, 1
      %s183 = smul.addr %s182, 2
      %s184 = scalar_lea.vmem %s3, %s183
      %v185 = vld [vmem:[%s173] sm:$0xff]
      %v186 = vld [vmem:[%s173 + $0x8] sm:$0xff]
      %v187 = vld [vmem:[%s173 + $0x10] sm:$0xff]
      %v188 = vld [vmem:[%s173 + $0x18] sm:$0xff]
      %v189 = vld [vmem:[%s173 + $0x20] sm:$0xff]
      %v190 = vld [vmem:[%s173 + $0x28] sm:$0xff]
      %v191 = vld [vmem:[%s173 + $0x30] sm:$0xff]
      %v192 = vld [vmem:[%s173 + $0x38] sm:$0xff]
      %v193 = vld [vmem:[%s173 + $0x40] sm:$0xff]
      %v194 = vld [vmem:[%s173 + $0x48] sm:$0xff]
      %v195 = vld [vmem:[%s173 + $0x50] sm:$0xff]
      %v196 = vld [vmem:[%s173 + $0x58] sm:$0xff]
      %v197 = vld [vmem:[%s173 + $0x60] sm:$0xff]
      %v198 = vld [vmem:[%s173 + $0x68] sm:$0xff]
      %v199 = vld [vmem:[%s173 + $0x70] sm:$0xff]
      %v200 = vld [vmem:[%s173 + $0x78] sm:$0xff]
      %v201 = vld [vmem:[%s173 + $0x80] sm:$0xff]
      %v202 = vld [vmem:[%s173 + $0x88] sm:$0xff]
      %v203 = vld [vmem:[%s173 + $0x90] sm:$0xff]
      %v204 = vld [vmem:[%s173 + $0x98] sm:$0xff]
      %v205 = vld [vmem:[%s173 + $0xa0] sm:$0xff]
      %v206 = vld [vmem:[%s173 + $0xa8] sm:$0xff]
      %v207 = vld [vmem:[%s173 + $0xb0] sm:$0xff]
      %v208 = vld [vmem:[%s173 + $0xb8] sm:$0xff]
      %v209 = vld [vmem:[%s173 + $0xc0] sm:$0xff]
      %v210 = vld [vmem:[%s173 + $0xc8] sm:$0xff]
      %v211 = vld [vmem:[%s173 + $0xd0] sm:$0xff]
      %v212 = vld [vmem:[%s173 + $0xd8] sm:$0xff]
      %v213 = vld [vmem:[%s173 + $0xe0] sm:$0xff]
      %v214 = vld [vmem:[%s173 + $0xe8] sm:$0xff]
      %v215 = vld [vmem:[%s173 + $0xf0] sm:$0xff]
      %v216 = vld [vmem:[%s173 + $0xf8] sm:$0xff]
      %v217 = vld [vmem:[%s1] sm:$0xff]
      %v218 = vld [vmem:[%s1 + $0x8] sm:$0xff]
      %v219 = vld [vmem:[%s1 + $0x10] sm:$0xff]
      %v220 = vld [vmem:[%s1 + $0x18] sm:$0xff]
      %v221 = vld [vmem:[%s1 + $0x20] sm:$0xff]
      %v222 = vld [vmem:[%s1 + $0x28] sm:$0xff]
      %v223 = vld [vmem:[%s1 + $0x30] sm:$0xff]
      %v224 = vld [vmem:[%s1 + $0x38] sm:$0xff]
      %v225 = vld [vmem:[%s1 + $0x40] sm:$0xff]
      %v226 = vld [vmem:[%s1 + $0x48] sm:$0xff]
      %v227 = vld [vmem:[%s1 + $0x50] sm:$0xff]
      %v228 = vld [vmem:[%s1 + $0x58] sm:$0xff]
      %v229 = vld [vmem:[%s1 + $0x60] sm:$0xff]
      %v230 = vld [vmem:[%s1 + $0x68] sm:$0xff]
      %v231 = vld [vmem:[%s1 + $0x70] sm:$0xff]
      %v232 = vld [vmem:[%s1 + $0x78] sm:$0xff]
      %233 = vmatprep.subr.mxu0 0.0
      %234 = vmatpush1.msra.mxu0 %v217
      %235 = vmatprep.subr.mxu0 0.0
      %236 = vmatpush1.msra.mxu0 %v218
      %237 = vmatprep.subr.mxu0 0.0
      %238 = vmatpush1.msra.mxu0 %v219
      %239 = vmatprep.subr.mxu0 0.0
      %240 = vmatpush1.msra.mxu0 %v220
      %241 = vmatprep.subr.mxu0 0.0
      %242 = vmatpush1.msra.mxu0 %v221
      %243 = vmatprep.subr.mxu0 0.0
      %244 = vmatpush1.msra.mxu0 %v222
      %245 = vmatprep.subr.mxu0 0.0
      %246 = vmatpush1.msra.mxu0 %v223
      %247 = vmatprep.subr.mxu0 0.0
      %248 = vmatpush1.msra.mxu0 %v224
      %249 = vmatprep.subr.mxu0 0.0
      %250 = vmatpush1.msra.mxu0 %v225
      %251 = vmatprep.subr.mxu0 0.0
      %252 = vmatpush1.msra.mxu0 %v226
      %253 = vmatprep.subr.mxu0 0.0
      %254 = vmatpush1.msra.mxu0 %v227
      %255 = vmatprep.subr.mxu0 0.0
      %256 = vmatpush1.msra.mxu0 %v228
      %257 = vmatprep.subr.mxu0 0.0
      %258 = vmatpush1.msra.mxu0 %v229
      %259 = vmatprep.subr.mxu0 0.0
      %260 = vmatpush1.msra.mxu0 %v230
      %261 = vmatprep.subr.mxu0 0.0
      %262 = vmatpush1.msra.mxu0 %v231
      %263 = vmatprep.subr.mxu0 0.0
      %264 = vmatpush1.msra.mxu0 %v232
      %265 = vmatprep.subr.mxu0 0.0
      %266 = vmatpush1.msra.mxu0 0.0
      %267 = vmatprep.subr.mxu0 0.0
      %268 = vmatpush1.msra.mxu0 0.0
      %269 = vmatprep.subr.mxu0 0.0
      %270 = vmatpush1.msra.mxu0 0.0
      %271 = vmatprep.subr.mxu0 0.0
      %272 = vmatpush1.msra.mxu0 0.0
      %273 = vmatprep.subr.mxu0 0.0
      %274 = vmatpush1.msra.mxu0 0.0
      %275 = vmatprep.subr.mxu0 0.0
      %276 = vmatpush1.msra.mxu0 0.0
      %277 = vmatprep.subr.mxu0 0.0
      %278 = vmatpush1.msra.mxu0 0.0
      %279 = vmatprep.subr.mxu0 0.0
      %280 = vmatpush1.msra.mxu0 0.0
      %281 = vmatprep.subr.mxu0 0.0
      %282 = vmatpush1.msra.mxu0 0.0
      %283 = vmatprep.subr.mxu0 0.0
      %284 = vmatpush1.msra.mxu0 0.0
      %285 = vmatprep.subr.mxu0 0.0
      %286 = vmatpush1.msra.mxu0 0.0
      %287 = vmatprep.subr.mxu0 0.0
      %288 = vmatpush1.msra.mxu0 0.0
      %289 = vmatprep.subr.mxu0 0.0
      %290 = vmatpush1.msra.mxu0 0.0
      %291 = vmatprep.subr.mxu0 0.0
      %292 = vmatpush1.msra.mxu0 0.0
      %293 = vmatprep.subr.mxu0 0.0
      %294 = vmatpush1.msra.mxu0 0.0
      %295 = vmatprep.subr.mxu0 0.0
      %296 = vmatpush1.msra.mxu0 0.0
      %297 = vmatprep.mubr.f32.mxu0 0.0
      %298 = vmatmul.mubr.f32.gmra.mrb[0].mxu0 %v185
      %v299 = vpop.f32.mrb[0].mxu0
      %v300 = vadd.f32 0.0, %v299
      %v301 = vpop.f32.mrb[0].mxu0
      %302 = vmatprep.mubr.f32.mxu0 0.0
      %303 = vmatmul.mubr.f32.gmra.mrb[0].mxu0 %v186
      %v304 = vpop.f32.mrb[0].mxu0
      %v305 = vadd.f32 0.0, %v304
      %v306 = vpop.f32.mrb[0].mxu0
      %307 = vmatprep.mubr.f32.mxu0 0.0
      %308 = vmatmul.mubr.f32.gmra.mrb[0].mxu0 %v187
      %v309 = vpop.f32.mrb[0].mxu0
      %v310 = vadd.f32 0.0, %v309
      %v311 = vpop.f32.mrb[0].mxu0
      %312 = vmatprep.mubr.f32.mxu0 0.0
      %313 = vmatmul.mubr.f32.gmra.mrb[0].mxu0 %v188
      %v314 = vpop.f32.mrb[0].mxu0
      %v315 = vadd.f32 0.0, %v314
      %v316 = vpop.f32.mrb[0].mxu0
      %317 = vmatprep.mubr.f32.mxu0 0.0
      %318 = vmatmul.mubr.f32.gmra.mrb[0].mxu0 %v189
      %v319 = vpop.f32.mrb[0].mxu0
      %v320 = vadd.f32 0.0, %v319
      %v321 = vpop.f32.mrb[0].mxu0
      %322 = vmatprep.mubr.f32.mxu0 0.0
      %323 = vmatmul.mubr.f32.gmra.mrb[0].mxu0 %v190
      %v324 = vpop.f32.mrb[0].mxu0
      %v325 = vadd.f32 0.0, %v324
      %v326 = vpop.f32.mrb[0].mxu0
      %327 = vmatprep.mubr.f32.mxu0 0.0
      %328 = vmatmul.mubr.f32.gmra.mrb[0].mxu0 %v191
      %v329 = vpop.f32.mrb[0].mxu0
      %v330 = vadd.f32 0.0, %v329
      %v331 = vpop.f32.mrb[0].mxu0
      %332 = vmatprep.mubr.f32.mxu0 0.0
      %333 = vmatmul.mubr.f32.gmra.mrb[0].mxu0 %v192
      %v334 = vpop.f32.mrb[0].mxu0
      %v335 = vadd.f32 0.0, %v334
      %v336 = vpop.f32.mrb[0].mxu0
      %337 = vmatprep.mubr.f32.mxu0 0.0
      %338 = vmatmul.mubr.f32.gmra.mrb[0].mxu0 %v193
      %v339 = vpop.f32.mrb[0].mxu0
      %v340 = vadd.f32 0.0, %v339
      %v341 = vpop.f32.mrb[0].mxu0
      %342 = vmatprep.mubr.f32.mxu0 0.0
      %343 = vmatmul.mubr.f32.gmra.mrb[0].mxu0 %v194
      %v344 = vpop.f32.mrb[0].mxu0
      %v345 = vadd.f32 0.0, %v344
      %v346 = vpop.f32.mrb[0].mxu0
      %347 = vmatprep.mubr.f32.mxu0 0.0
      %348 = vmatmul.mubr.f32.gmra.mrb[0].mxu0 %v195
      %v349 = vpop.f32.mrb[0].mxu0
      %v350 = vadd.f32 0.0, %v349
      %v351 = vpop.f32.mrb[0].mxu0
      %352 = vmatprep.mubr.f32.mxu0 0.0
      %353 = vmatmul.mubr.f32.gmra.mrb[0].mxu0 %v196
      %v354 = vpop.f32.mrb[0].mxu0
      %v355 = vadd.f32 0.0, %v354
      %v356 = vpop.f32.mrb[0].mxu0
      %357 = vmatprep.mubr.f32.mxu0 0.0
      %358 = vmatmul.mubr.f32.gmra.mrb[0].mxu0 %v197
      %v359 = vpop.f32.mrb[0].mxu0
      %v360 = vadd.f32 0.0, %v359
      %v361 = vpop.f32.mrb[0].mxu0
      %362 = vmatprep.mubr.f32.mxu0 0.0
      %363 = vmatmul.mubr.f32.gmra.mrb[0].mxu0 %v198
      %v364 = vpop.f32.mrb[0].mxu0
      %v365 = vadd.f32 0.0, %v364
      %v366 = vpop.f32.mrb[0].mxu0
      %367 = vmatprep.mubr.f32.mxu0 0.0
      %368 = vmatmul.mubr.f32.gmra.mrb[0].mxu0 %v199
      %v369 = vpop.f32.mrb[0].mxu0
      %v370 = vadd.f32 0.0, %v369
      %v371 = vpop.f32.mrb[0].mxu0
      %372 = vmatprep.mubr.f32.mxu0 0.0
      %373 = vmatmul.mubr.f32.gmra.mrb[0].mxu0 %v200
      %v374 = vpop.f32.mrb[0].mxu0
      %v375 = vadd.f32 0.0, %v374
      %v376 = vpop.f32.mrb[0].mxu0
      %377 = vmatprep.mubr.f32.mxu0 0.0
      %378 = vmatmul.mubr.f32.gmra.mrb[0].mxu0 %v201
      %v379 = vpop.f32.mrb[0].mxu0
      %v380 = vadd.f32 0.0, %v379
      %v381 = vpop.f32.mrb[0].mxu0
      %382 = vmatprep.mubr.f32.mxu0 0.0
      %383 = vmatmul.mubr.f32.gmra.mrb[0].mxu0 %v202
      %v384 = vpop.f32.mrb[0].mxu0
      %v385 = vadd.f32 0.0, %v384
      %v386 = vpop.f32.mrb[0].mxu0
      %387 = vmatprep.mubr.f32.mxu0 0.0
      %388 = vmatmul.mubr.f32.gmra.mrb[0].mxu0 %v203
      %v389 = vpop.f32.mrb[0].mxu0
      %v390 = vadd.f32 0.0, %v389
      %v391 = vpop.f32.mrb[0].mxu0
      %392 = vmatprep.mubr.f32.mxu0 0.0
      %393 = vmatmul.mubr.f32.gmra.mrb[0].mxu0 %v204
      %v394 = vpop.f32.mrb[0].mxu0
      %v395 = vadd.f32 0.0, %v394
      %v396 = vpop.f32.mrb[0].mxu0
      %397 = vmatprep.mubr.f32.mxu0 0.0
      %398 = vmatmul.mubr.f32.gmra.mrb[0].mxu0 %v205
      %v399 = vpop.f32.mrb[0].mxu0
      %v400 = vadd.f32 0.0, %v399
      %v401 = vpop.f32.mrb[0].mxu0
      %402 = vmatprep.mubr.f32.mxu0 0.0
      %403 = vmatmul.mubr.f32.gmra.mrb[0].mxu0 %v206
      %v404 = vpop.f32.mrb[0].mxu0
      %v405 = vadd.f32 0.0, %v404
      %v406 = vpop.f32.mrb[0].mxu0
      %407 = vmatprep.mubr.f32.mxu0 0.0
      %408 = vmatmul.mubr.f32.gmra.mrb[0].mxu0 %v207
      %v409 = vpop.f32.mrb[0].mxu0
      %v410 = vadd.f32 0.0, %v409
      %v411 = vpop.f32.mrb[0].mxu0
      %412 = vmatprep.mubr.f32.mxu0 0.0
      %413 = vmatmul.mubr.f32.gmra.mrb[0].mxu0 %v208
      %v414 = vpop.f32.mrb[0].mxu0
      %v415 = vadd.f32 0.0, %v414
      %v416 = vpop.f32.mrb[0].mxu0
      %417 = vmatprep.mubr.f32.mxu0 0.0
      %418 = vmatmul.mubr.f32.gmra.mrb[0].mxu0 %v209
      %v419 = vpop.f32.mrb[0].mxu0
      %v420 = vadd.f32 0.0, %v419
      %v421 = vpop.f32.mrb[0].mxu0
      %422 = vmatprep.mubr.f32.mxu0 0.0
      %423 = vmatmul.mubr.f32.gmra.mrb[0].mxu0 %v210
      %v424 = vpop.f32.mrb[0].mxu0
      %v425 = vadd.f32 0.0, %v424
      %v426 = vpop.f32.mrb[0].mxu0
      %427 = vmatprep.mubr.f32.mxu0 0.0
      %428 = vmatmul.mubr.f32.gmra.mrb[0].mxu0 %v211
      %v429 = vpop.f32.mrb[0].mxu0
      %v430 = vadd.f32 0.0, %v429
      %v431 = vpop.f32.mrb[0].mxu0
      %432 = vmatprep.mubr.f32.mxu0 0.0
      %433 = vmatmul.mubr.f32.gmra.mrb[0].mxu0 %v212
      %v434 = vpop.f32.mrb[0].mxu0
      %v435 = vadd.f32 0.0, %v434
      %v436 = vpop.f32.mrb[0].mxu0
      %437 = vmatprep.mubr.f32.mxu0 0.0
      %438 = vmatmul.mubr.f32.gmra.mrb[0].mxu0 %v213
      %v439 = vpop.f32.mrb[0].mxu0
      %v440 = vadd.f32 0.0, %v439
      %v441 = vpop.f32.mrb[0].mxu0
      %442 = vmatprep.mubr.f32.mxu0 0.0
      %443 = vmatmul.mubr.f32.gmra.mrb[0].mxu0 %v214
      %v444 = vpop.f32.mrb[0].mxu0
      %v445 = vadd.f32 0.0, %v444
      %v446 = vpop.f32.mrb[0].mxu0
      %447 = vmatprep.mubr.f32.mxu0 0.0
      %448 = vmatmul.mubr.f32.gmra.mrb[0].mxu0 %v215
      %v449 = vpop.f32.mrb[0].mxu0
      %v450 = vadd.f32 0.0, %v449
      %v451 = vpop.f32.mrb[0].mxu0
      %452 = vmatprep.mubr.f32.mxu0 0.0
      %453 = vmatmul.mubr.f32.gmra.mrb[0].mxu0 %v216
      %v454 = vpop.f32.mrb[0].mxu0
      %v455 = vadd.f32 0.0, %v454
      %v456 = vpop.f32.mrb[0].mxu0
      %457 = vdwg.mxu0
      %458 = vst [vmem:[%s179] sm:$0xff] %v300
      %459 = vst [vmem:[%s179 + $0x8] sm:$0xff] %v305
      %460 = vst [vmem:[%s179 + $0x10] sm:$0xff] %v310
      %461 = vst [vmem:[%s179 + $0x18] sm:$0xff] %v315
      %462 = vst [vmem:[%s179 + $0x20] sm:$0xff] %v320
      %463 = vst [vmem:[%s179 + $0x28] sm:$0xff] %v325
      %464 = vst [vmem:[%s179 + $0x30] sm:$0xff] %v330
      %465 = vst [vmem:[%s179 + $0x38] sm:$0xff] %v335
      %466 = vst [vmem:[%s179 + $0x40] sm:$0xff] %v340
      %467 = vst [vmem:[%s179 + $0x48] sm:$0xff] %v345
      %468 = vst [vmem:[%s179 + $0x50] sm:$0xff] %v350
      %469 = vst [vmem:[%s179 + $0x58] sm:$0xff] %v355
      %470 = vst [vmem:[%s179 + $0x60] sm:$0xff] %v360
      %471 = vst [vmem:[%s179 + $0x68] sm:$0xff] %v365
      %472 = vst [vmem:[%s179 + $0x70] sm:$0xff] %v370
      %473 = vst [vmem:[%s179 + $0x78] sm:$0xff] %v375
      %474 = vst [vmem:[%s179 + $0x80] sm:$0xff] %v380
      %475 = vst [vmem:[%s179 + $0x88] sm:$0xff] %v385
      %476 = vst [vmem:[%s179 + $0x90] sm:$0xff] %v390
      %477 = vst [vmem:[%s179 + $0x98] sm:$0xff] %v395
      %478 = vst [vmem:[%s179 + $0xa0] sm:$0xff] %v400
      %479 = vst [vmem:[%s179 + $0xa8] sm:$0xff] %v405
      %480 = vst [vmem:[%s179 + $0xb0] sm:$0xff] %v410
      %481 = vst [vmem:[%s179 + $0xb8] sm:$0xff] %v415
      %482 = vst [vmem:[%s179 + $0xc0] sm:$0xff] %v420
      %483 = vst [vmem:[%s179 + $0xc8] sm:$0xff] %v425
      %484 = vst [vmem:[%s179 + $0xd0] sm:$0xff] %v430
      %485 = vst [vmem:[%s179 + $0xd8] sm:$0xff] %v435
      %486 = vst [vmem:[%s179 + $0xe0] sm:$0xff] %v440
      %487 = vst [vmem:[%s179 + $0xe8] sm:$0xff] %v445
      %488 = vst [vmem:[%s179 + $0xf0] sm:$0xff] %v450
      %489 = vst [vmem:[%s179 + $0xf8] sm:$0xff] %v455
      %v490 = vadd.f32 %v300, %v305
      %v491 = vadd.f32 %v490, %v310
      %v492 = vadd.f32 %v491, %v315
      %v493 = vadd.f32 %v492, %v320
      %v494 = vadd.f32 %v493, %v325
      %v495 = vadd.f32 %v494, %v330
      %v496 = vadd.f32 %v495, %v335
      %v497 = vadd.f32 %v496, %v340
      %v498 = vadd.f32 %v497, %v345
      %v499 = vadd.f32 %v498, %v350
      %v500 = vadd.f32 %v499, %v355
      %v501 = vadd.f32 %v500, %v360
      %v502 = vadd.f32 %v501, %v365
      %v503 = vadd.f32 %v502, %v370
      %v504 = vadd.f32 %v503, %v375
      %v505 = vadd.f32 %v504, %v380
      %v506 = vadd.f32 %v505, %v385
      %v507 = vadd.f32 %v506, %v390
      %v508 = vadd.f32 %v507, %v395
      %v509 = vadd.f32 %v508, %v400
      %v510 = vadd.f32 %v509, %v405
      %v511 = vadd.f32 %v510, %v410
      %v512 = vadd.f32 %v511, %v415
      %v513 = vadd.f32 %v512, %v420
      %v514 = vadd.f32 %v513, %v425
      %v515 = vadd.f32 %v514, %v430
      %v516 = vadd.f32 %v515, %v435
      %v517 = vadd.f32 %v516, %v440
      %v518 = vadd.f32 %v517, %v445
      %v519 = vadd.f32 %v518, %v450
      %v520 = vadd.f32 %v519, %v455
      %v521 = vrot.slane %v520, 4
      %v522 = vadd.f32 %v520, %v521
      %v523 = vrot.slane %v522, 2
      %v524 = vadd.f32 %v522, %v523
      %v525 = vrot.slane %v524, 1
      %v526 = vadd.f32 %v524, %v525
      %527 = vst [vmem:[%s184] sm:$0x1] %v526
      %v528 = vmul.f32 %v300, %v300
      %v529 = vmul.f32 %v305, %v305
      %v530 = vmul.f32 %v310, %v310
      %v531 = vmul.f32 %v315, %v315
      %v532 = vmul.f32 %v320, %v320
      %v533 = vmul.f32 %v325, %v325
      %v534 = vmul.f32 %v330, %v330
      %v535 = vmul.f32 %v335, %v335
      %v536 = vmul.f32 %v340, %v340
      %v537 = vmul.f32 %v345, %v345
      %v538 = vmul.f32 %v350, %v350
      %v539 = vmul.f32 %v355, %v355
      %v540 = vmul.f32 %v360, %v360
      %v541 = vmul.f32 %v365, %v365
      %v542 = vmul.f32 %v370, %v370
      %v543 = vmul.f32 %v375, %v375
      %v544 = vmul.f32 %v380, %v380
      %v545 = vmul.f32 %v385, %v385
      %v546 = vmul.f32 %v390, %v390
      %v547 = vmul.f32 %v395, %v395
      %v548 = vmul.f32 %v400, %v400
      %v549 = vmul.f32 %v405, %v405
      %v550 = vmul.f32 %v410, %v410
      %v551 = vmul.f32 %v415, %v415
      %v552 = vmul.f32 %v420, %v420
      %v553 = vmul.f32 %v425, %v425
      %v554 = vmul.f32 %v430, %v430
      %v555 = vmul.f32 %v435, %v435
      %v556 = vmul.f32 %v440, %v440
      %v557 = vmul.f32 %v445, %v445
      %v558 = vmul.f32 %v450, %v450
      %v559 = vmul.f32 %v455, %v455
      %v560 = vadd.f32 %v528, %v529
      %v561 = vadd.f32 %v560, %v530
      %v562 = vadd.f32 %v561, %v531
      %v563 = vadd.f32 %v562, %v532
      %v564 = vadd.f32 %v563, %v533
      %v565 = vadd.f32 %v564, %v534
      %v566 = vadd.f32 %v565, %v535
      %v567 = vadd.f32 %v566, %v536
      %v568 = vadd.f32 %v567, %v537
      %v569 = vadd.f32 %v568, %v538
      %v570 = vadd.f32 %v569, %v539
      %v571 = vadd.f32 %v570, %v540
      %v572 = vadd.f32 %v571, %v541
      %v573 = vadd.f32 %v572, %v542
      %v574 = vadd.f32 %v573, %v543
      %v575 = vadd.f32 %v574, %v544
      %v576 = vadd.f32 %v575, %v545
      %v577 = vadd.f32 %v576, %v546
      %v578 = vadd.f32 %v577, %v547
      %v579 = vadd.f32 %v578, %v548
      %v580 = vadd.f32 %v579, %v549
      %v581 = vadd.f32 %v580, %v550
      %v582 = vadd.f32 %v581, %v551
      %v583 = vadd.f32 %v582, %v552
      %v584 = vadd.f32 %v583, %v553
      %v585 = vadd.f32 %v584, %v554
      %v586 = vadd.f32 %v585, %v555
      %v587 = vadd.f32 %v586, %v556
      %v588 = vadd.f32 %v587, %v557
      %v589 = vadd.f32 %v588, %v558
      %v590 = vadd.f32 %v589, %v559
      %v591 = vrot.slane %v590, 4
      %v592 = vadd.f32 %v590, %v591
      %v593 = vrot.slane %v592, 2
      %v594 = vadd.f32 %v592, %v593
      %v595 = vrot.slane %v594, 1
      %v596 = vadd.f32 %v594, %v595
      %597 = vst [vmem:[%s184 + $0x1] sm:$0x1] %v596
      %s598 = smul.u32 32, %s15
      %p599 = scmp.lt.s32.totalorder %s598, 63
      %s600 = scalar_select %p599, %s598, 63
      %s601 = smul.addr %s600, 8
      %s602 = scalar_lea.vmem %s2, %s601
      %p603 = scmp.lt.s32.totalorder %s15, 1
      %s604 = scalar_select %p603, %s15, 1
      %s605 = smul.addr %s604, 2
      %s606 = scalar_lea.vmem %s3, %s605
      // Predicated region
      $region29: #{bottleneck_forward.4} parent=27 // pred_check
        %p607 = pneg %p80
      $region30: #{bottleneck_forward.4} parent=27 // pred_check_branch
        %609 = sbr.rel (%p607) target = $region32
      $region31: #{bottleneck_forward.4} parent=27 // pred_region
        %s610 = smul.u32 32, %s15
      $region32: #{bottleneck_forward.4} parent=27 // pred_fallthru
        _
      // Predicated region
      $region33: #{bottleneck_forward.4} parent=27 // pred_check
        %p611 = pneg %p106
      $region34: #{bottleneck_forward.4} parent=27 // pred_check_branch
        %613 = sbr.rel (%p611) target = $region36
      $region35: #{bottleneck_forward.4} parent=27 // pred_region
        _
      $region36: #{bottleneck_forward.4} parent=27 // pred_fallthru
        _
    $region28: #{bottleneck_forward.4} parent=5 // pred_fallthru
      _
    %p614 = scmp.le.s32.totalorder 2, %s10
    // Predicated region
    $region37: #{bottleneck_forward.4} parent=5 // pred_check
      %p615 = pneg %p614
    $region38: #{bottleneck_forward.4} parent=5 // pred_check_branch
      %617 = sbr.rel (%p615) target = $region40
    $region39: #{bottleneck_forward.4} parent=5 // pred_region
      %s618 = ssub.s32 %s10, 2
      // Predicated region
      $region41: #{bottleneck_forward.4} parent=39 // pred_check
        %p619 = pneg %p86
      $region42: #{bottleneck_forward.4} parent=39 // pred_check_branch
        %621 = sbr.rel (%p619) target = $region44
      $region43: #{bottleneck_forward.4} parent=39 // pred_region
        %s622 = smul.u32 32, %s16
        %p623 = scmp.lt.s32.totalorder %s622, 63
        %s624 = scalar_select %p623, %s622, 63
        %s625 = smul.addr %s624, 8
        %s626 = scalar_lea.vmem %s2, %s625
      $region44: #{bottleneck_forward.4} parent=39 // pred_fallthru
        _
      // Predicated region
      $region45: #{bottleneck_forward.4} parent=39 // pred_check
        %p627 = pneg %p112
      $region46: #{bottleneck_forward.4} parent=39 // pred_check_branch
        %629 = sbr.rel (%p627) target = $region48
      $region47: #{bottleneck_forward.4} parent=39 // pred_region
        %p630 = scmp.lt.s32.totalorder %s16, 1
        %s631 = scalar_select %p630, %s16, 1
        %s632 = smul.addr %s631, 2
        %s633 = scalar_lea.vmem %s3, %s632
      $region48: #{bottleneck_forward.4} parent=39 // pred_fallthru
        _
    $region40: #{bottleneck_forward.4} parent=5 // pred_fallthru
      _
  $region6: #{bottleneck_forward.4} parent=0 // loop_footer
    %s14 = sadd.s32 1, %s10
  $region7: #{bottleneck_forward.4} parent=0 // loop_footer_branch
    %9 = sbr.rel target = $region3
  $region8: #{bottleneck_forward.4} parent=0 // loop_exit
    _

// kernel: bottleneck_forward.7
$region0: #{bottleneck_forward.7}
  #allocation0 [shape = 'u32[]', space=smem, size = 0x4, offset = 0x4, fixed_abs, tag = 'smem constant byte address 0x4 - core index']
  #allocation1 [shape = 'u32[144,128]{1,0:T(1,128)}', space=vmem, size = 0x12000, scoped, tag = 'internal scratch']
  %s0 = inlined_call_operand.vmem [shape: f32[512,128], index: 0, kind: input, shape index: {}]
  %s1 = inlined_call_operand.vmem [shape: f32[1,128], index: 1, kind: input, shape index: {}]
  %s2 = inlined_call_operand.vmem [shape: f32[1,128], index: 2, kind: input, shape index: {}]
  %s3 = inlined_call_operand.vmem [shape: f32[512,128], index: 3, kind: input, shape index: {}]
  %s4 = inlined_call_operand.vmem [shape: f32[512,128], index: 4, kind: output, shape index: {}]
  %s5 = sld [smem:[#allocation0]]
  $region49: #{bottleneck_forward.7} parent=0
    _
  %s7 = ssub.s32 1, %s5
  %s8 = scalar_select 0, %s7, %s5
  loop: start=0, step=1, limit=4
  $region2: #{bottleneck_forward.7} parent=0 // loop_pre_header
    _
  $region3: #{bottleneck_forward.7} parent=0 // loop_header
    %s10 = sphi 0, %s14
    %p11 = scmp.ge.s32.totalorder %s10, 4
    %s20 = sphi 0, %s22
    %s23 = sphi 0, %s20
    %s24 = sphi 0, %s23
    %s40 = sphi 0, %s24
    %s44 = sphi 0, %s44
    %s46 = sphi 0, %s44
    %s47 = sphi 0, %s46
    %s61 = sphi 0, %s47
    %s65 = sphi 0, %s65
    %s67 = sphi 0, %s65
    %s68 = sphi 0, %s67
    %s82 = sphi 0, %s68
    %s88 = sphi 0, %s90
    %s91 = sphi 0, %s88
    %s92 = sphi 0, %s91
    %s108 = sphi 0, %s92
    %s114 = sphi 0, %s116
    %s117 = sphi 0, %s114
    %s118 = sphi 0, %s117
    %s134 = sphi 0, %s118
  $region4: #{bottleneck_forward.7} parent=0 // loop_header_branch
    %13 = sbr.rel (%p11) target = $region8
  $region5: #{bottleneck_forward.7} parent=0 // loop_body
    %s15 = ssub.s32 %s10, 1
    %s16 = ssub.s32 %s10, 2
    %s17 = sadd.s32 %s10, 1
    %s18 = ssub.s32 %s10, %s17
    %p19 = scmp.eq.s32.totalorder %s18, 0
    %s21 = sadd.s32 %s20, 1
    %s22 = scalar_select %p19, %s20, %s21
    %p25 = pneg %p19
    %p26 = scmp.eq.s32.totalorder %s10, 1
    %p27 = por %p25, %p26
    %p28 = scmp.ne.s32.totalorder %s20, %s23
    %p29 = scmp.eq.s32.totalorder %s10, 0
    %p30 = por %p28, %p29
    %p31 = scmp.ne.s32.totalorder %s20, %s23
    %p32 = scmp.eq.s32.totalorder %s15, 1
    %p33 = por %p31, %p32
    %p34 = scmp.ne.s32.totalorder %s23, %s24
    %p35 = scmp.eq.s32.totalorder %s15, 0
    %p36 = por %p34, %p35
    %p37 = scmp.ne.s32.totalorder %s23, %s24
    %p38 = scmp.eq.s32.totalorder %s16, 1
    %p39 = por %p37, %p38
    %p41 = scmp.ne.s32.totalorder %s24, %s40
    %p42 = scmp.eq.s32.totalorder %s16, 0
    %p43 = por %p41, %p42
    %s45 = sadd.s32 %s44, 1
    %p48 = scmp.eq.s32.totalorder %s10, 1
    %p49 = scmp.ne.s32.totalorder %s44, %s46
    %p50 = scmp.eq.s32.totalorder %s10, 0
    %p51 = por %p49, %p50
    %p52 = scmp.ne.s32.totalorder %s44, %s46
    %p53 = scmp.eq.s32.totalorder %s15, 1
    %p54 = por %p52, %p53
    %p55 = scmp.ne.s32.totalorder %s46, %s47
    %p56 = scmp.eq.s32.totalorder %s15, 0
    %p57 = por %p55, %p56
    %p58 = scmp.ne.s32.totalorder %s46, %s47
    %p59 = scmp.eq.s32.totalorder %s16, 1
    %p60 = por %p58, %p59
    %p62 = scmp.ne.s32.totalorder %s47, %s61
    %p63 = scmp.eq.s32.totalorder %s16, 0
    %p64 = por %p62, %p63
    %s66 = sadd.s32 %s65, 1
    %p69 = scmp.eq.s32.totalorder %s10, 1
    %p70 = scmp.ne.s32.totalorder %s65, %s67
    %p71 = scmp.eq.s32.totalorder %s10, 0
    %p72 = por %p70, %p71
    %p73 = scmp.ne.s32.totalorder %s65, %s67
    %p74 = scmp.eq.s32.totalorder %s15, 1
    %p75 = por %p73, %p74
    %p76 = scmp.ne.s32.totalorder %s67, %s68
    %p77 = scmp.eq.s32.totalorder %s15, 0
    %p78 = por %p76, %p77
    %p79 = scmp.ne.s32.totalorder %s67, %s68
    %p80 = scmp.eq.s32.totalorder %s16, 1
    %p81 = por %p79, %p80
    %p83 = scmp.ne.s32.totalorder %s68, %s82
    %p84 = scmp.eq.s32.totalorder %s16, 0
    %p85 = por %p83, %p84
    %s86 = ssub.s32 %s10, %s17
    %p87 = scmp.eq.s32.totalorder %s86, 0
    %s89 = sadd.s32 %s88, 1
    %s90 = scalar_select %p87, %s88, %s89
    %p93 = pneg %p87
    %p94 = scmp.eq.s32.totalorder %s10, 1
    %p95 = por %p93, %p94
    %p96 = scmp.ne.s32.totalorder %s88, %s91
    %p97 = scmp.eq.s32.totalorder %s10, 0
    %p98 = por %p96, %p97
    %p99 = scmp.ne.s32.totalorder %s88, %s91
    %p100 = scmp.eq.s32.totalorder %s15, 1
    %p101 = por %p99, %p100
    %p102 = scmp.ne.s32.totalorder %s91, %s92
    %p103 = scmp.eq.s32.totalorder %s15, 0
    %p104 = por %p102, %p103
    %p105 = scmp.ne.s32.totalorder %s91, %s92
    %p106 = scmp.eq.s32.totalorder %s16, 1
    %p107 = por %p105, %p106
    %p109 = scmp.ne.s32.totalorder %s92, %s108
    %p110 = scmp.eq.s32.totalorder %s16, 0
    %p111 = por %p109, %p110
    %s112 = ssub.s32 %s10, %s17
    %p113 = scmp.eq.s32.totalorder %s112, 0
    %s115 = sadd.s32 %s114, 1
    %s116 = scalar_select %p113, %s114, %s115
    %p119 = pneg %p113
    %p120 = scmp.eq.s32.totalorder %s10, 1
    %p121 = por %p119, %p120
    %p122 = scmp.ne.s32.totalorder %s114, %s117
    %p123 = scmp.eq.s32.totalorder %s10, 0
    %p124 = por %p122, %p123
    %p125 = scmp.ne.s32.totalorder %s114, %s117
    %p126 = scmp.eq.s32.totalorder %s15, 1
    %p127 = por %p125, %p126
    %p128 = scmp.ne.s32.totalorder %s117, %s118
    %p129 = scmp.eq.s32.totalorder %s15, 0
    %p130 = por %p128, %p129
    %p131 = scmp.ne.s32.totalorder %s117, %s118
    %p132 = scmp.eq.s32.totalorder %s16, 1
    %p133 = por %p131, %p132
    %p135 = scmp.ne.s32.totalorder %s118, %s134
    %p136 = scmp.eq.s32.totalorder %s16, 0
    %p137 = por %p135, %p136
    %p138 = scmp.le.s32.totalorder 1, %s10
    %p139 = scmp.lt.s32.totalorder %s10, 3
    %p140 = pnand %p138, %p139
    %p141 = pneg %p140
    // Predicated region
    $region9: #{bottleneck_forward.7} parent=5 // pred_check
      _
    $region10: #{bottleneck_forward.7} parent=5 // pred_check_branch
      %143 = sbr.rel (%p140) target = $region12
    $region11: #{bottleneck_forward.7} parent=5 // pred_region
      %s144 = ssub.s32 %s10, 1
      // Predicated region
      $region13: #{bottleneck_forward.7} parent=11 // pred_check
        %p145 = pneg %p57
      $region14: #{bottleneck_forward.7} parent=11 // pred_check_branch
        %147 = sbr.rel (%p145) target = $region16
      $region15: #{bottleneck_forward.7} parent=11 // pred_region
        _
      $region16: #{bottleneck_forward.7} parent=11 // pred_fallthru
        _
      // Predicated region
      $region17: #{bottleneck_forward.7} parent=11 // pred_check
        %p148 = pneg %p78
      $region18: #{bottleneck_forward.7} parent=11 // pred_check_branch
        %150 = sbr.rel (%p148) target = $region20
      $region19: #{bottleneck_forward.7} parent=11 // pred_region
        _
      $region20: #{bottleneck_forward.7} parent=11 // pred_fallthru
        _
    $region12: #{bottleneck_forward.7} parent=5 // pred_fallthru
      _
    %p151 = scmp.lt.s32.totalorder %s10, 2
    // Predicated region
    $region21: #{bottleneck_forward.7} parent=5 // pred_check
      %p152 = pneg %p151
    $region22: #{bottleneck_forward.7} parent=5 // pred_check_branch
      %154 = sbr.rel (%p152) target = $region24
    $region23: #{bottleneck_forward.7} parent=5 // pred_region
      // Predicated region
      $region25: #{bottleneck_forward.7} parent=23 // pred_check
        %p155 = pneg %p30
      $region26: #{bottleneck_forward.7} parent=23 // pred_check_branch
        %157 = sbr.rel (%p155) target = $region28
      $region27: #{bottleneck_forward.7} parent=23 // pred_region
        %s158 = smul.u32 32, %s10
        %p159 = scmp.lt.s32.totalorder %s158, 63
        %s160 = scalar_select %p159, %s158, 63
        %s161 = smul.addr %s160, 8
        %s162 = scalar_lea.vmem %s0, %s161
        %s163 = smul.u32 32, %s10
      $region28: #{bottleneck_forward.7} parent=23 // pred_fallthru
        _
      // Predicated region
      $region29: #{bottleneck_forward.7} parent=23 // pred_check
        %p164 = pneg %p98
      $region30: #{bottleneck_forward.7} parent=23 // pred_check_branch
        %166 = sbr.rel (%p164) target = $region32
      $region31: #{bottleneck_forward.7} parent=23 // pred_region
        %s167 = smul.u32 32, %s10
        %p168 = scmp.lt.s32.totalorder %s167, 63
        %s169 = scalar_select %p168, %s167, 63
        %s170 = smul.addr %s169, 8
        %s171 = scalar_lea.vmem %s3, %s170
        %s172 = smul.u32 32, %s10
      $region32: #{bottleneck_forward.7} parent=23 // pred_fallthru
        _
    $region24: #{bottleneck_forward.7} parent=5 // pred_fallthru
      _
    %p173 = scmp.le.s32.totalorder 1, %s10
    %p174 = scmp.lt.s32.totalorder %s10, 3
    %p175 = pnand %p173, %p174
    %p176 = pneg %p175
    // Predicated region
    $region33: #{bottleneck_forward.7} parent=5 // pred_check
      _
    $region34: #{bottleneck_forward.7} parent=5 // pred_check_branch
      %178 = sbr.rel (%p175) target = $region36
    $region35: #{bottleneck_forward.7} parent=5 // pred_region
      %s179 = ssub.s32 %s10, 1
      %s180 = smul.u32 32, %s15
      %p181 = scmp.lt.s32.totalorder %s180, 63
      %s182 = scalar_select %p181, %s180, 63
      %s183 = smul.addr %s182, 8
      %s184 = scalar_lea.vmem %s0, %s183
      %p185 = pneg %p36
      %p186 = pneg %p33
      %p187 = pneg %p57
      %p188 = pneg %p54
      %p189 = pneg %p78
      %p190 = pneg %p75
      %s191 = smul.u32 32, %s15
      %p192 = scmp.lt.s32.totalorder %s191, 63
      %s193 = scalar_select %p192, %s191, 63
      %s194 = smul.addr %s193, 8
      %s195 = scalar_lea.vmem %s3, %s194
      %p196 = pneg %p104
      %p197 = pneg %p101
      %p198 = pneg %p130
      %p199 = pneg %p127
      %s200 = smul.u32 32, %s15
      %p201 = scmp.lt.s32.totalorder %s200, 63
      %s202 = scalar_select %p201, %s200, 63
      %s203 = smul.addr %s202, 8
      %s204 = scalar_lea.vmem %s4, %s203
      %s205 = smul.u32 32, %s15
      %p206 = scmp.lt.s32.totalorder %s205, 63
      %s207 = scalar_select %p206, %s205, 63
      %s208 = smul.addr %s207, 8
      %s209 = scalar_lea.vmem %s0, %s208
      %s210 = smul.u32 32, %s15
      %s211 = smul.u32 32, %s15
      %p212 = scmp.lt.s32.totalorder %s211, 63
      %s213 = scalar_select %p212, %s211, 63
      %s214 = smul.addr %s213, 8
      %s215 = scalar_lea.vmem %s3, %s214
      %s216 = smul.u32 32, %s15
      %s217 = smul.u32 32, %s15
      %p218 = scmp.lt.s32.totalorder %s217, 63
      %s219 = scalar_select %p218, %s217, 63
      %s220 = smul.addr %s219, 8
      %s221 = scalar_lea.vmem %s4, %s220
      %s222 = smul.u32 32, %s15
      %v223 = vld [vmem:[%s209] sm:$0xff]
      %v224 = vld [vmem:[%s209 + $0x8] sm:$0xff]
      %v225 = vld [vmem:[%s209 + $0x10] sm:$0xff]
      %v226 = vld [vmem:[%s209 + $0x18] sm:$0xff]
      %v227 = vld [vmem:[%s209 + $0x20] sm:$0xff]
      %v228 = vld [vmem:[%s209 + $0x28] sm:$0xff]
      %v229 = vld [vmem:[%s209 + $0x30] sm:$0xff]
      %v230 = vld [vmem:[%s209 + $0x38] sm:$0xff]
      %v231 = vld [vmem:[%s209 + $0x40] sm:$0xff]
      %v232 = vld [vmem:[%s209 + $0x48] sm:$0xff]
      %v233 = vld [vmem:[%s209 + $0x50] sm:$0xff]
      %v234 = vld [vmem:[%s209 + $0x58] sm:$0xff]
      %v235 = vld [vmem:[%s209 + $0x60] sm:$0xff]
      %v236 = vld [vmem:[%s209 + $0x68] sm:$0xff]
      %v237 = vld [vmem:[%s209 + $0x70] sm:$0xff]
      %v238 = vld [vmem:[%s209 + $0x78] sm:$0xff]
      %v239 = vld [vmem:[%s209 + $0x80] sm:$0xff]
      %v240 = vld [vmem:[%s209 + $0x88] sm:$0xff]
      %v241 = vld [vmem:[%s209 + $0x90] sm:$0xff]
      %v242 = vld [vmem:[%s209 + $0x98] sm:$0xff]
      %v243 = vld [vmem:[%s209 + $0xa0] sm:$0xff]
      %v244 = vld [vmem:[%s209 + $0xa8] sm:$0xff]
      %v245 = vld [vmem:[%s209 + $0xb0] sm:$0xff]
      %v246 = vld [vmem:[%s209 + $0xb8] sm:$0xff]
      %v247 = vld [vmem:[%s209 + $0xc0] sm:$0xff]
      %v248 = vld [vmem:[%s209 + $0xc8] sm:$0xff]
      %v249 = vld [vmem:[%s209 + $0xd0] sm:$0xff]
      %v250 = vld [vmem:[%s209 + $0xd8] sm:$0xff]
      %v251 = vld [vmem:[%s209 + $0xe0] sm:$0xff]
      %v252 = vld [vmem:[%s209 + $0xe8] sm:$0xff]
      %v253 = vld [vmem:[%s209 + $0xf0] sm:$0xff]
      %v254 = vld [vmem:[%s209 + $0xf8] sm:$0xff]
      %v255 = vld [vmem:[%s1] sm:$0x1]
      %v257 = vlaneseq
      %v258 = vshrl.u32 %v257, 7
      %v259 = vsub.s32 0, %v258
      %v260 = vrot.slane %v255, %v259
      %v262 = vmul.f32 %v223, %v260
      %v263 = vmul.f32 %v224, %v260
      %v264 = vmul.f32 %v225, %v260
      %v265 = vmul.f32 %v226, %v260
      %v266 = vmul.f32 %v227, %v260
      %v267 = vmul.f32 %v228, %v260
      %v268 = vmul.f32 %v229, %v260
      %v269 = vmul.f32 %v230, %v260
      %v270 = vmul.f32 %v231, %v260
      %v271 = vmul.f32 %v232, %v260
      %v272 = vmul.f32 %v233, %v260
      %v273 = vmul.f32 %v234, %v260
      %v274 = vmul.f32 %v235, %v260
      %v275 = vmul.f32 %v236, %v260
      %v276 = vmul.f32 %v237, %v260
      %v277 = vmul.f32 %v238, %v260
      %v278 = vmul.f32 %v239, %v260
      %v279 = vmul.f32 %v240, %v260
      %v280 = vmul.f32 %v241, %v260
      %v281 = vmul.f32 %v242, %v260
      %v282 = vmul.f32 %v243, %v260
      %v283 = vmul.f32 %v244, %v260
      %v284 = vmul.f32 %v245, %v260
      %v285 = vmul.f32 %v246, %v260
      %v286 = vmul.f32 %v247, %v260
      %v287 = vmul.f32 %v248, %v260
      %v288 = vmul.f32 %v249, %v260
      %v289 = vmul.f32 %v250, %v260
      %v290 = vmul.f32 %v251, %v260
      %v291 = vmul.f32 %v252, %v260
      %v292 = vmul.f32 %v253, %v260
      %v293 = vmul.f32 %v254, %v260
      %v294 = vld [vmem:[%s2] sm:$0x1]
      %v296 = vlaneseq
      %v297 = vshrl.u32 %v296, 7
      %v298 = vsub.s32 0, %v297
      %v299 = vrot.slane %v294, %v298
      %v301 = vadd.f32 %v262, %v299
      %v302 = vadd.f32 %v263, %v299
      %v303 = vadd.f32 %v264, %v299
      %v304 = vadd.f32 %v265, %v299
      %v305 = vadd.f32 %v266, %v299
      %v306 = vadd.f32 %v267, %v299
      %v307 = vadd.f32 %v268, %v299
      %v308 = vadd.f32 %v269, %v299
      %v309 = vadd.f32 %v270, %v299
      %v310 = vadd.f32 %v271, %v299
      %v311 = vadd.f32 %v272, %v299
      %v312 = vadd.f32 %v273, %v299
      %v313 = vadd.f32 %v274, %v299
      %v314 = vadd.f32 %v275, %v299
      %v315 = vadd.f32 %v276, %v299
      %v316 = vadd.f32 %v277, %v299
      %v317 = vadd.f32 %v278, %v299
      %v318 = vadd.f32 %v279, %v299
      %v319 = vadd.f32 %v280, %v299
      %v320 = vadd.f32 %v281, %v299
      %v321 = vadd.f32 %v282, %v299
      %v322 = vadd.f32 %v283, %v299
      %v323 = vadd.f32 %v284, %v299
      %v324 = vadd.f32 %v285, %v299
      %v325 = vadd.f32 %v286, %v299
      %v326 = vadd.f32 %v287, %v299
      %v327 = vadd.f32 %v288, %v299
      %v328 = vadd.f32 %v289, %v299
      %v329 = vadd.f32 %v290, %v299
      %v330 = vadd.f32 %v291, %v299
      %v331 = vadd.f32 %v292, %v299
      %v332 = vadd.f32 %v293, %v299
      %v333 = vld [vmem:[%s215] sm:$0xff]
      %v334 = vld [vmem:[%s215 + $0x8] sm:$0xff]
      %v335 = vld [vmem:[%s215 + $0x10] sm:$0xff]
      %v336 = vld [vmem:[%s215 + $0x18] sm:$0xff]
      %v337 = vld [vmem:[%s215 + $0x20] sm:$0xff]
      %v338 = vld [vmem:[%s215 + $0x28] sm:$0xff]
      %v339 = vld [vmem:[%s215 + $0x30] sm:$0xff]
      %v340 = vld [vmem:[%s215 + $0x38] sm:$0xff]
      %v341 = vld [vmem:[%s215 + $0x40] sm:$0xff]
      %v342 = vld [vmem:[%s215 + $0x48] sm:$0xff]
      %v343 = vld [vmem:[%s215 + $0x50] sm:$0xff]
      %v344 = vld [vmem:[%s215 + $0x58] sm:$0xff]
      %v345 = vld [vmem:[%s215 + $0x60] sm:$0xff]
      %v346 = vld [vmem:[%s215 + $0x68] sm:$0xff]
      %v347 = vld [vmem:[%s215 + $0x70] sm:$0xff]
      %v348 = vld [vmem:[%s215 + $0x78] sm:$0xff]
      %v349 = vld [vmem:[%s215 + $0x80] sm:$0xff]
      %v350 = vld [vmem:[%s215 + $0x88] sm:$0xff]
      %v351 = vld [vmem:[%s215 + $0x90] sm:$0xff]
      %v352 = vld [vmem:[%s215 + $0x98] sm:$0xff]
      %v353 = vld [vmem:[%s215 + $0xa0] sm:$0xff]
      %v354 = vld [vmem:[%s215 + $0xa8] sm:$0xff]
      %v355 = vld [vmem:[%s215 + $0xb0] sm:$0xff]
      %v356 = vld [vmem:[%s215 + $0xb8] sm:$0xff]
      %v357 = vld [vmem:[%s215 + $0xc0] sm:$0xff]
      %v358 = vld [vmem:[%s215 + $0xc8] sm:$0xff]
      %v359 = vld [vmem:[%s215 + $0xd0] sm:$0xff]
      %v360 = vld [vmem:[%s215 + $0xd8] sm:$0xff]
      %v361 = vld [vmem:[%s215 + $0xe0] sm:$0xff]
      %v362 = vld [vmem:[%s215 + $0xe8] sm:$0xff]
      %v363 = vld [vmem:[%s215 + $0xf0] sm:$0xff]
      %v364 = vld [vmem:[%s215 + $0xf8] sm:$0xff]
      %v365 = vadd.f32 %v301, %v333
      %v366 = vadd.f32 %v302, %v334
      %v367 = vadd.f32 %v303, %v335
      %v368 = vadd.f32 %v304, %v336
      %v369 = vadd.f32 %v305, %v337
      %v370 = vadd.f32 %v306, %v338
      %v371 = vadd.f32 %v307, %v339
      %v372 = vadd.f32 %v308, %v340
      %v373 = vadd.f32 %v309, %v341
      %v374 = vadd.f32 %v310, %v342
      %v375 = vadd.f32 %v311, %v343
      %v376 = vadd.f32 %v312, %v344
      %v377 = vadd.f32 %v313, %v345
      %v378 = vadd.f32 %v314, %v346
      %v379 = vadd.f32 %v315, %v347
      %v380 = vadd.f32 %v316, %v348
      %v381 = vadd.f32 %v317, %v349
      %v382 = vadd.f32 %v318, %v350
      %v383 = vadd.f32 %v319, %v351
      %v384 = vadd.f32 %v320, %v352
      %v385 = vadd.f32 %v321, %v353
      %v386 = vadd.f32 %v322, %v354
      %v387 = vadd.f32 %v323, %v355
      %v388 = vadd.f32 %v324, %v356
      %v389 = vadd.f32 %v325, %v357
      %v390 = vadd.f32 %v326, %v358
      %v391 = vadd.f32 %v327, %v359
      %v392 = vadd.f32 %v328, %v360
      %v393 = vadd.f32 %v329, %v361
      %v394 = vadd.f32 %v330, %v362
      %v395 = vadd.f32 %v331, %v363
      %v396 = vadd.f32 %v332, %v364
      %v397 = vmax.f32 %v365, 0.0
      %v398 = vmax.f32 %v366, 0.0
      %v399 = vmax.f32 %v367, 0.0
      %v400 = vmax.f32 %v368, 0.0
      %v401 = vmax.f32 %v369, 0.0
      %v402 = vmax.f32 %v370, 0.0
      %v403 = vmax.f32 %v371, 0.0
      %v404 = vmax.f32 %v372, 0.0
      %v405 = vmax.f32 %v373, 0.0
      %v406 = vmax.f32 %v374, 0.0
      %v407 = vmax.f32 %v375, 0.0
      %v408 = vmax.f32 %v376, 0.0
      %v409 = vmax.f32 %v377, 0.0
      %v410 = vmax.f32 %v378, 0.0
      %v411 = vmax.f32 %v379, 0.0
      %v412 = vmax.f32 %v380, 0.0
      %v413 = vmax.f32 %v381, 0.0
      %v414 = vmax.f32 %v382, 0.0
      %v415 = vmax.f32 %v383, 0.0
      %v416 = vmax.f32 %v384, 0.0
      %v417 = vmax.f32 %v385, 0.0
      %v418 = vmax.f32 %v386, 0.0
      %v419 = vmax.f32 %v387, 0.0
      %v420 = vmax.f32 %v388, 0.0
      %v421 = vmax.f32 %v389, 0.0
      %v422 = vmax.f32 %v390, 0.0
      %v423 = vmax.f32 %v391, 0.0
      %v424 = vmax.f32 %v392, 0.0
      %v425 = vmax.f32 %v393, 0.0
      %v426 = vmax.f32 %v394, 0.0
      %v427 = vmax.f32 %v395, 0.0
      %v428 = vmax.f32 %v396, 0.0
      %429 = vst [vmem:[%s221] sm:$0xff] %v397
      %430 = vst [vmem:[%s221 + $0x8] sm:$0xff] %v398
      %431 = vst [vmem:[%s221 + $0x10] sm:$0xff] %v399
      %432 = vst [vmem:[%s221 + $0x18] sm:$0xff] %v400
      %433 = vst [vmem:[%s221 + $0x20] sm:$0xff] %v401
      %434 = vst [vmem:[%s221 + $0x28] sm:$0xff] %v402
      %435 = vst [vmem:[%s221 + $0x30] sm:$0xff] %v403
      %436 = vst [vmem:[%s221 + $0x38] sm:$0xff] %v404
      %437 = vst [vmem:[%s221 + $0x40] sm:$0xff] %v405
      %438 = vst [vmem:[%s221 + $0x48] sm:$0xff] %v406
      %439 = vst [vmem:[%s221 + $0x50] sm:$0xff] %v407
      %440 = vst [vmem:[%s221 + $0x58] sm:$0xff] %v408
      %441 = vst [vmem:[%s221 + $0x60] sm:$0xff] %v409
      %442 = vst [vmem:[%s221 + $0x68] sm:$0xff] %v410
      %443 = vst [vmem:[%s221 + $0x70] sm:$0xff] %v411
      %444 = vst [vmem:[%s221 + $0x78] sm:$0xff] %v412
      %445 = vst [vmem:[%s221 + $0x80] sm:$0xff] %v413
      %446 = vst [vmem:[%s221 + $0x88] sm:$0xff] %v414
      %447 = vst [vmem:[%s221 + $0x90] sm:$0xff] %v415
      %448 = vst [vmem:[%s221 + $0x98] sm:$0xff] %v416
      %449 = vst [vmem:[%s221 + $0xa0] sm:$0xff] %v417
      %450 = vst [vmem:[%s221 + $0xa8] sm:$0xff] %v418
      %451 = vst [vmem:[%s221 + $0xb0] sm:$0xff] %v419
      %452 = vst [vmem:[%s221 + $0xb8] sm:$0xff] %v420
      %453 = vst [vmem:[%s221 + $0xc0] sm:$0xff] %v421
      %454 = vst [vmem:[%s221 + $0xc8] sm:$0xff] %v422
      %455 = vst [vmem:[%s221 + $0xd0] sm:$0xff] %v423
      %456 = vst [vmem:[%s221 + $0xd8] sm:$0xff] %v424
      %457 = vst [vmem:[%s221 + $0xe0] sm:$0xff] %v425
      %458 = vst [vmem:[%s221 + $0xe8] sm:$0xff] %v426
      %459 = vst [vmem:[%s221 + $0xf0] sm:$0xff] %v427
      %460 = vst [vmem:[%s221 + $0xf8] sm:$0xff] %v428
      %s461 = smul.u32 32, %s15
      %p462 = scmp.lt.s32.totalorder %s461, 63
      %s463 = scalar_select %p462, %s461, 63
      %s464 = smul.addr %s463, 8
      %s465 = scalar_lea.vmem %s4, %s464
      // Predicated region
      $region37: #{bottleneck_forward.7} parent=35 // pred_check
        %p466 = pneg %p127
      $region38: #{bottleneck_forward.7} parent=35 // pred_check_branch
        %468 = sbr.rel (%p466) target = $region40
      $region39: #{bottleneck_forward.7} parent=35 // pred_region
        %s469 = smul.u32 32, %s15
      $region40: #{bottleneck_forward.7} parent=35 // pred_fallthru
        _
    $region36: #{bottleneck_forward.7} parent=5 // pred_fallthru
      _
    %p470 = scmp.le.s32.totalorder 2, %s10
    // Predicated region
    $region41: #{bottleneck_forward.7} parent=5 // pred_check
      %p471 = pneg %p470
    $region42: #{bottleneck_forward.7} parent=5 // pred_check_branch
      %473 = sbr.rel (%p471) target = $region44
    $region43: #{bottleneck_forward.7} parent=5 // pred_region
      %s474 = ssub.s32 %s10, 2
      // Predicated region
      $region45: #{bottleneck_forward.7} parent=43 // pred_check
        %p475 = pneg %p133
      $region46: #{bottleneck_forward.7} parent=43 // pred_check_branch
        %477 = sbr.rel (%p475) target = $region48
      $region47: #{bottleneck_forward.7} parent=43 // pred_region
        %s478 = smul.u32 32, %s16
        %p479 = scmp.lt.s32.totalorder %s478, 63
        %s480 = scalar_select %p479, %s478, 63
        %s481 = smul.addr %s480, 8
        %s482 = scalar_lea.vmem %s4, %s481
      $region48: #{bottleneck_forward.7} parent=43 // pred_fallthru
        _
    $region44: #{bottleneck_forward.7} parent=5 // pred_fallthru
      _
  $region6: #{bottleneck_forward.7} parent=0 // loop_footer
    %s14 = sadd.s32 1, %s10
  $region7: #{bottleneck_forward.7} parent=0 // loop_footer_branch
    %9 = sbr.rel target = $region3
  $region8: #{bottleneck_forward.7} parent=0 // loop_exit
    _

// kernel: bottleneck_forward.6
$region0: #{bottleneck_forward.6}
  #allocation0 [shape = 'u32[]', space=smem, size = 0x4, offset = 0x4, fixed_abs, tag = 'smem constant byte address 0x4 - core index']
  #allocation1 [shape = 'u32[144,128]{1,0:T(1,128)}', space=vmem, size = 0x12000, scoped, tag = 'internal scratch']
  %s0 = inlined_call_operand.vmem [shape: f32[512,128], index: 0, kind: input, shape index: {}]
  %s1 = inlined_call_operand.vmem [shape: f32[1,128], index: 1, kind: input, shape index: {}]
  %s2 = inlined_call_operand.vmem [shape: f32[1,128], index: 2, kind: input, shape index: {}]
  %s3 = inlined_call_operand.vmem [shape: f32[128,128], index: 3, kind: input, shape index: {}]
  %s4 = inlined_call_operand.vmem [shape: f32[512,128], index: 4, kind: output, shape index: {0}]
  %s5 = inlined_call_operand.vmem [shape: f32[2,2,128], index: 5, kind: output, shape index: {1}]
  %6 = xla_tuple %s4, %s5
  %s7 = sld [smem:[#allocation0]]
  $region57: #{bottleneck_forward.6} parent=0
    _
  %s9 = ssub.s32 1, %s7
  %s10 = scalar_select 0, %s9, %s7
  loop: start=0, step=1, limit=4
  $region2: #{bottleneck_forward.6} parent=0 // loop_pre_header
    _
  $region3: #{bottleneck_forward.6} parent=0 // loop_header
    %s12 = sphi 0, %s16
    %p13 = scmp.ge.s32.totalorder %s12, 4
    %s22 = sphi 0, %s24
    %s25 = sphi 0, %s22
    %s26 = sphi 0, %s25
    %s42 = sphi 0, %s26
    %s46 = sphi 0, %s46
    %s48 = sphi 0, %s46
    %s49 = sphi 0, %s48
    %s63 = sphi 0, %s49
    %s67 = sphi 0, %s67
    %s69 = sphi 0, %s67
    %s70 = sphi 0, %s69
    %s84 = sphi 0, %s70
    %s88 = sphi 0, %s88
    %s90 = sphi 0, %s88
    %s91 = sphi 0, %s90
    %s105 = sphi 0, %s91
    %s111 = sphi 0, %s113
    %s114 = sphi 0, %s111
    %s115 = sphi 0, %s114
    %s131 = sphi 0, %s115
    %s137 = sphi 0, %s139
    %s140 = sphi 0, %s137
    %s141 = sphi 0, %s140
    %s157 = sphi 0, %s141
  $region4: #{bottleneck_forward.6} parent=0 // loop_header_branch
    %15 = sbr.rel (%p13) target = $region8
  $region5: #{bottleneck_forward.6} parent=0 // loop_body
    %s17 = ssub.s32 %s12, 1
    %s18 = ssub.s32 %s12, 2
    %s19 = sadd.s32 %s12, 1
    %s20 = ssub.s32 %s12, %s19
    %p21 = scmp.eq.s32.totalorder %s20, 0
    %s23 = sadd.s32 %s22, 1
    %s24 = scalar_select %p21, %s22, %s23
    %p27 = pneg %p21
    %p28 = scmp.eq.s32.totalorder %s12, 1
    %p29 = por %p27, %p28
    %p30 = scmp.ne.s32.totalorder %s22, %s25
    %p31 = scmp.eq.s32.totalorder %s12, 0
    %p32 = por %p30, %p31
    %p33 = scmp.ne.s32.totalorder %s22, %s25
    %p34 = scmp.eq.s32.totalorder %s17, 1
    %p35 = por %p33, %p34
    %p36 = scmp.ne.s32.totalorder %s25, %s26
    %p37 = scmp.eq.s32.totalorder %s17, 0
    %p38 = por %p36, %p37
    %p39 = scmp.ne.s32.totalorder %s25, %s26
    %p40 = scmp.eq.s32.totalorder %s18, 1
    %p41 = por %p39, %p40
    %p43 = scmp.ne.s32.totalorder %s26, %s42
    %p44 = scmp.eq.s32.totalorder %s18, 0
    %p45 = por %p43, %p44
    %s47 = sadd.s32 %s46, 1
    %p50 = scmp.eq.s32.totalorder %s12, 1
    %p51 = scmp.ne.s32.totalorder %s46, %s48
    %p52 = scmp.eq.s32.totalorder %s12, 0
    %p53 = por %p51, %p52
    %p54 = scmp.ne.s32.totalorder %s46, %s48
    %p55 = scmp.eq.s32.totalorder %s17, 1
    %p56 = por %p54, %p55
    %p57 = scmp.ne.s32.totalorder %s48, %s49
    %p58 = scmp.eq.s32.totalorder %s17, 0
    %p59 = por %p57, %p58
    %p60 = scmp.ne.s32.totalorder %s48, %s49
    %p61 = scmp.eq.s32.totalorder %s18, 1
    %p62 = por %p60, %p61
    %p64 = scmp.ne.s32.totalorder %s49, %s63
    %p65 = scmp.eq.s32.totalorder %s18, 0
    %p66 = por %p64, %p65
    %s68 = sadd.s32 %s67, 1
    %p71 = scmp.eq.s32.totalorder %s12, 1
    %p72 = scmp.ne.s32.totalorder %s67, %s69
    %p73 = scmp.eq.s32.totalorder %s12, 0
    %p74 = por %p72, %p73
    %p75 = scmp.ne.s32.totalorder %s67, %s69
    %p76 = scmp.eq.s32.totalorder %s17, 1
    %p77 = por %p75, %p76
    %p78 = scmp.ne.s32.totalorder %s69, %s70
    %p79 = scmp.eq.s32.totalorder %s17, 0
    %p80 = por %p78, %p79
    %p81 = scmp.ne.s32.totalorder %s69, %s70
    %p82 = scmp.eq.s32.totalorder %s18, 1
    %p83 = por %p81, %p82
    %p85 = scmp.ne.s32.totalorder %s70, %s84
    %p86 = scmp.eq.s32.totalorder %s18, 0
    %p87 = por %p85, %p86
    %s89 = sadd.s32 %s88, 1
    %p92 = scmp.eq.s32.totalorder %s12, 1
    %p93 = scmp.ne.s32.totalorder %s88, %s90
    %p94 = scmp.eq.s32.totalorder %s12, 0
    %p95 = por %p93, %p94
    %p96 = scmp.ne.s32.totalorder %s88, %s90
    %p97 = scmp.eq.s32.totalorder %s17, 1
    %p98 = por %p96, %p97
    %p99 = scmp.ne.s32.totalorder %s90, %s91
    %p100 = scmp.eq.s32.totalorder %s17, 0
    %p101 = por %p99, %p100
    %p102 = scmp.ne.s32.totalorder %s90, %s91
    %p103 = scmp.eq.s32.totalorder %s18, 1
    %p104 = por %p102, %p103
    %p106 = scmp.ne.s32.totalorder %s91, %s105
    %p107 = scmp.eq.s32.totalorder %s18, 0
    %p108 = por %p106, %p107
    %s109 = ssub.s32 %s12, %s19
    %p110 = scmp.eq.s32.totalorder %s109, 0
    %s112 = sadd.s32 %s111, 1
    %s113 = scalar_select %p110, %s111, %s112
    %p116 = pneg %p110
    %p117 = scmp.eq.s32.totalorder %s12, 1
    %p118 = por %p116, %p117
    %p119 = scmp.ne.s32.totalorder %s111, %s114
    %p120 = scmp.eq.s32.totalorder %s12, 0
    %p121 = por %p119, %p120
    %p122 = scmp.ne.s32.totalorder %s111, %s114
    %p123 = scmp.eq.s32.totalorder %s17, 1
    %p124 = por %p122, %p123
    %p125 = scmp.ne.s32.totalorder %s114, %s115
    %p126 = scmp.eq.s32.totalorder %s17, 0
    %p127 = por %p125, %p126
    %p128 = scmp.ne.s32.totalorder %s114, %s115
    %p129 = scmp.eq.s32.totalorder %s18, 1
    %p130 = por %p128, %p129
    %p132 = scmp.ne.s32.totalorder %s115, %s131
    %p133 = scmp.eq.s32.totalorder %s18, 0
    %p134 = por %p132, %p133
    %s135 = ssub.s32 %s12, %s19
    %p136 = scmp.eq.s32.totalorder %s135, 0
    %s138 = sadd.s32 %s137, 1
    %s139 = scalar_select %p136, %s137, %s138
    %p142 = pneg %p136
    %p143 = scmp.eq.s32.totalorder %s12, 1
    %p144 = por %p142, %p143
    %p145 = scmp.ne.s32.totalorder %s137, %s140
    %p146 = scmp.eq.s32.totalorder %s12, 0
    %p147 = por %p145, %p146
    %p148 = scmp.ne.s32.totalorder %s137, %s140
    %p149 = scmp.eq.s32.totalorder %s17, 1
    %p150 = por %p148, %p149
    %p151 = scmp.ne.s32.totalorder %s140, %s141
    %p152 = scmp.eq.s32.totalorder %s17, 0
    %p153 = por %p151, %p152
    %p154 = scmp.ne.s32.totalorder %s140, %s141
    %p155 = scmp.eq.s32.totalorder %s18, 1
    %p156 = por %p154, %p155
    %p158 = scmp.ne.s32.totalorder %s141, %s157
    %p159 = scmp.eq.s32.totalorder %s18, 0
    %p160 = por %p158, %p159
    %p161 = scmp.le.s32.totalorder 1, %s12
    %p162 = scmp.lt.s32.totalorder %s12, 3
    %p163 = pnand %p161, %p162
    %p164 = pneg %p163
    // Predicated region
    $region9: #{bottleneck_forward.6} parent=5 // pred_check
      _
    $region10: #{bottleneck_forward.6} parent=5 // pred_check_branch
      %166 = sbr.rel (%p163) target = $region12
    $region11: #{bottleneck_forward.6} parent=5 // pred_region
      %s167 = ssub.s32 %s12, 1
      // Predicated region
      $region13: #{bottleneck_forward.6} parent=11 // pred_check
        %p168 = pneg %p59
      $region14: #{bottleneck_forward.6} parent=11 // pred_check_branch
        %170 = sbr.rel (%p168) target = $region16
      $region15: #{bottleneck_forward.6} parent=11 // pred_region
        _
      $region16: #{bottleneck_forward.6} parent=11 // pred_fallthru
        _
      // Predicated region
      $region17: #{bottleneck_forward.6} parent=11 // pred_check
        %p171 = pneg %p80
      $region18: #{bottleneck_forward.6} parent=11 // pred_check_branch
        %173 = sbr.rel (%p171) target = $region20
      $region19: #{bottleneck_forward.6} parent=11 // pred_region
        _
      $region20: #{bottleneck_forward.6} parent=11 // pred_fallthru
        _
      // Predicated region
      $region21: #{bottleneck_forward.6} parent=11 // pred_check
        %p174 = pneg %p101
      $region22: #{bottleneck_forward.6} parent=11 // pred_check_branch
        %176 = sbr.rel (%p174) target = $region24
      $region23: #{bottleneck_forward.6} parent=11 // pred_region
        _
      $region24: #{bottleneck_forward.6} parent=11 // pred_fallthru
        _
    $region12: #{bottleneck_forward.6} parent=5 // pred_fallthru
      _
    %p177 = scmp.lt.s32.totalorder %s12, 2
    // Predicated region
    $region25: #{bottleneck_forward.6} parent=5 // pred_check
      %p178 = pneg %p177
    $region26: #{bottleneck_forward.6} parent=5 // pred_check_branch
      %180 = sbr.rel (%p178) target = $region28
    $region27: #{bottleneck_forward.6} parent=5 // pred_region
      // Predicated region
      $region29: #{bottleneck_forward.6} parent=27 // pred_check
        %p181 = pneg %p32
      $region30: #{bottleneck_forward.6} parent=27 // pred_check_branch
        %183 = sbr.rel (%p181) target = $region32
      $region31: #{bottleneck_forward.6} parent=27 // pred_region
        %s184 = smul.u32 32, %s12
        %p185 = scmp.lt.s32.totalorder %s184, 63
        %s186 = scalar_select %p185, %s184, 63
        %s187 = smul.addr %s186, 8
        %s188 = scalar_lea.vmem %s0, %s187
        %s189 = smul.u32 32, %s12
      $region32: #{bottleneck_forward.6} parent=27 // pred_fallthru
        _
    $region28: #{bottleneck_forward.6} parent=5 // pred_fallthru
      _
    %p190 = scmp.le.s32.totalorder 1, %s12
    %p191 = scmp.lt.s32.totalorder %s12, 3
    %p192 = pnand %p190, %p191
    %p193 = pneg %p192
    // Predicated region
    $region33: #{bottleneck_forward.6} parent=5 // pred_check
      _
    $region34: #{bottleneck_forward.6} parent=5 // pred_check_branch
      %195 = sbr.rel (%p192) target = $region36
    $region35: #{bottleneck_forward.6} parent=5 // pred_region
      %s196 = ssub.s32 %s12, 1
      %s197 = smul.u32 32, %s17
      %p198 = scmp.lt.s32.totalorder %s197, 63
      %s199 = scalar_select %p198, %s197, 63
      %s200 = smul.addr %s199, 8
      %s201 = scalar_lea.vmem %s0, %s200
      %p202 = pneg %p38
      %p203 = pneg %p35
      %p204 = pneg %p59
      %p205 = pneg %p56
      %p206 = pneg %p80
      %p207 = pneg %p77
      %p208 = pneg %p101
      %p209 = pneg %p98
      %p210 = pneg %p127
      %p211 = pneg %p124
      %s212 = smul.u32 32, %s17
      %p213 = scmp.lt.s32.totalorder %s212, 63
      %s214 = scalar_select %p213, %s212, 63
      %s215 = smul.addr %s214, 8
      %s216 = scalar_lea.vmem %s4, %s215
      %p217 = pneg %p153
      %p218 = pneg %p150
      %p219 = scmp.lt.s32.totalorder %s17, 1
      %s220 = scalar_select %p219, %s17, 1
      %s221 = smul.addr %s220, 2
      %s222 = scalar_lea.vmem %s5, %s221
      %s223 = smul.u32 32, %s17
      %p224 = scmp.lt.s32.totalorder %s223, 63
      %s225 = scalar_select %p224, %s223, 63
      %s226 = smul.addr %s225, 8
      %s227 = scalar_lea.vmem %s0, %s226
      %s228 = smul.u32 32, %s17
      %s229 = smul.u32 32, %s17
      %p230 = scmp.lt.s32.totalorder %s229, 63
      %s231 = scalar_select %p230, %s229, 63
      %s232 = smul.addr %s231, 8
      %s233 = scalar_lea.vmem %s4, %s232
      %s234 = smul.u32 32, %s17
      %p235 = scmp.lt.s32.totalorder %s17, 1
      %s236 = scalar_select %p235, %s17, 1
      %s237 = smul.addr %s236, 2
      %s238 = scalar_lea.vmem %s5, %s237
      %v239 = vld [vmem:[%s227] sm:$0xff]
      %v240 = vld [vmem:[%s227 + $0x8] sm:$0xff]
      %v241 = vld [vmem:[%s227 + $0x10] sm:$0xff]
      %v242 = vld [vmem:[%s227 + $0x18] sm:$0xff]
      %v243 = vld [vmem:[%s227 + $0x20] sm:$0xff]
      %v244 = vld [vmem:[%s227 + $0x28] sm:$0xff]
      %v245 = vld [vmem:[%s227 + $0x30] sm:$0xff]
      %v246 = vld [vmem:[%s227 + $0x38] sm:$0xff]
      %v247 = vld [vmem:[%s227 + $0x40] sm:$0xff]
      %v248 = vld [vmem:[%s227 + $0x48] sm:$0xff]
      %v249 = vld [vmem:[%s227 + $0x50] sm:$0xff]
      %v250 = vld [vmem:[%s227 + $0x58] sm:$0xff]
      %v251 = vld [vmem:[%s227 + $0x60] sm:$0xff]
      %v252 = vld [vmem:[%s227 + $0x68] sm:$0xff]
      %v253 = vld [vmem:[%s227 + $0x70] sm:$0xff]
      %v254 = vld [vmem:[%s227 + $0x78] sm:$0xff]
      %v255 = vld [vmem:[%s227 + $0x80] sm:$0xff]
      %v256 = vld [vmem:[%s227 + $0x88] sm:$0xff]
      %v257 = vld [vmem:[%s227 + $0x90] sm:$0xff]
      %v258 = vld [vmem:[%s227 + $0x98] sm:$0xff]
      %v259 = vld [vmem:[%s227 + $0xa0] sm:$0xff]
      %v260 = vld [vmem:[%s227 + $0xa8] sm:$0xff]
      %v261 = vld [vmem:[%s227 + $0xb0] sm:$0xff]
      %v262 = vld [vmem:[%s227 + $0xb8] sm:$0xff]
      %v263 = vld [vmem:[%s227 + $0xc0] sm:$0xff]
      %v264 = vld [vmem:[%s227 + $0xc8] sm:$0xff]
      %v265 = vld [vmem:[%s227 + $0xd0] sm:$0xff]
      %v266 = vld [vmem:[%s227 + $0xd8] sm:$0xff]
      %v267 = vld [vmem:[%s227 + $0xe0] sm:$0xff]
      %v268 = vld [vmem:[%s227 + $0xe8] sm:$0xff]
      %v269 = vld [vmem:[%s227 + $0xf0] sm:$0xff]
      %v270 = vld [vmem:[%s227 + $0xf8] sm:$0xff]
      %v271 = vld [vmem:[%s1] sm:$0x1]
      %v273 = vlaneseq
      %v274 = vshrl.u32 %v273, 7
      %v275 = vsub.s32 0, %v274
      %v276 = vrot.slane %v271, %v275
      %v278 = vmul.f32 %v239, %v276
      %v279 = vmul.f32 %v240, %v276
      %v280 = vmul.f32 %v241, %v276
      %v281 = vmul.f32 %v242, %v276
      %v282 = vmul.f32 %v243, %v276
      %v283 = vmul.f32 %v244, %v276
      %v284 = vmul.f32 %v245, %v276
      %v285 = vmul.f32 %v246, %v276
      %v286 = vmul.f32 %v247, %v276
      %v287 = vmul.f32 %v248, %v276
      %v288 = vmul.f32 %v249, %v276
      %v289 = vmul.f32 %v250, %v276
      %v290 = vmul.f32 %v251, %v276
      %v291 = vmul.f32 %v252, %v276
      %v292 = vmul.f32 %v253, %v276
      %v293 = vmul.f32 %v254, %v276
      %v294 = vmul.f32 %v255, %v276
      %v295 = vmul.f32 %v256, %v276
      %v296 = vmul.f32 %v257, %v276
      %v297 = vmul.f32 %v258, %v276
      %v298 = vmul.f32 %v259, %v276
      %v299 = vmul.f32 %v260, %v276
      %v300 = vmul.f32 %v261, %v276
      %v301 = vmul.f32 %v262, %v276
      %v302 = vmul.f32 %v263, %v276
      %v303 = vmul.f32 %v264, %v276
      %v304 = vmul.f32 %v265, %v276
      %v305 = vmul.f32 %v266, %v276
      %v306 = vmul.f32 %v267, %v276
      %v307 = vmul.f32 %v268, %v276
      %v308 = vmul.f32 %v269, %v276
      %v309 = vmul.f32 %v270, %v276
      %v310 = vld [vmem:[%s2] sm:$0x1]
      %v312 = vlaneseq
      %v313 = vshrl.u32 %v312, 7
      %v314 = vsub.s32 0, %v313
      %v315 = vrot.slane %v310, %v314
      %v317 = vadd.f32 %v278, %v315
      %v318 = vadd.f32 %v279, %v315
      %v319 = vadd.f32 %v280, %v315
      %v320 = vadd.f32 %v281, %v315
      %v321 = vadd.f32 %v282, %v315
      %v322 = vadd.f32 %v283, %v315
      %v323 = vadd.f32 %v284, %v315
      %v324 = vadd.f32 %v285, %v315
      %v325 = vadd.f32 %v286, %v315
      %v326 = vadd.f32 %v287, %v315
      %v327 = vadd.f32 %v288, %v315
      %v328 = vadd.f32 %v289, %v315
      %v329 = vadd.f32 %v290, %v315
      %v330 = vadd.f32 %v291, %v315
      %v331 = vadd.f32 %v292, %v315
      %v332 = vadd.f32 %v293, %v315
      %v333 = vadd.f32 %v294, %v315
      %v334 = vadd.f32 %v295, %v315
      %v335 = vadd.f32 %v296, %v315
      %v336 = vadd.f32 %v297, %v315
      %v337 = vadd.f32 %v298, %v315
      %v338 = vadd.f32 %v299, %v315
      %v339 = vadd.f32 %v300, %v315
      %v340 = vadd.f32 %v301, %v315
      %v341 = vadd.f32 %v302, %v315
      %v342 = vadd.f32 %v303, %v315
      %v343 = vadd.f32 %v304, %v315
      %v344 = vadd.f32 %v305, %v315
      %v345 = vadd.f32 %v306, %v315
      %v346 = vadd.f32 %v307, %v315
      %v347 = vadd.f32 %v308, %v315
      %v348 = vadd.f32 %v309, %v315
      %v349 = vmax.f32 %v317, 0.0
      %v350 = vmax.f32 %v318, 0.0
      %v351 = vmax.f32 %v319, 0.0
      %v352 = vmax.f32 %v320, 0.0
      %v353 = vmax.f32 %v321, 0.0
      %v354 = vmax.f32 %v322, 0.0
      %v355 = vmax.f32 %v323, 0.0
      %v356 = vmax.f32 %v324, 0.0
      %v357 = vmax.f32 %v325, 0.0
      %v358 = vmax.f32 %v326, 0.0
      %v359 = vmax.f32 %v327, 0.0
      %v360 = vmax.f32 %v328, 0.0
      %v361 = vmax.f32 %v329, 0.0
      %v362 = vmax.f32 %v330, 0.0
      %v363 = vmax.f32 %v331, 0.0
      %v364 = vmax.f32 %v332, 0.0
      %v365 = vmax.f32 %v333, 0.0
      %v366 = vmax.f32 %v334, 0.0
      %v367 = vmax.f32 %v335, 0.0
      %v368 = vmax.f32 %v336, 0.0
      %v369 = vmax.f32 %v337, 0.0
      %v370 = vmax.f32 %v338, 0.0
      %v371 = vmax.f32 %v339, 0.0
      %v372 = vmax.f32 %v340, 0.0
      %v373 = vmax.f32 %v341, 0.0
      %v374 = vmax.f32 %v342, 0.0
      %v375 = vmax.f32 %v343, 0.0
      %v376 = vmax.f32 %v344, 0.0
      %v377 = vmax.f32 %v345, 0.0
      %v378 = vmax.f32 %v346, 0.0
      %v379 = vmax.f32 %v347, 0.0
      %v380 = vmax.f32 %v348, 0.0
      %v381 = vld [vmem:[%s3] sm:$0xff]
      %v382 = vld [vmem:[%s3 + $0x8] sm:$0xff]
      %v383 = vld [vmem:[%s3 + $0x10] sm:$0xff]
      %v384 = vld [vmem:[%s3 + $0x18] sm:$0xff]
      %v385 = vld [vmem:[%s3 + $0x20] sm:$0xff]
      %v386 = vld [vmem:[%s3 + $0x28] sm:$0xff]
      %v387 = vld [vmem:[%s3 + $0x30] sm:$0xff]
      %v388 = vld [vmem:[%s3 + $0x38] sm:$0xff]
      %v389 = vld [vmem:[%s3 + $0x40] sm:$0xff]
      %v390 = vld [vmem:[%s3 + $0x48] sm:$0xff]
      %v391 = vld [vmem:[%s3 + $0x50] sm:$0xff]
      %v392 = vld [vmem:[%s3 + $0x58] sm:$0xff]
      %v393 = vld [vmem:[%s3 + $0x60] sm:$0xff]
      %v394 = vld [vmem:[%s3 + $0x68] sm:$0xff]
      %v395 = vld [vmem:[%s3 + $0x70] sm:$0xff]
      %v396 = vld [vmem:[%s3 + $0x78] sm:$0xff]
      %397 = vmatprep.subr.mxu0 0.0
      %398 = vmatpush1.msra.mxu0 %v381
      %399 = vmatprep.subr.mxu0 0.0
      %400 = vmatpush1.msra.mxu0 %v382
      %401 = vmatprep.subr.mxu0 0.0
      %402 = vmatpush1.msra.mxu0 %v383
      %403 = vmatprep.subr.mxu0 0.0
      %404 = vmatpush1.msra.mxu0 %v384
      %405 = vmatprep.subr.mxu0 0.0
      %406 = vmatpush1.msra.mxu0 %v385
      %407 = vmatprep.subr.mxu0 0.0
      %408 = vmatpush1.msra.mxu0 %v386
      %409 = vmatprep.subr.mxu0 0.0
      %410 = vmatpush1.msra.mxu0 %v387
      %411 = vmatprep.subr.mxu0 0.0
      %412 = vmatpush1.msra.mxu0 %v388
      %413 = vmatprep.subr.mxu0 0.0
      %414 = vmatpush1.msra.mxu0 %v389
      %415 = vmatprep.subr.mxu0 0.0
      %416 = vmatpush1.msra.mxu0 %v390
      %417 = vmatprep.subr.mxu0 0.0
      %418 = vmatpush1.msra.mxu0 %v391
      %419 = vmatprep.subr.mxu0 0.0
      %420 = vmatpush1.msra.mxu0 %v392
      %421 = vmatprep.subr.mxu0 0.0
      %422 = vmatpush1.msra.mxu0 %v393
      %423 = vmatprep.subr.mxu0 0.0
      %424 = vmatpush1.msra.mxu0 %v394
      %425 = vmatprep.subr.mxu0 0.0
      %426 = vmatpush1.msra.mxu0 %v395
      %427 = vmatprep.subr.mxu0 0.0
      %428 = vmatpush1.msra.mxu0 %v396
      %429 = vmatprep.subr.mxu0 0.0
      %430 = vmatpush1.msra.mxu0 0.0
      %431 = vmatprep.subr.mxu0 0.0
      %432 = vmatpush1.msra.mxu0 0.0
      %433 = vmatprep.subr.mxu0 0.0
      %434 = vmatpush1.msra.mxu0 0.0
      %435 = vmatprep.subr.mxu0 0.0
      %436 = vmatpush1.msra.mxu0 0.0
      %437 = vmatprep.subr.mxu0 0.0
      %438 = vmatpush1.msra.mxu0 0.0
      %439 = vmatprep.subr.mxu0 0.0
      %440 = vmatpush1.msra.mxu0 0.0
      %441 = vmatprep.subr.mxu0 0.0
      %442 = vmatpush1.msra.mxu0 0.0
      %443 = vmatprep.subr.mxu0 0.0
      %444 = vmatpush1.msra.mxu0 0.0
      %445 = vmatprep.subr.mxu0 0.0
      %446 = vmatpush1.msra.mxu0 0.0
      %447 = vmatprep.subr.mxu0 0.0
      %448 = vmatpush1.msra.mxu0 0.0
      %449 = vmatprep.subr.mxu0 0.0
      %450 = vmatpush1.msra.mxu0 0.0
      %451 = vmatprep.subr.mxu0 0.0
      %452 = vmatpush1.msra.mxu0 0.0
      %453 = vmatprep.subr.mxu0 0.0
      %454 = vmatpush1.msra.mxu0 0.0
      %455 = vmatprep.subr.mxu0 0.0
      %456 = vmatpush1.msra.mxu0 0.0
      %457 = vmatprep.subr.mxu0 0.0
      %458 = vmatpush1.msra.mxu0 0.0
      %459 = vmatprep.subr.mxu0 0.0
      %460 = vmatpush1.msra.mxu0 0.0
      %461 = vmatprep.mubr.f32.mxu0 0.0
      %462 = vmatmul.mubr.f32.gmra.mrb[0].mxu0 %v349
      %v463 = vpop.f32.mrb[0].mxu0
      %v464 = vadd.f32 0.0, %v463
      %v465 = vpop.f32.mrb[0].mxu0
      %466 = vmatprep.mubr.f32.mxu0 0.0
      %467 = vmatmul.mubr.f32.gmra.mrb[0].mxu0 %v350
      %v468 = vpop.f32.mrb[0].mxu0
      %v469 = vadd.f32 0.0, %v468
      %v470 = vpop.f32.mrb[0].mxu0
      %471 = vmatprep.mubr.f32.mxu0 0.0
      %472 = vmatmul.mubr.f32.gmra.mrb[0].mxu0 %v351
      %v473 = vpop.f32.mrb[0].mxu0
      %v474 = vadd.f32 0.0, %v473
      %v475 = vpop.f32.mrb[0].mxu0
      %476 = vmatprep.mubr.f32.mxu0 0.0
      %477 = vmatmul.mubr.f32.gmra.mrb[0].mxu0 %v352
      %v478 = vpop.f32.mrb[0].mxu0
      %v479 = vadd.f32 0.0, %v478
      %v480 = vpop.f32.mrb[0].mxu0
      %481 = vmatprep.mubr.f32.mxu0 0.0
      %482 = vmatmul.mubr.f32.gmra.mrb[0].mxu0 %v353
      %v483 = vpop.f32.mrb[0].mxu0
      %v484 = vadd.f32 0.0, %v483
      %v485 = vpop.f32.mrb[0].mxu0
      %486 = vmatprep.mubr.f32.mxu0 0.0
      %487 = vmatmul.mubr.f32.gmra.mrb[0].mxu0 %v354
      %v488 = vpop.f32.mrb[0].mxu0
      %v489 = vadd.f32 0.0, %v488
      %v490 = vpop.f32.mrb[0].mxu0
      %491 = vmatprep.mubr.f32.mxu0 0.0
      %492 = vmatmul.mubr.f32.gmra.mrb[0].mxu0 %v355
      %v493 = vpop.f32.mrb[0].mxu0
      %v494 = vadd.f32 0.0, %v493
      %v495 = vpop.f32.mrb[0].mxu0
      %496 = vmatprep.mubr.f32.mxu0 0.0
      %497 = vmatmul.mubr.f32.gmra.mrb[0].mxu0 %v356
      %v498 = vpop.f32.mrb[0].mxu0
      %v499 = vadd.f32 0.0, %v498
      %v500 = vpop.f32.mrb[0].mxu0
      %501 = vmatprep.mubr.f32.mxu0 0.0
      %502 = vmatmul.mubr.f32.gmra.mrb[0].mxu0 %v357
      %v503 = vpop.f32.mrb[0].mxu0
      %v504 = vadd.f32 0.0, %v503
      %v505 = vpop.f32.mrb[0].mxu0
      %506 = vmatprep.mubr.f32.mxu0 0.0
      %507 = vmatmul.mubr.f32.gmra.mrb[0].mxu0 %v358
      %v508 = vpop.f32.mrb[0].mxu0
      %v509 = vadd.f32 0.0, %v508
      %v510 = vpop.f32.mrb[0].mxu0
      %511 = vmatprep.mubr.f32.mxu0 0.0
      %512 = vmatmul.mubr.f32.gmra.mrb[0].mxu0 %v359
      %v513 = vpop.f32.mrb[0].mxu0
      %v514 = vadd.f32 0.0, %v513
      %v515 = vpop.f32.mrb[0].mxu0
      %516 = vmatprep.mubr.f32.mxu0 0.0
      %517 = vmatmul.mubr.f32.gmra.mrb[0].mxu0 %v360
      %v518 = vpop.f32.mrb[0].mxu0
      %v519 = vadd.f32 0.0, %v518
      %v520 = vpop.f32.mrb[0].mxu0
      %521 = vmatprep.mubr.f32.mxu0 0.0
      %522 = vmatmul.mubr.f32.gmra.mrb[0].mxu0 %v361
      %v523 = vpop.f32.mrb[0].mxu0
      %v524 = vadd.f32 0.0, %v523
      %v525 = vpop.f32.mrb[0].mxu0
      %526 = vmatprep.mubr.f32.mxu0 0.0
      %527 = vmatmul.mubr.f32.gmra.mrb[0].mxu0 %v362
      %v528 = vpop.f32.mrb[0].mxu0
      %v529 = vadd.f32 0.0, %v528
      %v530 = vpop.f32.mrb[0].mxu0
      %531 = vmatprep.mubr.f32.mxu0 0.0
      %532 = vmatmul.mubr.f32.gmra.mrb[0].mxu0 %v363
      %v533 = vpop.f32.mrb[0].mxu0
      %v534 = vadd.f32 0.0, %v533
      %v535 = vpop.f32.mrb[0].mxu0
      %536 = vmatprep.mubr.f32.mxu0 0.0
      %537 = vmatmul.mubr.f32.gmra.mrb[0].mxu0 %v364
      %v538 = vpop.f32.mrb[0].mxu0
      %v539 = vadd.f32 0.0, %v538
      %v540 = vpop.f32.mrb[0].mxu0
      %541 = vmatprep.mubr.f32.mxu0 0.0
      %542 = vmatmul.mubr.f32.gmra.mrb[0].mxu0 %v365
      %v543 = vpop.f32.mrb[0].mxu0
      %v544 = vadd.f32 0.0, %v543
      %v545 = vpop.f32.mrb[0].mxu0
      %546 = vmatprep.mubr.f32.mxu0 0.0
      %547 = vmatmul.mubr.f32.gmra.mrb[0].mxu0 %v366
      %v548 = vpop.f32.mrb[0].mxu0
      %v549 = vadd.f32 0.0, %v548
      %v550 = vpop.f32.mrb[0].mxu0
      %551 = vmatprep.mubr.f32.mxu0 0.0
      %552 = vmatmul.mubr.f32.gmra.mrb[0].mxu0 %v367
      %v553 = vpop.f32.mrb[0].mxu0
      %v554 = vadd.f32 0.0, %v553
      %v555 = vpop.f32.mrb[0].mxu0
      %556 = vmatprep.mubr.f32.mxu0 0.0
      %557 = vmatmul.mubr.f32.gmra.mrb[0].mxu0 %v368
      %v558 = vpop.f32.mrb[0].mxu0
      %v559 = vadd.f32 0.0, %v558
      %v560 = vpop.f32.mrb[0].mxu0
      %561 = vmatprep.mubr.f32.mxu0 0.0
      %562 = vmatmul.mubr.f32.gmra.mrb[0].mxu0 %v369
      %v563 = vpop.f32.mrb[0].mxu0
      %v564 = vadd.f32 0.0, %v563
      %v565 = vpop.f32.mrb[0].mxu0
      %566 = vmatprep.mubr.f32.mxu0 0.0
      %567 = vmatmul.mubr.f32.gmra.mrb[0].mxu0 %v370
      %v568 = vpop.f32.mrb[0].mxu0
      %v569 = vadd.f32 0.0, %v568
      %v570 = vpop.f32.mrb[0].mxu0
      %571 = vmatprep.mubr.f32.mxu0 0.0
      %572 = vmatmul.mubr.f32.gmra.mrb[0].mxu0 %v371
      %v573 = vpop.f32.mrb[0].mxu0
      %v574 = vadd.f32 0.0, %v573
      %v575 = vpop.f32.mrb[0].mxu0
      %576 = vmatprep.mubr.f32.mxu0 0.0
      %577 = vmatmul.mubr.f32.gmra.mrb[0].mxu0 %v372
      %v578 = vpop.f32.mrb[0].mxu0
      %v579 = vadd.f32 0.0, %v578
      %v580 = vpop.f32.mrb[0].mxu0
      %581 = vmatprep.mubr.f32.mxu0 0.0
      %582 = vmatmul.mubr.f32.gmra.mrb[0].mxu0 %v373
      %v583 = vpop.f32.mrb[0].mxu0
      %v584 = vadd.f32 0.0, %v583
      %v585 = vpop.f32.mrb[0].mxu0
      %586 = vmatprep.mubr.f32.mxu0 0.0
      %587 = vmatmul.mubr.f32.gmra.mrb[0].mxu0 %v374
      %v588 = vpop.f32.mrb[0].mxu0
      %v589 = vadd.f32 0.0, %v588
      %v590 = vpop.f32.mrb[0].mxu0
      %591 = vmatprep.mubr.f32.mxu0 0.0
      %592 = vmatmul.mubr.f32.gmra.mrb[0].mxu0 %v375
      %v593 = vpop.f32.mrb[0].mxu0
      %v594 = vadd.f32 0.0, %v593
      %v595 = vpop.f32.mrb[0].mxu0
      %596 = vmatprep.mubr.f32.mxu0 0.0
      %597 = vmatmul.mubr.f32.gmra.mrb[0].mxu0 %v376
      %v598 = vpop.f32.mrb[0].mxu0
      %v599 = vadd.f32 0.0, %v598
      %v600 = vpop.f32.mrb[0].mxu0
      %601 = vmatprep.mubr.f32.mxu0 0.0
      %602 = vmatmul.mubr.f32.gmra.mrb[0].mxu0 %v377
      %v603 = vpop.f32.mrb[0].mxu0
      %v604 = vadd.f32 0.0, %v603
      %v605 = vpop.f32.mrb[0].mxu0
      %606 = vmatprep.mubr.f32.mxu0 0.0
      %607 = vmatmul.mubr.f32.gmra.mrb[0].mxu0 %v378
      %v608 = vpop.f32.mrb[0].mxu0
      %v609 = vadd.f32 0.0, %v608
      %v610 = vpop.f32.mrb[0].mxu0
      %611 = vmatprep.mubr.f32.mxu0 0.0
      %612 = vmatmul.mubr.f32.gmra.mrb[0].mxu0 %v379
      %v613 = vpop.f32.mrb[0].mxu0
      %v614 = vadd.f32 0.0, %v613
      %v615 = vpop.f32.mrb[0].mxu0
      %616 = vmatprep.mubr.f32.mxu0 0.0
      %617 = vmatmul.mubr.f32.gmra.mrb[0].mxu0 %v380
      %v618 = vpop.f32.mrb[0].mxu0
      %v619 = vadd.f32 0.0, %v618
      %v620 = vpop.f32.mrb[0].mxu0
      %621 = vdwg.mxu0
      %622 = vst [vmem:[%s233] sm:$0xff] %v464
      %623 = vst [vmem:[%s233 + $0x8] sm:$0xff] %v469
      %624 = vst [vmem:[%s233 + $0x10] sm:$0xff] %v474
      %625 = vst [vmem:[%s233 + $0x18] sm:$0xff] %v479
      %626 = vst [vmem:[%s233 + $0x20] sm:$0xff] %v484
      %627 = vst [vmem:[%s233 + $0x28] sm:$0xff] %v489
      %628 = vst [vmem:[%s233 + $0x30] sm:$0xff] %v494
      %629 = vst [vmem:[%s233 + $0x38] sm:$0xff] %v499
      %630 = vst [vmem:[%s233 + $0x40] sm:$0xff] %v504
      %631 = vst [vmem:[%s233 + $0x48] sm:$0xff] %v509
      %632 = vst [vmem:[%s233 + $0x50] sm:$0xff] %v514
      %633 = vst [vmem:[%s233 + $0x58] sm:$0xff] %v519
      %634 = vst [vmem:[%s233 + $0x60] sm:$0xff] %v524
      %635 = vst [vmem:[%s233 + $0x68] sm:$0xff] %v529
      %636 = vst [vmem:[%s233 + $0x70] sm:$0xff] %v534
      %637 = vst [vmem:[%s233 + $0x78] sm:$0xff] %v539
      %638 = vst [vmem:[%s233 + $0x80] sm:$0xff] %v544
      %639 = vst [vmem:[%s233 + $0x88] sm:$0xff] %v549
      %640 = vst [vmem:[%s233 + $0x90] sm:$0xff] %v554
      %641 = vst [vmem:[%s233 + $0x98] sm:$0xff] %v559
      %642 = vst [vmem:[%s233 + $0xa0] sm:$0xff] %v564
      %643 = vst [vmem:[%s233 + $0xa8] sm:$0xff] %v569
      %644 = vst [vmem:[%s233 + $0xb0] sm:$0xff] %v574
      %645 = vst [vmem:[%s233 + $0xb8] sm:$0xff] %v579
      %646 = vst [vmem:[%s233 + $0xc0] sm:$0xff] %v584
      %647 = vst [vmem:[%s233 + $0xc8] sm:$0xff] %v589
      %648 = vst [vmem:[%s233 + $0xd0] sm:$0xff] %v594
      %649 = vst [vmem:[%s233 + $0xd8] sm:$0xff] %v599
      %650 = vst [vmem:[%s233 + $0xe0] sm:$0xff] %v604
      %651 = vst [vmem:[%s233 + $0xe8] sm:$0xff] %v609
      %652 = vst [vmem:[%s233 + $0xf0] sm:$0xff] %v614
      %653 = vst [vmem:[%s233 + $0xf8] sm:$0xff] %v619
      %v654 = vadd.f32 %v464, %v469
      %v655 = vadd.f32 %v654, %v474
      %v656 = vadd.f32 %v655, %v479
      %v657 = vadd.f32 %v656, %v484
      %v658 = vadd.f32 %v657, %v489
      %v659 = vadd.f32 %v658, %v494
      %v660 = vadd.f32 %v659, %v499
      %v661 = vadd.f32 %v660, %v504
      %v662 = vadd.f32 %v661, %v509
      %v663 = vadd.f32 %v662, %v514
      %v664 = vadd.f32 %v663, %v519
      %v665 = vadd.f32 %v664, %v524
      %v666 = vadd.f32 %v665, %v529
      %v667 = vadd.f32 %v666, %v534
      %v668 = vadd.f32 %v667, %v539
      %v669 = vadd.f32 %v668, %v544
      %v670 = vadd.f32 %v669, %v549
      %v671 = vadd.f32 %v670, %v554
      %v672 = vadd.f32 %v671, %v559
      %v673 = vadd.f32 %v672, %v564
      %v674 = vadd.f32 %v673, %v569
      %v675 = vadd.f32 %v674, %v574
      %v676 = vadd.f32 %v675, %v579
      %v677 = vadd.f32 %v676, %v584
      %v678 = vadd.f32 %v677, %v589
      %v679 = vadd.f32 %v678, %v594
      %v680 = vadd.f32 %v679, %v599
      %v681 = vadd.f32 %v680, %v604
      %v682 = vadd.f32 %v681, %v609
      %v683 = vadd.f32 %v682, %v614
      %v684 = vadd.f32 %v683, %v619
      %v685 = vrot.slane %v684, 4
      %v686 = vadd.f32 %v684, %v685
      %v687 = vrot.slane %v686, 2
      %v688 = vadd.f32 %v686, %v687
      %v689 = vrot.slane %v688, 1
      %v690 = vadd.f32 %v688, %v689
      %691 = vst [vmem:[%s238] sm:$0x1] %v690
      %v692 = vmul.f32 %v464, %v464
      %v693 = vmul.f32 %v469, %v469
      %v694 = vmul.f32 %v474, %v474
      %v695 = vmul.f32 %v479, %v479
      %v696 = vmul.f32 %v484, %v484
      %v697 = vmul.f32 %v489, %v489
      %v698 = vmul.f32 %v494, %v494
      %v699 = vmul.f32 %v499, %v499
      %v700 = vmul.f32 %v504, %v504
      %v701 = vmul.f32 %v509, %v509
      %v702 = vmul.f32 %v514, %v514
      %v703 = vmul.f32 %v519, %v519
      %v704 = vmul.f32 %v524, %v524
      %v705 = vmul.f32 %v529, %v529
      %v706 = vmul.f32 %v534, %v534
      %v707 = vmul.f32 %v539, %v539
      %v708 = vmul.f32 %v544, %v544
      %v709 = vmul.f32 %v549, %v549
      %v710 = vmul.f32 %v554, %v554
      %v711 = vmul.f32 %v559, %v559
      %v712 = vmul.f32 %v564, %v564
      %v713 = vmul.f32 %v569, %v569
      %v714 = vmul.f32 %v574, %v574
      %v715 = vmul.f32 %v579, %v579
      %v716 = vmul.f32 %v584, %v584
      %v717 = vmul.f32 %v589, %v589
      %v718 = vmul.f32 %v594, %v594
      %v719 = vmul.f32 %v599, %v599
      %v720 = vmul.f32 %v604, %v604
      %v721 = vmul.f32 %v609, %v609
      %v722 = vmul.f32 %v614, %v614
      %v723 = vmul.f32 %v619, %v619
      %v724 = vadd.f32 %v692, %v693
      %v725 = vadd.f32 %v724, %v694
      %v726 = vadd.f32 %v725, %v695
      %v727 = vadd.f32 %v726, %v696
      %v728 = vadd.f32 %v727, %v697
      %v729 = vadd.f32 %v728, %v698
      %v730 = vadd.f32 %v729, %v699
      %v731 = vadd.f32 %v730, %v700
      %v732 = vadd.f32 %v731, %v701
      %v733 = vadd.f32 %v732, %v702
      %v734 = vadd.f32 %v733, %v703
      %v735 = vadd.f32 %v734, %v704
      %v736 = vadd.f32 %v735, %v705
      %v737 = vadd.f32 %v736, %v706
      %v738 = vadd.f32 %v737, %v707
      %v739 = vadd.f32 %v738, %v708
      %v740 = vadd.f32 %v739, %v709
      %v741 = vadd.f32 %v740, %v710
      %v742 = vadd.f32 %v741, %v711
      %v743 = vadd.f32 %v742, %v712
      %v744 = vadd.f32 %v743, %v713
      %v745 = vadd.f32 %v744, %v714
      %v746 = vadd.f32 %v745, %v715
      %v747 = vadd.f32 %v746, %v716
      %v748 = vadd.f32 %v747, %v717
      %v749 = vadd.f32 %v748, %v718
      %v750 = vadd.f32 %v749, %v719
      %v751 = vadd.f32 %v750, %v720
      %v752 = vadd.f32 %v751, %v721
      %v753 = vadd.f32 %v752, %v722
      %v754 = vadd.f32 %v753, %v723
      %v755 = vrot.slane %v754, 4
      %v756 = vadd.f32 %v754, %v755
      %v757 = vrot.slane %v756, 2
      %v758 = vadd.f32 %v756, %v757
      %v759 = vrot.slane %v758, 1
      %v760 = vadd.f32 %v758, %v759
      %761 = vst [vmem:[%s238 + $0x1] sm:$0x1] %v760
      %s762 = smul.u32 32, %s17
      %p763 = scmp.lt.s32.totalorder %s762, 63
      %s764 = scalar_select %p763, %s762, 63
      %s765 = smul.addr %s764, 8
      %s766 = scalar_lea.vmem %s4, %s765
      %p767 = scmp.lt.s32.totalorder %s17, 1
      %s768 = scalar_select %p767, %s17, 1
      %s769 = smul.addr %s768, 2
      %s770 = scalar_lea.vmem %s5, %s769
      // Predicated region
      $region37: #{bottleneck_forward.6} parent=35 // pred_check
        %p771 = pneg %p124
      $region38: #{bottleneck_forward.6} parent=35 // pred_check_branch
        %773 = sbr.rel (%p771) target = $region40
      $region39: #{bottleneck_forward.6} parent=35 // pred_region
        %s774 = smul.u32 32, %s17
      $region40: #{bottleneck_forward.6} parent=35 // pred_fallthru
        _
      // Predicated region
      $region41: #{bottleneck_forward.6} parent=35 // pred_check
        %p775 = pneg %p150
      $region42: #{bottleneck_forward.6} parent=35 // pred_check_branch
        %777 = sbr.rel (%p775) target = $region44
      $region43: #{bottleneck_forward.6} parent=35 // pred_region
        _
      $region44: #{bottleneck_forward.6} parent=35 // pred_fallthru
        _
    $region36: #{bottleneck_forward.6} parent=5 // pred_fallthru
      _
    %p778 = scmp.le.s32.totalorder 2, %s12
    // Predicated region
    $region45: #{bottleneck_forward.6} parent=5 // pred_check
      %p779 = pneg %p778
    $region46: #{bottleneck_forward.6} parent=5 // pred_check_branch
      %781 = sbr.rel (%p779) target = $region48
    $region47: #{bottleneck_forward.6} parent=5 // pred_region
      %s782 = ssub.s32 %s12, 2
      // Predicated region
      $region49: #{bottleneck_forward.6} parent=47 // pred_check
        %p783 = pneg %p130
      $region50: #{bottleneck_forward.6} parent=47 // pred_check_branch
        %785 = sbr.rel (%p783) target = $region52
      $region51: #{bottleneck_forward.6} parent=47 // pred_region
        %s786 = smul.u32 32, %s18
        %p787 = scmp.lt.s32.totalorder %s786, 63
        %s788 = scalar_select %p787, %s786, 63
        %s789 = smul.addr %s788, 8
        %s790 = scalar_lea.vmem %s4, %s789
      $region52: #{bottleneck_forward.6} parent=47 // pred_fallthru
        _
      // Predicated region
      $region53: #{bottleneck_forward.6} parent=47 // pred_check
        %p791 = pneg %p156
      $region54: #{bottleneck_forward.6} parent=47 // pred_check_branch
        %793 = sbr.rel (%p791) target = $region56
      $region55: #{bottleneck_forward.6} parent=47 // pred_region
        %p794 = scmp.lt.s32.totalorder %s18, 1
        %s795 = scalar_select %p794, %s18, 1
        %s796 = smul.addr %s795, 2
        %s797 = scalar_lea.vmem %s5, %s796
      $region56: #{bottleneck_forward.6} parent=47 // pred_fallthru
        _
    $region48: #{bottleneck_forward.6} parent=5 // pred_fallthru
      _
  $region6: #{bottleneck_forward.6} parent=0 // loop_footer
    %s16 = sadd.s32 1, %s12
  $region7: #{bottleneck_forward.6} parent=0 // loop_footer_branch
    %11 = sbr.rel target = $region3
  $region8: #{bottleneck_forward.6} parent=0 // loop_exit
    _

// kernel: bottleneck_forward.5
$region0: #{bottleneck_forward.5}
  #allocation0 [shape = 'u32[]', space=smem, size = 0x4, offset = 0x4, fixed_abs, tag = 'smem constant byte address 0x4 - core index']
  #allocation1 [shape = 'u32[144,128]{1,0:T(1,128)}', space=vmem, size = 0x12000, scoped, tag = 'internal scratch']
  #allocation2 [shape = 'f32[1,18,18,128]{3,2,1,0:T(8,128)}', space=vmem, size = 0x36000, scoped, tag = 'scratch operand']
  %s0 = inlined_call_operand.vmem [shape: f32[2,16,16,128], index: 0, kind: input, shape index: {}]
  %s1 = inlined_call_operand.vmem [shape: f32[1,128], index: 1, kind: input, shape index: {}]
  %s2 = inlined_call_operand.vmem [shape: f32[1,128], index: 2, kind: input, shape index: {}]
  %s3 = inlined_call_operand.vmem [shape: f32[3,384,128], index: 3, kind: input, shape index: {}]
  %s4 = inlined_call_operand.vmem [shape: f32[2,16,16,128], index: 4, kind: output, shape index: {0}]
  %s5 = inlined_call_operand.vmem [shape: f32[2,2,128], index: 5, kind: output, shape index: {1}]
  %6 = xla_tuple %s4, %s5
  %s7 = sld [smem:[#allocation0]]
  $region57: #{bottleneck_forward.5} parent=0
    _
  %s9 = ssub.s32 1, %s7
  %s10 = scalar_select 0, %s9, %s7
  loop: start=0, step=1, limit=4
  $region2: #{bottleneck_forward.5} parent=0 // loop_pre_header
    _
  $region3: #{bottleneck_forward.5} parent=0 // loop_header
    %s12 = sphi 0, %s16
    %p13 = scmp.ge.s32.totalorder %s12, 4
    %s22 = sphi 0, %s24
    %s25 = sphi 0, %s22
    %s26 = sphi 0, %s25
    %s42 = sphi 0, %s26
    %s46 = sphi 0, %s46
    %s48 = sphi 0, %s46
    %s49 = sphi 0, %s48
    %s63 = sphi 0, %s49
    %s67 = sphi 0, %s67
    %s69 = sphi 0, %s67
    %s70 = sphi 0, %s69
    %s84 = sphi 0, %s70
    %s88 = sphi 0, %s88
    %s90 = sphi 0, %s88
    %s91 = sphi 0, %s90
    %s105 = sphi 0, %s91
    %s111 = sphi 0, %s113
    %s114 = sphi 0, %s111
    %s115 = sphi 0, %s114
    %s131 = sphi 0, %s115
    %s137 = sphi 0, %s139
    %s140 = sphi 0, %s137
    %s141 = sphi 0, %s140
    %s157 = sphi 0, %s141
  $region4: #{bottleneck_forward.5} parent=0 // loop_header_branch
    %15 = sbr.rel (%p13) target = $region8
  $region5: #{bottleneck_forward.5} parent=0 // loop_body
    %s17 = ssub.s32 %s12, 1
    %s18 = ssub.s32 %s12, 2
    %s19 = sadd.s32 %s12, 1
    %s20 = ssub.s32 %s12, %s19
    %p21 = scmp.eq.s32.totalorder %s20, 0
    %s23 = sadd.s32 %s22, 1
    %s24 = scalar_select %p21, %s22, %s23
    %p27 = pneg %p21
    %p28 = scmp.eq.s32.totalorder %s12, 1
    %p29 = por %p27, %p28
    %p30 = scmp.ne.s32.totalorder %s22, %s25
    %p31 = scmp.eq.s32.totalorder %s12, 0
    %p32 = por %p30, %p31
    %p33 = scmp.ne.s32.totalorder %s22, %s25
    %p34 = scmp.eq.s32.totalorder %s17, 1
    %p35 = por %p33, %p34
    %p36 = scmp.ne.s32.totalorder %s25, %s26
    %p37 = scmp.eq.s32.totalorder %s17, 0
    %p38 = por %p36, %p37
    %p39 = scmp.ne.s32.totalorder %s25, %s26
    %p40 = scmp.eq.s32.totalorder %s18, 1
    %p41 = por %p39, %p40
    %p43 = scmp.ne.s32.totalorder %s26, %s42
    %p44 = scmp.eq.s32.totalorder %s18, 0
    %p45 = por %p43, %p44
    %s47 = sadd.s32 %s46, 1
    %p50 = scmp.eq.s32.totalorder %s12, 1
    %p51 = scmp.ne.s32.totalorder %s46, %s48
    %p52 = scmp.eq.s32.totalorder %s12, 0
    %p53 = por %p51, %p52
    %p54 = scmp.ne.s32.totalorder %s46, %s48
    %p55 = scmp.eq.s32.totalorder %s17, 1
    %p56 = por %p54, %p55
    %p57 = scmp.ne.s32.totalorder %s48, %s49
    %p58 = scmp.eq.s32.totalorder %s17, 0
    %p59 = por %p57, %p58
    %p60 = scmp.ne.s32.totalorder %s48, %s49
    %p61 = scmp.eq.s32.totalorder %s18, 1
    %p62 = por %p60, %p61
    %p64 = scmp.ne.s32.totalorder %s49, %s63
    %p65 = scmp.eq.s32.totalorder %s18, 0
    %p66 = por %p64, %p65
    %s68 = sadd.s32 %s67, 1
    %p71 = scmp.eq.s32.totalorder %s12, 1
    %p72 = scmp.ne.s32.totalorder %s67, %s69
    %p73 = scmp.eq.s32.totalorder %s12, 0
    %p74 = por %p72, %p73
    %p75 = scmp.ne.s32.totalorder %s67, %s69
    %p76 = scmp.eq.s32.totalorder %s17, 1
    %p77 = por %p75, %p76
    %p78 = scmp.ne.s32.totalorder %s69, %s70
    %p79 = scmp.eq.s32.totalorder %s17, 0
    %p80 = por %p78, %p79
    %p81 = scmp.ne.s32.totalorder %s69, %s70
    %p82 = scmp.eq.s32.totalorder %s18, 1
    %p83 = por %p81, %p82
    %p85 = scmp.ne.s32.totalorder %s70, %s84
    %p86 = scmp.eq.s32.totalorder %s18, 0
    %p87 = por %p85, %p86
    %s89 = sadd.s32 %s88, 1
    %p92 = scmp.eq.s32.totalorder %s12, 1
    %p93 = scmp.ne.s32.totalorder %s88, %s90
    %p94 = scmp.eq.s32.totalorder %s12, 0
    %p95 = por %p93, %p94
    %p96 = scmp.ne.s32.totalorder %s88, %s90
    %p97 = scmp.eq.s32.totalorder %s17, 1
    %p98 = por %p96, %p97
    %p99 = scmp.ne.s32.totalorder %s90, %s91
    %p100 = scmp.eq.s32.totalorder %s17, 0
    %p101 = por %p99, %p100
    %p102 = scmp.ne.s32.totalorder %s90, %s91
    %p103 = scmp.eq.s32.totalorder %s18, 1
    %p104 = por %p102, %p103
    %p106 = scmp.ne.s32.totalorder %s91, %s105
    %p107 = scmp.eq.s32.totalorder %s18, 0
    %p108 = por %p106, %p107
    %s109 = ssub.s32 %s12, %s19
    %p110 = scmp.eq.s32.totalorder %s109, 0
    %s112 = sadd.s32 %s111, 1
    %s113 = scalar_select %p110, %s111, %s112
    %p116 = pneg %p110
    %p117 = scmp.eq.s32.totalorder %s12, 1
    %p118 = por %p116, %p117
    %p119 = scmp.ne.s32.totalorder %s111, %s114
    %p120 = scmp.eq.s32.totalorder %s12, 0
    %p121 = por %p119, %p120
    %p122 = scmp.ne.s32.totalorder %s111, %s114
    %p123 = scmp.eq.s32.totalorder %s17, 1
    %p124 = por %p122, %p123
    %p125 = scmp.ne.s32.totalorder %s114, %s115
    %p126 = scmp.eq.s32.totalorder %s17, 0
    %p127 = por %p125, %p126
    %p128 = scmp.ne.s32.totalorder %s114, %s115
    %p129 = scmp.eq.s32.totalorder %s18, 1
    %p130 = por %p128, %p129
    %p132 = scmp.ne.s32.totalorder %s115, %s131
    %p133 = scmp.eq.s32.totalorder %s18, 0
    %p134 = por %p132, %p133
    %s135 = ssub.s32 %s12, %s19
    %p136 = scmp.eq.s32.totalorder %s135, 0
    %s138 = sadd.s32 %s137, 1
    %s139 = scalar_select %p136, %s137, %s138
    %p142 = pneg %p136
    %p143 = scmp.eq.s32.totalorder %s12, 1
    %p144 = por %p142, %p143
    %p145 = scmp.ne.s32.totalorder %s137, %s140
    %p146 = scmp.eq.s32.totalorder %s12, 0
    %p147 = por %p145, %p146
    %p148 = scmp.ne.s32.totalorder %s137, %s140
    %p149 = scmp.eq.s32.totalorder %s17, 1
    %p150 = por %p148, %p149
    %p151 = scmp.ne.s32.totalorder %s140, %s141
    %p152 = scmp.eq.s32.totalorder %s17, 0
    %p153 = por %p151, %p152
    %p154 = scmp.ne.s32.totalorder %s140, %s141
    %p155 = scmp.eq.s32.totalorder %s18, 1
    %p156 = por %p154, %p155
    %p158 = scmp.ne.s32.totalorder %s141, %s157
    %p159 = scmp.eq.s32.totalorder %s18, 0
    %p160 = por %p158, %p159
    %p161 = scmp.le.s32.totalorder 1, %s12
    %p162 = scmp.lt.s32.totalorder %s12, 3
    %p163 = pnand %p161, %p162
    %p164 = pneg %p163
    // Predicated region
    $region9: #{bottleneck_forward.5} parent=5 // pred_check
      _
    $region10: #{bottleneck_forward.5} parent=5 // pred_check_branch
      %166 = sbr.rel (%p163) target = $region12
    $region11: #{bottleneck_forward.5} parent=5 // pred_region
      %s167 = ssub.s32 %s12, 1
      // Predicated region
      $region13: #{bottleneck_forward.5} parent=11 // pred_check
        %p168 = pneg %p59
      $region14: #{bottleneck_forward.5} parent=11 // pred_check_branch
        %170 = sbr.rel (%p168) target = $region16
      $region15: #{bottleneck_forward.5} parent=11 // pred_region
        _
      $region16: #{bottleneck_forward.5} parent=11 // pred_fallthru
        _
      // Predicated region
      $region17: #{bottleneck_forward.5} parent=11 // pred_check
        %p171 = pneg %p80
      $region18: #{bottleneck_forward.5} parent=11 // pred_check_branch
        %173 = sbr.rel (%p171) target = $region20
      $region19: #{bottleneck_forward.5} parent=11 // pred_region
        _
      $region20: #{bottleneck_forward.5} parent=11 // pred_fallthru
        _
      // Predicated region
      $region21: #{bottleneck_forward.5} parent=11 // pred_check
        %p174 = pneg %p101
      $region22: #{bottleneck_forward.5} parent=11 // pred_check_branch
        %176 = sbr.rel (%p174) target = $region24
      $region23: #{bottleneck_forward.5} parent=11 // pred_region
        _
      $region24: #{bottleneck_forward.5} parent=11 // pred_fallthru
        _
    $region12: #{bottleneck_forward.5} parent=5 // pred_fallthru
      _
    %p177 = scmp.lt.s32.totalorder %s12, 2
    // Predicated region
    $region25: #{bottleneck_forward.5} parent=5 // pred_check
      %p178 = pneg %p177
    $region26: #{bottleneck_forward.5} parent=5 // pred_check_branch
      %180 = sbr.rel (%p178) target = $region28
    $region27: #{bottleneck_forward.5} parent=5 // pred_region
      // Predicated region
      $region29: #{bottleneck_forward.5} parent=27 // pred_check
        %p181 = pneg %p32
      $region30: #{bottleneck_forward.5} parent=27 // pred_check_branch
        %183 = sbr.rel (%p181) target = $region32
      $region31: #{bottleneck_forward.5} parent=27 // pred_region
        %p184 = scmp.lt.s32.totalorder %s12, 1
        %s185 = scalar_select %p184, %s12, 1
        %s186 = smul.addr %s185, 32
        %s187 = smul.addr %s186, 8
        %s188 = scalar_lea.vmem %s0, %s187
      $region32: #{bottleneck_forward.5} parent=27 // pred_fallthru
        _
    $region28: #{bottleneck_forward.5} parent=5 // pred_fallthru
      _
    %p189 = scmp.le.s32.totalorder 1, %s12
    %p190 = scmp.lt.s32.totalorder %s12, 3
    %p191 = pnand %p189, %p190
    %p192 = pneg %p191
    // Predicated region
    $region33: #{bottleneck_forward.5} parent=5 // pred_check
      _
    $region34: #{bottleneck_forward.5} parent=5 // pred_check_branch
      %194 = sbr.rel (%p191) target = $region36
    $region35: #{bottleneck_forward.5} parent=5 // pred_region
      %s195 = ssub.s32 %s12, 1
      %p196 = scmp.lt.s32.totalorder %s17, 1
      %s197 = scalar_select %p196, %s17, 1
      %s198 = smul.addr %s197, 32
      %s199 = smul.addr %s198, 8
      %s200 = scalar_lea.vmem %s0, %s199
      %p201 = pneg %p38
      %p202 = pneg %p35
      %p203 = pneg %p59
      %p204 = pneg %p56
      %p205 = pneg %p80
      %p206 = pneg %p77
      %p207 = pneg %p101
      %p208 = pneg %p98
      %p209 = pneg %p127
      %p210 = pneg %p124
      %p211 = scmp.lt.s32.totalorder %s17, 1
      %s212 = scalar_select %p211, %s17, 1
      %s213 = smul.addr %s212, 32
      %s214 = smul.addr %s213, 8
      %s215 = scalar_lea.vmem %s4, %s214
      %p216 = pneg %p153
      %p217 = pneg %p150
      %p218 = scmp.lt.s32.totalorder %s17, 1
      %s219 = scalar_select %p218, %s17, 1
      %s220 = smul.addr %s219, 2
      %s221 = scalar_lea.vmem %s5, %s220
      %p222 = scmp.lt.s32.totalorder %s17, 1
      %s223 = scalar_select %p222, %s17, 1
      %s224 = smul.addr %s223, 32
      %s225 = smul.addr %s224, 8
      %s226 = scalar_lea.vmem %s0, %s225
      %p227 = scmp.lt.s32.totalorder %s17, 1
      %s228 = scalar_select %p227, %s17, 1
      %s229 = smul.addr %s228, 32
      %s230 = smul.addr %s229, 8
      %s231 = scalar_lea.vmem %s4, %s230
      %p232 = scmp.lt.s32.totalorder %s17, 1
      %s233 = scalar_select %p232, %s17, 1
      %s234 = smul.addr %s233, 2
      %s235 = scalar_lea.vmem %s5, %s234
      %v236 = vld [vmem:[%s1] sm:$0x1]
      %v237 = vld [vmem:[%s2] sm:$0x1]
      %v238 = vld [vmem:[%s226] sm:$0xff]
      %v239 = vld [vmem:[%s226 + $0x8] sm:$0xff]
      %v240 = vld [vmem:[%s226 + $0x10] sm:$0xff]
      %v241 = vld [vmem:[%s226 + $0x18] sm:$0xff]
      %v242 = vld [vmem:[%s226 + $0x20] sm:$0xff]
      %v243 = vld [vmem:[%s226 + $0x28] sm:$0xff]
      %v244 = vld [vmem:[%s226 + $0x30] sm:$0xff]
      %v245 = vld [vmem:[%s226 + $0x38] sm:$0xff]
      %v246 = vld [vmem:[%s226 + $0x40] sm:$0xff]
      %v247 = vld [vmem:[%s226 + $0x48] sm:$0xff]
      %v248 = vld [vmem:[%s226 + $0x50] sm:$0xff]
      %v249 = vld [vmem:[%s226 + $0x58] sm:$0xff]
      %v250 = vld [vmem:[%s226 + $0x60] sm:$0xff]
      %v251 = vld [vmem:[%s226 + $0x68] sm:$0xff]
      %v252 = vld [vmem:[%s226 + $0x70] sm:$0xff]
      %v253 = vld [vmem:[%s226 + $0x78] sm:$0xff]
      %v254 = vld [vmem:[%s226 + $0x80] sm:$0xff]
      %v255 = vld [vmem:[%s226 + $0x88] sm:$0xff]
      %v256 = vld [vmem:[%s226 + $0x90] sm:$0xff]
      %v257 = vld [vmem:[%s226 + $0x98] sm:$0xff]
      %v258 = vld [vmem:[%s226 + $0xa0] sm:$0xff]
      %v259 = vld [vmem:[%s226 + $0xa8] sm:$0xff]
      %v260 = vld [vmem:[%s226 + $0xb0] sm:$0xff]
      %v261 = vld [vmem:[%s226 + $0xb8] sm:$0xff]
      %v262 = vld [vmem:[%s226 + $0xc0] sm:$0xff]
      %v263 = vld [vmem:[%s226 + $0xc8] sm:$0xff]
      %v264 = vld [vmem:[%s226 + $0xd0] sm:$0xff]
      %v265 = vld [vmem:[%s226 + $0xd8] sm:$0xff]
      %v266 = vld [vmem:[%s226 + $0xe0] sm:$0xff]
      %v267 = vld [vmem:[%s226 + $0xe8] sm:$0xff]
      %v268 = vld [vmem:[%s226 + $0xf0] sm:$0xff]
      %v269 = vld [vmem:[%s226 + $0xf8] sm:$0xff]
      %v271 = vlaneseq
      %v272 = vshrl.u32 %v271, 7
      %v273 = vsub.s32 0, %v272
      %v274 = vrot.slane %v236, %v273
      %v276 = vmul.f32 %v238, %v274
      %v277 = vmul.f32 %v239, %v274
      %v278 = vmul.f32 %v240, %v274
      %v279 = vmul.f32 %v241, %v274
      %v280 = vmul.f32 %v242, %v274
      %v281 = vmul.f32 %v243, %v274
      %v282 = vmul.f32 %v244, %v274
      %v283 = vmul.f32 %v245, %v274
      %v284 = vmul.f32 %v246, %v274
      %v285 = vmul.f32 %v247, %v274
      %v286 = vmul.f32 %v248, %v274
      %v287 = vmul.f32 %v249, %v274
      %v288 = vmul.f32 %v250, %v274
      %v289 = vmul.f32 %v251, %v274
      %v290 = vmul.f32 %v252, %v274
      %v291 = vmul.f32 %v253, %v274
      %v292 = vmul.f32 %v254, %v274
      %v293 = vmul.f32 %v255, %v274
      %v294 = vmul.f32 %v256, %v274
      %v295 = vmul.f32 %v257, %v274
      %v296 = vmul.f32 %v258, %v274
      %v297 = vmul.f32 %v259, %v274
      %v298 = vmul.f32 %v260, %v274
      %v299 = vmul.f32 %v261, %v274
      %v300 = vmul.f32 %v262, %v274
      %v301 = vmul.f32 %v263, %v274
      %v302 = vmul.f32 %v264, %v274
      %v303 = vmul.f32 %v265, %v274
      %v304 = vmul.f32 %v266, %v274
      %v305 = vmul.f32 %v267, %v274
      %v306 = vmul.f32 %v268, %v274
      %v307 = vmul.f32 %v269, %v274
      %v309 = vlaneseq
      %v310 = vshrl.u32 %v309, 7
      %v311 = vsub.s32 0, %v310
      %v312 = vrot.slane %v237, %v311
      %v314 = vadd.f32 %v276, %v312
      %v315 = vadd.f32 %v277, %v312
      %v316 = vadd.f32 %v278, %v312
      %v317 = vadd.f32 %v279, %v312
      %v318 = vadd.f32 %v280, %v312
      %v319 = vadd.f32 %v281, %v312
      %v320 = vadd.f32 %v282, %v312
      %v321 = vadd.f32 %v283, %v312
      %v322 = vadd.f32 %v284, %v312
      %v323 = vadd.f32 %v285, %v312
      %v324 = vadd.f32 %v286, %v312
      %v325 = vadd.f32 %v287, %v312
      %v326 = vadd.f32 %v288, %v312
      %v327 = vadd.f32 %v289, %v312
      %v328 = vadd.f32 %v290, %v312
      %v329 = vadd.f32 %v291, %v312
      %v330 = vadd.f32 %v292, %v312
      %v331 = vadd.f32 %v293, %v312
      %v332 = vadd.f32 %v294, %v312
      %v333 = vadd.f32 %v295, %v312
      %v334 = vadd.f32 %v296, %v312
      %v335 = vadd.f32 %v297, %v312
      %v336 = vadd.f32 %v298, %v312
      %v337 = vadd.f32 %v299, %v312
      %v338 = vadd.f32 %v300, %v312
      %v339 = vadd.f32 %v301, %v312
      %v340 = vadd.f32 %v302, %v312
      %v341 = vadd.f32 %v303, %v312
      %v342 = vadd.f32 %v304, %v312
      %v343 = vadd.f32 %v305, %v312
      %v344 = vadd.f32 %v306, %v312
      %v345 = vadd.f32 %v307, %v312
      %v346 = vmax.f32 %v314, 0.0
      %v347 = vmax.f32 %v315, 0.0
      %v348 = vmax.f32 %v316, 0.0
      %v349 = vmax.f32 %v317, 0.0
      %v350 = vmax.f32 %v318, 0.0
      %v351 = vmax.f32 %v319, 0.0
      %v352 = vmax.f32 %v320, 0.0
      %v353 = vmax.f32 %v321, 0.0
      %v354 = vmax.f32 %v322, 0.0
      %v355 = vmax.f32 %v323, 0.0
      %v356 = vmax.f32 %v324, 0.0
      %v357 = vmax.f32 %v325, 0.0
      %v358 = vmax.f32 %v326, 0.0
      %v359 = vmax.f32 %v327, 0.0
      %v360 = vmax.f32 %v328, 0.0
      %v361 = vmax.f32 %v329, 0.0
      %v362 = vmax.f32 %v330, 0.0
      %v363 = vmax.f32 %v331, 0.0
      %v364 = vmax.f32 %v332, 0.0
      %v365 = vmax.f32 %v333, 0.0
      %v366 = vmax.f32 %v334, 0.0
      %v367 = vmax.f32 %v335, 0.0
      %v368 = vmax.f32 %v336, 0.0
      %v369 = vmax.f32 %v337, 0.0
      %v370 = vmax.f32 %v338, 0.0
      %v371 = vmax.f32 %v339, 0.0
      %v372 = vmax.f32 %v340, 0.0
      %v373 = vmax.f32 %v341, 0.0
      %v374 = vmax.f32 %v342, 0.0
      %v375 = vmax.f32 %v343, 0.0
      %v376 = vmax.f32 %v344, 0.0
      %v377 = vmax.f32 %v345, 0.0
      %378 = vst [vmem:[#allocation2] sm:$0xff] 0.0
      %379 = vst [vmem:[#allocation2 + $0x8] sm:$0xff] 0.0
      %380 = vst [vmem:[#allocation2 + $0x10] sm:$0x3] 0.0
      %381 = vst [vmem:[#allocation2 + $0x18] sm:$0xff] 0.0
      %382 = vst [vmem:[#allocation2 + $0x20] sm:$0xff] 0.0
      %383 = vst [vmem:[#allocation2 + $0x28] sm:$0x3] 0.0
      %384 = vst [vmem:[#allocation2 + $0x30] sm:$0xff] 0.0
      %385 = vst [vmem:[#allocation2 + $0x38] sm:$0xff] 0.0
      %386 = vst [vmem:[#allocation2 + $0x40] sm:$0x3] 0.0
      %387 = vst [vmem:[#allocation2 + $0x48] sm:$0xff] 0.0
      %388 = vst [vmem:[#allocation2 + $0x50] sm:$0xff] 0.0
      %389 = vst [vmem:[#allocation2 + $0x58] sm:$0x3] 0.0
      %390 = vst [vmem:[#allocation2 + $0x60] sm:$0xff] 0.0
      %391 = vst [vmem:[#allocation2 + $0x68] sm:$0xff] 0.0
      %392 = vst [vmem:[#allocation2 + $0x70] sm:$0x3] 0.0
      %393 = vst [vmem:[#allocation2 + $0x78] sm:$0xff] 0.0
      %394 = vst [vmem:[#allocation2 + $0x80] sm:$0xff] 0.0
      %395 = vst [vmem:[#allocation2 + $0x88] sm:$0x3] 0.0
      %396 = vst [vmem:[#allocation2 + $0x90] sm:$0xff] 0.0
      %397 = vst [vmem:[#allocation2 + $0x98] sm:$0xff] 0.0
      %398 = vst [vmem:[#allocation2 + $0xa0] sm:$0x3] 0.0
      %399 = vst [vmem:[#allocation2 + $0xa8] sm:$0xff] 0.0
      %400 = vst [vmem:[#allocation2 + $0xb0] sm:$0xff] 0.0
      %401 = vst [vmem:[#allocation2 + $0xb8] sm:$0x3] 0.0
      %402 = vst [vmem:[#allocation2 + $0xc0] sm:$0xff] 0.0
      %403 = vst [vmem:[#allocation2 + $0xc8] sm:$0xff] 0.0
      %404 = vst [vmem:[#allocation2 + $0xd0] sm:$0x3] 0.0
      %405 = vst [vmem:[#allocation2 + $0xd8] sm:$0xff] 0.0
      %406 = vst [vmem:[#allocation2 + $0xe0] sm:$0xff] 0.0
      %407 = vst [vmem:[#allocation2 + $0xe8] sm:$0x3] 0.0
      %408 = vst [vmem:[#allocation2 + $0xf0] sm:$0xff] 0.0
      %409 = vst [vmem:[#allocation2 + $0xf8] sm:$0xff] 0.0
      %410 = vst [vmem:[#allocation2 + $0x100] sm:$0x3] 0.0
      %411 = vst [vmem:[#allocation2 + $0x108] sm:$0xff] 0.0
      %412 = vst [vmem:[#allocation2 + $0x110] sm:$0xff] 0.0
      %413 = vst [vmem:[#allocation2 + $0x118] sm:$0x3] 0.0
      %414 = vst [vmem:[#allocation2 + $0x120] sm:$0xff] 0.0
      %415 = vst [vmem:[#allocation2 + $0x128] sm:$0xff] 0.0
      %416 = vst [vmem:[#allocation2 + $0x130] sm:$0x3] 0.0
      %417 = vst [vmem:[#allocation2 + $0x138] sm:$0xff] 0.0
      %418 = vst [vmem:[#allocation2 + $0x140] sm:$0xff] 0.0
      %419 = vst [vmem:[#allocation2 + $0x148] sm:$0x3] 0.0
      %420 = vst [vmem:[#allocation2 + $0x150] sm:$0xff] 0.0
      %421 = vst [vmem:[#allocation2 + $0x158] sm:$0xff] 0.0
      %422 = vst [vmem:[#allocation2 + $0x160] sm:$0x3] 0.0
      %423 = vst [vmem:[#allocation2 + $0x168] sm:$0xff] 0.0
      %424 = vst [vmem:[#allocation2 + $0x170] sm:$0xff] 0.0
      %425 = vst [vmem:[#allocation2 + $0x178] sm:$0x3] 0.0
      %426 = vst [vmem:[#allocation2 + $0x180] sm:$0xff] 0.0
      %427 = vst [vmem:[#allocation2 + $0x188] sm:$0xff] 0.0
      %428 = vst [vmem:[#allocation2 + $0x190] sm:$0x3] 0.0
      %429 = vst [vmem:[#allocation2 + $0x198] sm:$0xff] 0.0
      %430 = vst [vmem:[#allocation2 + $0x1a0] sm:$0xff] 0.0
      %431 = vst [vmem:[#allocation2 + $0x1a8] sm:$0x3] 0.0
      %s432 = scalar_lea.vmem [#allocation2], 24
      %433 = vst [vmem:[%s432 + $0x1] sm:$0xff] %v346
      %434 = vst [vmem:[%s432 + $0x9] sm:$0xff] %v347
      %435 = vst [vmem:[%s432 + $0x19] sm:$0xff] %v348
      %436 = vst [vmem:[%s432 + $0x21] sm:$0xff] %v349
      %437 = vst [vmem:[%s432 + $0x31] sm:$0xff] %v350
      %438 = vst [vmem:[%s432 + $0x39] sm:$0xff] %v351
      %439 = vst [vmem:[%s432 + $0x49] sm:$0xff] %v352
      %440 = vst [vmem:[%s432 + $0x51] sm:$0xff] %v353
      %441 = vst [vmem:[%s432 + $0x61] sm:$0xff] %v354
      %442 = vst [vmem:[%s432 + $0x69] sm:$0xff] %v355
      %443 = vst [vmem:[%s432 + $0x79] sm:$0xff] %v356
      %444 = vst [vmem:[%s432 + $0x81] sm:$0xff] %v357
      %445 = vst [vmem:[%s432 + $0x91] sm:$0xff] %v358
      %446 = vst [vmem:[%s432 + $0x99] sm:$0xff] %v359
      %447 = vst [vmem:[%s432 + $0xa9] sm:$0xff] %v360
      %448 = vst [vmem:[%s432 + $0xb1] sm:$0xff] %v361
      %449 = vst [vmem:[%s432 + $0xc1] sm:$0xff] %v362
      %450 = vst [vmem:[%s432 + $0xc9] sm:$0xff] %v363
      %451 = vst [vmem:[%s432 + $0xd9] sm:$0xff] %v364
      %452 = vst [vmem:[%s432 + $0xe1] sm:$0xff] %v365
      %453 = vst [vmem:[%s432 + $0xf1] sm:$0xff] %v366
      %454 = vst [vmem:[%s432 + $0xf9] sm:$0xff] %v367
      %455 = vst [vmem:[%s432 + $0x109] sm:$0xff] %v368
      %456 = vst [vmem:[%s432 + $0x111] sm:$0xff] %v369
      %457 = vst [vmem:[%s432 + $0x121] sm:$0xff] %v370
      %458 = vst [vmem:[%s432 + $0x129] sm:$0xff] %v371
      %459 = vst [vmem:[%s432 + $0x139] sm:$0xff] %v372
      %460 = vst [vmem:[%s432 + $0x141] sm:$0xff] %v373
      %461 = vst [vmem:[%s432 + $0x151] sm:$0xff] %v374
      %462 = vst [vmem:[%s432 + $0x159] sm:$0xff] %v375
      %463 = vst [vmem:[%s432 + $0x169] sm:$0xff] %v376
      %464 = vst [vmem:[%s432 + $0x171] sm:$0xff] %v377
      %v465 = vld [vmem:[#allocation2] sm:$0xff]
      %v466 = vld [vmem:[#allocation2 + $0x8] sm:$0xff]
      %v467 = vld [vmem:[#allocation2 + $0x18] sm:$0xff]
      %v468 = vld [vmem:[#allocation2 + $0x20] sm:$0xff]
      %v469 = vld [vmem:[#allocation2 + $0x30] sm:$0xff]
      %v470 = vld [vmem:[#allocation2 + $0x38] sm:$0xff]
      %v471 = vld [vmem:[#allocation2 + $0x48] sm:$0xff]
      %v472 = vld [vmem:[#allocation2 + $0x50] sm:$0xff]
      %v473 = vld [vmem:[#allocation2 + $0x60] sm:$0xff]
      %v474 = vld [vmem:[#allocation2 + $0x68] sm:$0xff]
      %v475 = vld [vmem:[#allocation2 + $0x78] sm:$0xff]
      %v476 = vld [vmem:[#allocation2 + $0x80] sm:$0xff]
      %v477 = vld [vmem:[#allocation2 + $0x90] sm:$0xff]
      %v478 = vld [vmem:[#allocation2 + $0x98] sm:$0xff]
      %v479 = vld [vmem:[#allocation2 + $0xa8] sm:$0xff]
      %v480 = vld [vmem:[#allocation2 + $0xb0] sm:$0xff]
      %v481 = vld [vmem:[#allocation2 + $0xc0] sm:$0xff]
      %v482 = vld [vmem:[#allocation2 + $0xc8] sm:$0xff]
      %v483 = vld [vmem:[#allocation2 + $0xd8] sm:$0xff]
      %v484 = vld [vmem:[#allocation2 + $0xe0] sm:$0xff]
      %v485 = vld [vmem:[#allocation2 + $0xf0] sm:$0xff]
      %v486 = vld [vmem:[#allocation2 + $0xf8] sm:$0xff]
      %v487 = vld [vmem:[#allocation2 + $0x108] sm:$0xff]
      %v488 = vld [vmem:[#allocation2 + $0x110] sm:$0xff]
      %v489 = vld [vmem:[#allocation2 + $0x120] sm:$0xff]
      %v490 = vld [vmem:[#allocation2 + $0x128] sm:$0xff]
      %v491 = vld [vmem:[#allocation2 + $0x138] sm:$0xff]
      %v492 = vld [vmem:[#allocation2 + $0x140] sm:$0xff]
      %v493 = vld [vmem:[#allocation2 + $0x150] sm:$0xff]
      %v494 = vld [vmem:[#allocation2 + $0x158] sm:$0xff]
      %v495 = vld [vmem:[#allocation2 + $0x168] sm:$0xff]
      %v496 = vld [vmem:[#allocation2 + $0x170] sm:$0xff]
      %v497 = vld [vmem:[#allocation2 + $0x1] sm:$0xff]
      %v498 = vld [vmem:[#allocation2 + $0x9] sm:$0xff]
      %v499 = vld [vmem:[#allocation2 + $0x19] sm:$0xff]
      %v500 = vld [vmem:[#allocation2 + $0x21] sm:$0xff]
      %v501 = vld [vmem:[#allocation2 + $0x31] sm:$0xff]
      %v502 = vld [vmem:[#allocation2 + $0x39] sm:$0xff]
      %v503 = vld [vmem:[#allocation2 + $0x49] sm:$0xff]
      %v504 = vld [vmem:[#allocation2 + $0x51] sm:$0xff]
      %v505 = vld [vmem:[#allocation2 + $0x61] sm:$0xff]
      %v506 = vld [vmem:[#allocation2 + $0x69] sm:$0xff]
      %v507 = vld [vmem:[#allocation2 + $0x79] sm:$0xff]
      %v508 = vld [vmem:[#allocation2 + $0x81] sm:$0xff]
      %v509 = vld [vmem:[#allocation2 + $0x91] sm:$0xff]
      %v510 = vld [vmem:[#allocation2 + $0x99] sm:$0xff]
      %v511 = vld [vmem:[#allocation2 + $0xa9] sm:$0xff]
      %v512 = vld [vmem:[#allocation2 + $0xb1] sm:$0xff]
      %v513 = vld [vmem:[#allocation2 + $0xc1] sm:$0xff]
      %v514 = vld [vmem:[#allocation2 + $0xc9] sm:$0xff]
      %v515 = vld [vmem:[#allocation2 + $0xd9] sm:$0xff]
      %v516 = vld [vmem:[#allocation2 + $0xe1] sm:$0xff]
      %v517 = vld [vmem:[#allocation2 + $0xf1] sm:$0xff]
      %v518 = vld [vmem:[#allocation2 + $0xf9] sm:$0xff]
      %v519 = vld [vmem:[#allocation2 + $0x109] sm:$0xff]
      %v520 = vld [vmem:[#allocation2 + $0x111] sm:$0xff]
      %v521 = vld [vmem:[#allocation2 + $0x121] sm:$0xff]
      %v522 = vld [vmem:[#allocation2 + $0x129] sm:$0xff]
      %v523 = vld [vmem:[#allocation2 + $0x139] sm:$0xff]
      %v524 = vld [vmem:[#allocation2 + $0x141] sm:$0xff]
      %v525 = vld [vmem:[#allocation2 + $0x151] sm:$0xff]
      %v526 = vld [vmem:[#allocation2 + $0x159] sm:$0xff]
      %v527 = vld [vmem:[#allocation2 + $0x169] sm:$0xff]
      %v528 = vld [vmem:[#allocation2 + $0x171] sm:$0xff]
      %v529 = vld [vmem:[#allocation2 + $0x2] sm:$0xff]
      %v530 = vld [vmem:[#allocation2 + $0xa] sm:$0xff]
      %v531 = vld [vmem:[#allocation2 + $0x1a] sm:$0xff]
      %v532 = vld [vmem:[#allocation2 + $0x22] sm:$0xff]
      %v533 = vld [vmem:[#allocation2 + $0x32] sm:$0xff]
      %v534 = vld [vmem:[#allocation2 + $0x3a] sm:$0xff]
      %v535 = vld [vmem:[#allocation2 + $0x4a] sm:$0xff]
      %v536 = vld [vmem:[#allocation2 + $0x52] sm:$0xff]
      %v537 = vld [vmem:[#allocation2 + $0x62] sm:$0xff]
      %v538 = vld [vmem:[#allocation2 + $0x6a] sm:$0xff]
      %v539 = vld [vmem:[#allocation2 + $0x7a] sm:$0xff]
      %v540 = vld [vmem:[#allocation2 + $0x82] sm:$0xff]
      %v541 = vld [vmem:[#allocation2 + $0x92] sm:$0xff]
      %v542 = vld [vmem:[#allocation2 + $0x9a] sm:$0xff]
      %v543 = vld [vmem:[#allocation2 + $0xaa] sm:$0xff]
      %v544 = vld [vmem:[#allocation2 + $0xb2] sm:$0xff]
      %v545 = vld [vmem:[#allocation2 + $0xc2] sm:$0xff]
      %v546 = vld [vmem:[#allocation2 + $0xca] sm:$0xff]
      %v547 = vld [vmem:[#allocation2 + $0xda] sm:$0xff]
      %v548 = vld [vmem:[#allocation2 + $0xe2] sm:$0xff]
      %v549 = vld [vmem:[#allocation2 + $0xf2] sm:$0xff]
      %v550 = vld [vmem:[#allocation2 + $0xfa] sm:$0xff]
      %v551 = vld [vmem:[#allocation2 + $0x10a] sm:$0xff]
      %v552 = vld [vmem:[#allocation2 + $0x112] sm:$0xff]
      %v553 = vld [vmem:[#allocation2 + $0x122] sm:$0xff]
      %v554 = vld [vmem:[#allocation2 + $0x12a] sm:$0xff]
      %v555 = vld [vmem:[#allocation2 + $0x13a] sm:$0xff]
      %v556 = vld [vmem:[#allocation2 + $0x142] sm:$0xff]
      %v557 = vld [vmem:[#allocation2 + $0x152] sm:$0xff]
      %v558 = vld [vmem:[#allocation2 + $0x15a] sm:$0xff]
      %v559 = vld [vmem:[#allocation2 + $0x16a] sm:$0xff]
      %v560 = vld [vmem:[#allocation2 + $0x172] sm:$0xff]
      %v561 = vld [vmem:[%s3] sm:$0xff]
      %v562 = vld [vmem:[%s3 + $0x8] sm:$0xff]
      %v563 = vld [vmem:[%s3 + $0x10] sm:$0xff]
      %v564 = vld [vmem:[%s3 + $0x18] sm:$0xff]
      %v565 = vld [vmem:[%s3 + $0x20] sm:$0xff]
      %v566 = vld [vmem:[%s3 + $0x28] sm:$0xff]
      %v567 = vld [vmem:[%s3 + $0x30] sm:$0xff]
      %v568 = vld [vmem:[%s3 + $0x38] sm:$0xff]
      %v569 = vld [vmem:[%s3 + $0x40] sm:$0xff]
      %v570 = vld [vmem:[%s3 + $0x48] sm:$0xff]
      %v571 = vld [vmem:[%s3 + $0x50] sm:$0xff]
      %v572 = vld [vmem:[%s3 + $0x58] sm:$0xff]
      %v573 = vld [vmem:[%s3 + $0x60] sm:$0xff]
      %v574 = vld [vmem:[%s3 + $0x68] sm:$0xff]
      %v575 = vld [vmem:[%s3 + $0x70] sm:$0xff]
      %v576 = vld [vmem:[%s3 + $0x78] sm:$0xff]
      %v577 = vld [vmem:[%s3 + $0x80] sm:$0xff]
      %v578 = vld [vmem:[%s3 + $0x88] sm:$0xff]
      %v579 = vld [vmem:[%s3 + $0x90] sm:$0xff]
      %v580 = vld [vmem:[%s3 + $0x98] sm:$0xff]
      %v581 = vld [vmem:[%s3 + $0xa0] sm:$0xff]
      %v582 = vld [vmem:[%s3 + $0xa8] sm:$0xff]
      %v583 = vld [vmem:[%s3 + $0xb0] sm:$0xff]
      %v584 = vld [vmem:[%s3 + $0xb8] sm:$0xff]
      %v585 = vld [vmem:[%s3 + $0xc0] sm:$0xff]
      %v586 = vld [vmem:[%s3 + $0xc8] sm:$0xff]
      %v587 = vld [vmem:[%s3 + $0xd0] sm:$0xff]
      %v588 = vld [vmem:[%s3 + $0xd8] sm:$0xff]
      %v589 = vld [vmem:[%s3 + $0xe0] sm:$0xff]
      %v590 = vld [vmem:[%s3 + $0xe8] sm:$0xff]
      %v591 = vld [vmem:[%s3 + $0xf0] sm:$0xff]
      %v592 = vld [vmem:[%s3 + $0xf8] sm:$0xff]
      %v593 = vld [vmem:[%s3 + $0x100] sm:$0xff]
      %v594 = vld [vmem:[%s3 + $0x108] sm:$0xff]
      %v595 = vld [vmem:[%s3 + $0x110] sm:$0xff]
      %v596 = vld [vmem:[%s3 + $0x118] sm:$0xff]
      %v597 = vld [vmem:[%s3 + $0x120] sm:$0xff]
      %v598 = vld [vmem:[%s3 + $0x128] sm:$0xff]
      %v599 = vld [vmem:[%s3 + $0x130] sm:$0xff]
      %v600 = vld [vmem:[%s3 + $0x138] sm:$0xff]
      %v601 = vld [vmem:[%s3 + $0x140] sm:$0xff]
      %v602 = vld [vmem:[%s3 + $0x148] sm:$0xff]
      %v603 = vld [vmem:[%s3 + $0x150] sm:$0xff]
      %v604 = vld [vmem:[%s3 + $0x158] sm:$0xff]
      %v605 = vld [vmem:[%s3 + $0x160] sm:$0xff]
      %v606 = vld [vmem:[%s3 + $0x168] sm:$0xff]
      %v607 = vld [vmem:[%s3 + $0x170] sm:$0xff]
      %v608 = vld [vmem:[%s3 + $0x178] sm:$0xff]
      %v609 = vld [vmem:[%s432] sm:$0xff]
      %v610 = vld [vmem:[%s432 + $0x8] sm:$0xff]
      %v611 = vld [vmem:[%s432 + $0x18] sm:$0xff]
      %v612 = vld [vmem:[%s432 + $0x20] sm:$0xff]
      %v613 = vld [vmem:[%s432 + $0x30] sm:$0xff]
      %v614 = vld [vmem:[%s432 + $0x38] sm:$0xff]
      %v615 = vld [vmem:[%s432 + $0x48] sm:$0xff]
      %v616 = vld [vmem:[%s432 + $0x50] sm:$0xff]
      %v617 = vld [vmem:[%s432 + $0x60] sm:$0xff]
      %v618 = vld [vmem:[%s432 + $0x68] sm:$0xff]
      %v619 = vld [vmem:[%s432 + $0x78] sm:$0xff]
      %v620 = vld [vmem:[%s432 + $0x80] sm:$0xff]
      %v621 = vld [vmem:[%s432 + $0x90] sm:$0xff]
      %v622 = vld [vmem:[%s432 + $0x98] sm:$0xff]
      %v623 = vld [vmem:[%s432 + $0xa8] sm:$0xff]
      %v624 = vld [vmem:[%s432 + $0xb0] sm:$0xff]
      %v625 = vld [vmem:[%s432 + $0xc0] sm:$0xff]
      %v626 = vld [vmem:[%s432 + $0xc8] sm:$0xff]
      %v627 = vld [vmem:[%s432 + $0xd8] sm:$0xff]
      %v628 = vld [vmem:[%s432 + $0xe0] sm:$0xff]
      %v629 = vld [vmem:[%s432 + $0xf0] sm:$0xff]
      %v630 = vld [vmem:[%s432 + $0xf8] sm:$0xff]
      %v631 = vld [vmem:[%s432 + $0x108] sm:$0xff]
      %v632 = vld [vmem:[%s432 + $0x110] sm:$0xff]
      %v633 = vld [vmem:[%s432 + $0x120] sm:$0xff]
      %v634 = vld [vmem:[%s432 + $0x128] sm:$0xff]
      %v635 = vld [vmem:[%s432 + $0x138] sm:$0xff]
      %v636 = vld [vmem:[%s432 + $0x140] sm:$0xff]
      %v637 = vld [vmem:[%s432 + $0x150] sm:$0xff]
      %v638 = vld [vmem:[%s432 + $0x158] sm:$0xff]
      %v639 = vld [vmem:[%s432 + $0x168] sm:$0xff]
      %v640 = vld [vmem:[%s432 + $0x170] sm:$0xff]
      %v641 = vld [vmem:[%s432 + $0x1] sm:$0xff]
      %v642 = vld [vmem:[%s432 + $0x9] sm:$0xff]
      %v643 = vld [vmem:[%s432 + $0x19] sm:$0xff]
      %v644 = vld [vmem:[%s432 + $0x21] sm:$0xff]
      %v645 = vld [vmem:[%s432 + $0x31] sm:$0xff]
      %v646 = vld [vmem:[%s432 + $0x39] sm:$0xff]
      %v647 = vld [vmem:[%s432 + $0x49] sm:$0xff]
      %v648 = vld [vmem:[%s432 + $0x51] sm:$0xff]
      %v649 = vld [vmem:[%s432 + $0x61] sm:$0xff]
      %v650 = vld [vmem:[%s432 + $0x69] sm:$0xff]
      %v651 = vld [vmem:[%s432 + $0x79] sm:$0xff]
      %v652 = vld [vmem:[%s432 + $0x81] sm:$0xff]
      %v653 = vld [vmem:[%s432 + $0x91] sm:$0xff]
      %v654 = vld [vmem:[%s432 + $0x99] sm:$0xff]
      %v655 = vld [vmem:[%s432 + $0xa9] sm:$0xff]
      %v656 = vld [vmem:[%s432 + $0xb1] sm:$0xff]
      %v657 = vld [vmem:[%s432 + $0xc1] sm:$0xff]
      %v658 = vld [vmem:[%s432 + $0xc9] sm:$0xff]
      %v659 = vld [vmem:[%s432 + $0xd9] sm:$0xff]
      %v660 = vld [vmem:[%s432 + $0xe1] sm:$0xff]
      %v661 = vld [vmem:[%s432 + $0xf1] sm:$0xff]
      %v662 = vld [vmem:[%s432 + $0xf9] sm:$0xff]
      %v663 = vld [vmem:[%s432 + $0x109] sm:$0xff]
      %v664 = vld [vmem:[%s432 + $0x111] sm:$0xff]
      %v665 = vld [vmem:[%s432 + $0x121] sm:$0xff]
      %v666 = vld [vmem:[%s432 + $0x129] sm:$0xff]
      %v667 = vld [vmem:[%s432 + $0x139] sm:$0xff]
      %v668 = vld [vmem:[%s432 + $0x141] sm:$0xff]
      %v669 = vld [vmem:[%s432 + $0x151] sm:$0xff]
      %v670 = vld [vmem:[%s432 + $0x159] sm:$0xff]
      %v671 = vld [vmem:[%s432 + $0x169] sm:$0xff]
      %v672 = vld [vmem:[%s432 + $0x171] sm:$0xff]
      %v673 = vld [vmem:[%s432 + $0x2] sm:$0xff]
      %v674 = vld [vmem:[%s432 + $0xa] sm:$0xff]
      %v675 = vld [vmem:[%s432 + $0x1a] sm:$0xff]
      %v676 = vld [vmem:[%s432 + $0x22] sm:$0xff]
      %v677 = vld [vmem:[%s432 + $0x32] sm:$0xff]
      %v678 = vld [vmem:[%s432 + $0x3a] sm:$0xff]
      %v679 = vld [vmem:[%s432 + $0x4a] sm:$0xff]
      %v680 = vld [vmem:[%s432 + $0x52] sm:$0xff]
      %v681 = vld [vmem:[%s432 + $0x62] sm:$0xff]
      %v682 = vld [vmem:[%s432 + $0x6a] sm:$0xff]
      %v683 = vld [vmem:[%s432 + $0x7a] sm:$0xff]
      %v684 = vld [vmem:[%s432 + $0x82] sm:$0xff]
      %v685 = vld [vmem:[%s432 + $0x92] sm:$0xff]
      %v686 = vld [vmem:[%s432 + $0x9a] sm:$0xff]
      %v687 = vld [vmem:[%s432 + $0xaa] sm:$0xff]
      %v688 = vld [vmem:[%s432 + $0xb2] sm:$0xff]
      %v689 = vld [vmem:[%s432 + $0xc2] sm:$0xff]
      %v690 = vld [vmem:[%s432 + $0xca] sm:$0xff]
      %v691 = vld [vmem:[%s432 + $0xda] sm:$0xff]
      %v692 = vld [vmem:[%s432 + $0xe2] sm:$0xff]
      %v693 = vld [vmem:[%s432 + $0xf2] sm:$0xff]
      %v694 = vld [vmem:[%s432 + $0xfa] sm:$0xff]
      %v695 = vld [vmem:[%s432 + $0x10a] sm:$0xff]
      %v696 = vld [vmem:[%s432 + $0x112] sm:$0xff]
      %v697 = vld [vmem:[%s432 + $0x122] sm:$0xff]
      %v698 = vld [vmem:[%s432 + $0x12a] sm:$0xff]
      %v699 = vld [vmem:[%s432 + $0x13a] sm:$0xff]
      %v700 = vld [vmem:[%s432 + $0x142] sm:$0xff]
      %v701 = vld [vmem:[%s432 + $0x152] sm:$0xff]
      %v702 = vld [vmem:[%s432 + $0x15a] sm:$0xff]
      %v703 = vld [vmem:[%s432 + $0x16a] sm:$0xff]
      %v704 = vld [vmem:[%s432 + $0x172] sm:$0xff]
      %s705 = scalar_lea.vmem %s3, 384
      %v706 = vld [vmem:[%s705] sm:$0xff]
      %v707 = vld [vmem:[%s705 + $0x8] sm:$0xff]
      %v708 = vld [vmem:[%s705 + $0x10] sm:$0xff]
      %v709 = vld [vmem:[%s705 + $0x18] sm:$0xff]
      %v710 = vld [vmem:[%s705 + $0x20] sm:$0xff]
      %v711 = vld [vmem:[%s705 + $0x28] sm:$0xff]
      %v712 = vld [vmem:[%s705 + $0x30] sm:$0xff]
      %v713 = vld [vmem:[%s705 + $0x38] sm:$0xff]
      %v714 = vld [vmem:[%s705 + $0x40] sm:$0xff]
      %v715 = vld [vmem:[%s705 + $0x48] sm:$0xff]
      %v716 = vld [vmem:[%s705 + $0x50] sm:$0xff]
      %v717 = vld [vmem:[%s705 + $0x58] sm:$0xff]
      %v718 = vld [vmem:[%s705 + $0x60] sm:$0xff]
      %v719 = vld [vmem:[%s705 + $0x68] sm:$0xff]
      %v720 = vld [vmem:[%s705 + $0x70] sm:$0xff]
      %v721 = vld [vmem:[%s705 + $0x78] sm:$0xff]
      %v722 = vld [vmem:[%s705 + $0x80] sm:$0xff]
      %v723 = vld [vmem:[%s705 + $0x88] sm:$0xff]
      %v724 = vld [vmem:[%s705 + $0x90] sm:$0xff]
      %v725 = vld [vmem:[%s705 + $0x98] sm:$0xff]
      %v726 = vld [vmem:[%s705 + $0xa0] sm:$0xff]
      %v727 = vld [vmem:[%s705 + $0xa8] sm:$0xff]
      %v728 = vld [vmem:[%s705 + $0xb0] sm:$0xff]
      %v729 = vld [vmem:[%s705 + $0xb8] sm:$0xff]
      %v730 = vld [vmem:[%s705 + $0xc0] sm:$0xff]
      %v731 = vld [vmem:[%s705 + $0xc8] sm:$0xff]
      %v732 = vld [vmem:[%s705 + $0xd0] sm:$0xff]
      %v733 = vld [vmem:[%s705 + $0xd8] sm:$0xff]
      %v734 = vld [vmem:[%s705 + $0xe0] sm:$0xff]
      %v735 = vld [vmem:[%s705 + $0xe8] sm:$0xff]
      %v736 = vld [vmem:[%s705 + $0xf0] sm:$0xff]
      %v737 = vld [vmem:[%s705 + $0xf8] sm:$0xff]
      %v738 = vld [vmem:[%s705 + $0x100] sm:$0xff]
      %v739 = vld [vmem:[%s705 + $0x108] sm:$0xff]
      %v740 = vld [vmem:[%s705 + $0x110] sm:$0xff]
      %v741 = vld [vmem:[%s705 + $0x118] sm:$0xff]
      %v742 = vld [vmem:[%s705 + $0x120] sm:$0xff]
      %v743 = vld [vmem:[%s705 + $0x128] sm:$0xff]
      %v744 = vld [vmem:[%s705 + $0x130] sm:$0xff]
      %v745 = vld [vmem:[%s705 + $0x138] sm:$0xff]
      %v746 = vld [vmem:[%s705 + $0x140] sm:$0xff]
      %v747 = vld [vmem:[%s705 + $0x148] sm:$0xff]
      %v748 = vld [vmem:[%s705 + $0x150] sm:$0xff]
      %v749 = vld [vmem:[%s705 + $0x158] sm:$0xff]
      %v750 = vld [vmem:[%s705 + $0x160] sm:$0xff]
      %v751 = vld [vmem:[%s705 + $0x168] sm:$0xff]
      %v752 = vld [vmem:[%s705 + $0x170] sm:$0xff]
      %v753 = vld [vmem:[%s705 + $0x178] sm:$0xff]
      %754 = vmatprep.subr.mxu0 0.0
      %755 = vmatpush1.msra.mxu0 %v706
      %756 = vmatprep.subr.mxu0 0.0
      %757 = vmatpush1.msra.mxu0 %v707
      %758 = vmatprep.subr.mxu0 0.0
      %759 = vmatpush1.msra.mxu0 %v708
      %760 = vmatprep.subr.mxu0 0.0
      %761 = vmatpush1.msra.mxu0 %v709
      %762 = vmatprep.subr.mxu0 0.0
      %763 = vmatpush1.msra.mxu0 %v710
      %764 = vmatprep.subr.mxu0 0.0
      %765 = vmatpush1.msra.mxu0 %v711
      %766 = vmatprep.subr.mxu0 0.0
      %767 = vmatpush1.msra.mxu0 %v712
      %768 = vmatprep.subr.mxu0 0.0
      %769 = vmatpush1.msra.mxu0 %v713
      %770 = vmatprep.subr.mxu0 0.0
      %771 = vmatpush1.msra.mxu0 %v714
      %772 = vmatprep.subr.mxu0 0.0
      %773 = vmatpush1.msra.mxu0 %v715
      %774 = vmatprep.subr.mxu0 0.0
      %775 = vmatpush1.msra.mxu0 %v716
      %776 = vmatprep.subr.mxu0 0.0
      %777 = vmatpush1.msra.mxu0 %v717
      %778 = vmatprep.subr.mxu0 0.0
      %779 = vmatpush1.msra.mxu0 %v718
      %780 = vmatprep.subr.mxu0 0.0
      %781 = vmatpush1.msra.mxu0 %v719
      %782 = vmatprep.subr.mxu0 0.0
      %783 = vmatpush1.msra.mxu0 %v720
      %784 = vmatprep.subr.mxu0 0.0
      %785 = vmatpush1.msra.mxu0 %v721
      %786 = vmatprep.subr.mxu0 0.0
      %787 = vmatpush1.msra.mxu0 %v722
      %788 = vmatprep.subr.mxu0 0.0
      %789 = vmatpush1.msra.mxu0 %v723
      %790 = vmatprep.subr.mxu0 0.0
      %791 = vmatpush1.msra.mxu0 %v724
      %792 = vmatprep.subr.mxu0 0.0
      %793 = vmatpush1.msra.mxu0 %v725
      %794 = vmatprep.subr.mxu0 0.0
      %795 = vmatpush1.msra.mxu0 %v726
      %796 = vmatprep.subr.mxu0 0.0
      %797 = vmatpush1.msra.mxu0 %v727
      %798 = vmatprep.subr.mxu0 0.0
      %799 = vmatpush1.msra.mxu0 %v728
      %800 = vmatprep.subr.mxu0 0.0
      %801 = vmatpush1.msra.mxu0 %v729
      %802 = vmatprep.subr.mxu0 0.0
      %803 = vmatpush1.msra.mxu0 %v730
      %804 = vmatprep.subr.mxu0 0.0
      %805 = vmatpush1.msra.mxu0 %v731
      %806 = vmatprep.subr.mxu0 0.0
      %807 = vmatpush1.msra.mxu0 %v732
      %808 = vmatprep.subr.mxu0 0.0
      %809 = vmatpush1.msra.mxu0 %v733
      %810 = vmatprep.subr.mxu0 0.0
      %811 = vmatpush1.msra.mxu0 %v734
      %812 = vmatprep.subr.mxu0 0.0
      %813 = vmatpush1.msra.mxu0 %v735
      %814 = vmatprep.subr.mxu0 0.0
      %815 = vmatpush1.msra.mxu0 %v736
      %816 = vmatprep.subr.mxu0 0.0
      %817 = vmatpush1.msra.mxu0 %v737
      %818 = vmatprep.mubr.f32.mxu0 %v641
      %819 = vmatmul.mubr.f32.gmra.mrb[0].mxu0 %v609
      %v820 = vpop.f32.mrb[0].mxu0
      %v821 = vadd.f32 0.0, %v820
      %v822 = vpop.f32.mrb[0].mxu0
      %823 = vmatprep.mubr.f32.mxu0 %v642
      %824 = vmatmul.mubr.f32.gmra.mrb[0].mxu0 %v610
      %v825 = vpop.f32.mrb[0].mxu0
      %v826 = vadd.f32 0.0, %v825
      %v827 = vpop.f32.mrb[0].mxu0
      %828 = vmatprep.mubr.f32.mxu0 %v643
      %829 = vmatmul.mubr.f32.gmra.mrb[0].mxu0 %v611
      %v830 = vpop.f32.mrb[0].mxu0
      %v831 = vadd.f32 0.0, %v830
      %v832 = vpop.f32.mrb[0].mxu0
      %833 = vmatprep.mubr.f32.mxu0 %v644
      %834 = vmatmul.mubr.f32.gmra.mrb[0].mxu0 %v612
      %v835 = vpop.f32.mrb[0].mxu0
      %v836 = vadd.f32 0.0, %v835
      %v837 = vpop.f32.mrb[0].mxu0
      %838 = vmatprep.mubr.f32.mxu0 %v645
      %839 = vmatmul.mubr.f32.gmra.mrb[0].mxu0 %v613
      %v840 = vpop.f32.mrb[0].mxu0
      %v841 = vadd.f32 0.0, %v840
      %v842 = vpop.f32.mrb[0].mxu0
      %843 = vmatprep.mubr.f32.mxu0 %v646
      %844 = vmatmul.mubr.f32.gmra.mrb[0].mxu0 %v614
      %v845 = vpop.f32.mrb[0].mxu0
      %v846 = vadd.f32 0.0, %v845
      %v847 = vpop.f32.mrb[0].mxu0
      %848 = vmatprep.mubr.f32.mxu0 %v647
      %849 = vmatmul.mubr.f32.gmra.mrb[0].mxu0 %v615
      %v850 = vpop.f32.mrb[0].mxu0
      %v851 = vadd.f32 0.0, %v850
      %v852 = vpop.f32.mrb[0].mxu0
      %853 = vmatprep.mubr.f32.mxu0 %v648
      %854 = vmatmul.mubr.f32.gmra.mrb[0].mxu0 %v616
      %v855 = vpop.f32.mrb[0].mxu0
      %v856 = vadd.f32 0.0, %v855
      %v857 = vpop.f32.mrb[0].mxu0
      %858 = vmatprep.mubr.f32.mxu0 %v649
      %859 = vmatmul.mubr.f32.gmra.mrb[0].mxu0 %v617
      %v860 = vpop.f32.mrb[0].mxu0
      %v861 = vadd.f32 0.0, %v860
      %v862 = vpop.f32.mrb[0].mxu0
      %863 = vmatprep.mubr.f32.mxu0 %v650
      %864 = vmatmul.mubr.f32.gmra.mrb[0].mxu0 %v618
      %v865 = vpop.f32.mrb[0].mxu0
      %v866 = vadd.f32 0.0, %v865
      %v867 = vpop.f32.mrb[0].mxu0
      %868 = vmatprep.mubr.f32.mxu0 %v651
      %869 = vmatmul.mubr.f32.gmra.mrb[0].mxu0 %v619
      %v870 = vpop.f32.mrb[0].mxu0
      %v871 = vadd.f32 0.0, %v870
      %v872 = vpop.f32.mrb[0].mxu0
      %873 = vmatprep.mubr.f32.mxu0 %v652
      %874 = vmatmul.mubr.f32.gmra.mrb[0].mxu0 %v620
      %v875 = vpop.f32.mrb[0].mxu0
      %v876 = vadd.f32 0.0, %v875
      %v877 = vpop.f32.mrb[0].mxu0
      %878 = vmatprep.mubr.f32.mxu0 %v653
      %879 = vmatmul.mubr.f32.gmra.mrb[0].mxu0 %v621
      %v880 = vpop.f32.mrb[0].mxu0
      %v881 = vadd.f32 0.0, %v880
      %v882 = vpop.f32.mrb[0].mxu0
      %883 = vmatprep.mubr.f32.mxu0 %v654
      %884 = vmatmul.mubr.f32.gmra.mrb[0].mxu0 %v622
      %v885 = vpop.f32.mrb[0].mxu0
      %v886 = vadd.f32 0.0, %v885
      %v887 = vpop.f32.mrb[0].mxu0
      %888 = vmatprep.mubr.f32.mxu0 %v655
      %889 = vmatmul.mubr.f32.gmra.mrb[0].mxu0 %v623
      %v890 = vpop.f32.mrb[0].mxu0
      %v891 = vadd.f32 0.0, %v890
      %v892 = vpop.f32.mrb[0].mxu0
      %893 = vmatprep.mubr.f32.mxu0 %v656
      %894 = vmatmul.mubr.f32.gmra.mrb[0].mxu0 %v624
      %v895 = vpop.f32.mrb[0].mxu0
      %v896 = vadd.f32 0.0, %v895
      %v897 = vpop.f32.mrb[0].mxu0
      %898 = vmatprep.mubr.f32.mxu0 %v657
      %899 = vmatmul.mubr.f32.gmra.mrb[0].mxu0 %v625
      %v900 = vpop.f32.mrb[0].mxu0
      %v901 = vadd.f32 0.0, %v900
      %v902 = vpop.f32.mrb[0].mxu0
      %903 = vmatprep.mubr.f32.mxu0 %v658
      %904 = vmatmul.mubr.f32.gmra.mrb[0].mxu0 %v626
      %v905 = vpop.f32.mrb[0].mxu0
      %v906 = vadd.f32 0.0, %v905
      %v907 = vpop.f32.mrb[0].mxu0
      %908 = vmatprep.mubr.f32.mxu0 %v659
      %909 = vmatmul.mubr.f32.gmra.mrb[0].mxu0 %v627
      %v910 = vpop.f32.mrb[0].mxu0
      %v911 = vadd.f32 0.0, %v910
      %v912 = vpop.f32.mrb[0].mxu0
      %913 = vmatprep.mubr.f32.mxu0 %v660
      %914 = vmatmul.mubr.f32.gmra.mrb[0].mxu0 %v628
      %v915 = vpop.f32.mrb[0].mxu0
      %v916 = vadd.f32 0.0, %v915
      %v917 = vpop.f32.mrb[0].mxu0
      %918 = vmatprep.mubr.f32.mxu0 %v661
      %919 = vmatmul.mubr.f32.gmra.mrb[0].mxu0 %v629
      %v920 = vpop.f32.mrb[0].mxu0
      %v921 = vadd.f32 0.0, %v920
      %v922 = vpop.f32.mrb[0].mxu0
      %923 = vmatprep.mubr.f32.mxu0 %v662
      %924 = vmatmul.mubr.f32.gmra.mrb[0].mxu0 %v630
      %v925 = vpop.f32.mrb[0].mxu0
      %v926 = vadd.f32 0.0, %v925
      %v927 = vpop.f32.mrb[0].mxu0
      %928 = vmatprep.mubr.f32.mxu0 %v663
      %929 = vmatmul.mubr.f32.gmra.mrb[0].mxu0 %v631
      %v930 = vpop.f32.mrb[0].mxu0
      %v931 = vadd.f32 0.0, %v930
      %v932 = vpop.f32.mrb[0].mxu0
      %933 = vmatprep.mubr.f32.mxu0 %v664
      %934 = vmatmul.mubr.f32.gmra.mrb[0].mxu0 %v632
      %v935 = vpop.f32.mrb[0].mxu0
      %v936 = vadd.f32 0.0, %v935
      %v937 = vpop.f32.mrb[0].mxu0
      %938 = vmatprep.mubr.f32.mxu0 %v665
      %939 = vmatmul.mubr.f32.gmra.mrb[0].mxu0 %v633
      %v940 = vpop.f32.mrb[0].mxu0
      %v941 = vadd.f32 0.0, %v940
      %v942 = vpop.f32.mrb[0].mxu0
      %943 = vmatprep.mubr.f32.mxu0 %v666
      %944 = vmatmul.mubr.f32.gmra.mrb[0].mxu0 %v634
      %v945 = vpop.f32.mrb[0].mxu0
      %v946 = vadd.f32 0.0, %v945
      %v947 = vpop.f32.mrb[0].mxu0
      %948 = vmatprep.mubr.f32.mxu0 %v667
      %949 = vmatmul.mubr.f32.gmra.mrb[0].mxu0 %v635
      %v950 = vpop.f32.mrb[0].mxu0
      %v951 = vadd.f32 0.0, %v950
      %v952 = vpop.f32.mrb[0].mxu0
      %953 = vmatprep.mubr.f32.mxu0 %v668
      %954 = vmatmul.mubr.f32.gmra.mrb[0].mxu0 %v636
      %v955 = vpop.f32.mrb[0].mxu0
      %v956 = vadd.f32 0.0, %v955
      %v957 = vpop.f32.mrb[0].mxu0
      %958 = vmatprep.mubr.f32.mxu0 %v669
      %959 = vmatmul.mubr.f32.gmra.mrb[0].mxu0 %v637
      %v960 = vpop.f32.mrb[0].mxu0
      %v961 = vadd.f32 0.0, %v960
      %v962 = vpop.f32.mrb[0].mxu0
      %963 = vmatprep.mubr.f32.mxu0 %v670
      %964 = vmatmul.mubr.f32.gmra.mrb[0].mxu0 %v638
      %v965 = vpop.f32.mrb[0].mxu0
      %v966 = vadd.f32 0.0, %v965
      %v967 = vpop.f32.mrb[0].mxu0
      %968 = vmatprep.mubr.f32.mxu0 %v671
      %969 = vmatmul.mubr.f32.gmra.mrb[0].mxu0 %v639
      %v970 = vpop.f32.mrb[0].mxu0
      %v971 = vadd.f32 0.0, %v970
      %v972 = vpop.f32.mrb[0].mxu0
      %973 = vmatprep.mubr.f32.mxu0 %v672
      %974 = vmatmul.mubr.f32.gmra.mrb[0].mxu0 %v640
      %v975 = vpop.f32.mrb[0].mxu0
      %v976 = vadd.f32 0.0, %v975
      %v977 = vpop.f32.mrb[0].mxu0
      %978 = vdwg.mxu0
      %979 = vmatprep.subr.mxu0 0.0
      %980 = vmatpush1.msra.mxu0 %v738
      %981 = vmatprep.subr.mxu0 0.0
      %982 = vmatpush1.msra.mxu0 %v739
      %983 = vmatprep.subr.mxu0 0.0
      %984 = vmatpush1.msra.mxu0 %v740
      %985 = vmatprep.subr.mxu0 0.0
      %986 = vmatpush1.msra.mxu0 %v741
      %987 = vmatprep.subr.mxu0 0.0
      %988 = vmatpush1.msra.mxu0 %v742
      %989 = vmatprep.subr.mxu0 0.0
      %990 = vmatpush1.msra.mxu0 %v743
      %991 = vmatprep.subr.mxu0 0.0
      %992 = vmatpush1.msra.mxu0 %v744
      %993 = vmatprep.subr.mxu0 0.0
      %994 = vmatpush1.msra.mxu0 %v745
      %995 = vmatprep.subr.mxu0 0.0
      %996 = vmatpush1.msra.mxu0 %v746
      %997 = vmatprep.subr.mxu0 0.0
      %998 = vmatpush1.msra.mxu0 %v747
      %999 = vmatprep.subr.mxu0 0.0
      %1000 = vmatpush1.msra.mxu0 %v748
      %1001 = vmatprep.subr.mxu0 0.0
      %1002 = vmatpush1.msra.mxu0 %v749
      %1003 = vmatprep.subr.mxu0 0.0
      %1004 = vmatpush1.msra.mxu0 %v750
      %1005 = vmatprep.subr.mxu0 0.0
      %1006 = vmatpush1.msra.mxu0 %v751
      %1007 = vmatprep.subr.mxu0 0.0
      %1008 = vmatpush1.msra.mxu0 %v752
      %1009 = vmatprep.subr.mxu0 0.0
      %1010 = vmatpush1.msra.mxu0 %v753
      %1011 = vmatprep.subr.mxu0 0.0
      %1012 = vmatpush1.msra.mxu0 0.0
      %1013 = vmatprep.subr.mxu0 0.0
      %1014 = vmatpush1.msra.mxu0 0.0
      %1015 = vmatprep.subr.mxu0 0.0
      %1016 = vmatpush1.msra.mxu0 0.0
      %1017 = vmatprep.subr.mxu0 0.0
      %1018 = vmatpush1.msra.mxu0 0.0
      %1019 = vmatprep.subr.mxu0 0.0
      %1020 = vmatpush1.msra.mxu0 0.0
      %1021 = vmatprep.subr.mxu0 0.0
      %1022 = vmatpush1.msra.mxu0 0.0
      %1023 = vmatprep.subr.mxu0 0.0
      %1024 = vmatpush1.msra.mxu0 0.0
      %1025 = vmatprep.subr.mxu0 0.0
      %1026 = vmatpush1.msra.mxu0 0.0
      %1027 = vmatprep.subr.mxu0 0.0
      %1028 = vmatpush1.msra.mxu0 0.0
      %1029 = vmatprep.subr.mxu0 0.0
      %1030 = vmatpush1.msra.mxu0 0.0
      %1031 = vmatprep.subr.mxu0 0.0
      %1032 = vmatpush1.msra.mxu0 0.0
      %1033 = vmatprep.subr.mxu0 0.0
      %1034 = vmatpush1.msra.mxu0 0.0
      %1035 = vmatprep.subr.mxu0 0.0
      %1036 = vmatpush1.msra.mxu0 0.0
      %1037 = vmatprep.subr.mxu0 0.0
      %1038 = vmatpush1.msra.mxu0 0.0
      %1039 = vmatprep.subr.mxu0 0.0
      %1040 = vmatpush1.msra.mxu0 0.0
      %1041 = vmatprep.subr.mxu0 0.0
      %1042 = vmatpush1.msra.mxu0 0.0
      %1043 = vmatprep.mubr.f32.mxu0 0.0
      %1044 = vmatmul.mubr.f32.gmra.mrb[0].mxu0 %v673
      %v1045 = vpop.f32.mrb[0].mxu0
      %v1046 = vadd.f32 %v821, %v1045
      %v1047 = vpop.f32.mrb[0].mxu0
      %1048 = vmatprep.mubr.f32.mxu0 0.0
      %1049 = vmatmul.mubr.f32.gmra.mrb[0].mxu0 %v674
      %v1050 = vpop.f32.mrb[0].mxu0
      %v1051 = vadd.f32 %v826, %v1050
      %v1052 = vpop.f32.mrb[0].mxu0
      %1053 = vmatprep.mubr.f32.mxu0 0.0
      %1054 = vmatmul.mubr.f32.gmra.mrb[0].mxu0 %v675
      %v1055 = vpop.f32.mrb[0].mxu0
      %v1056 = vadd.f32 %v831, %v1055
      %v1057 = vpop.f32.mrb[0].mxu0
      %1058 = vmatprep.mubr.f32.mxu0 0.0
      %1059 = vmatmul.mubr.f32.gmra.mrb[0].mxu0 %v676
      %v1060 = vpop.f32.mrb[0].mxu0
      %v1061 = vadd.f32 %v836, %v1060
      %v1062 = vpop.f32.mrb[0].mxu0
      %1063 = vmatprep.mubr.f32.mxu0 0.0
      %1064 = vmatmul.mubr.f32.gmra.mrb[0].mxu0 %v677
      %v1065 = vpop.f32.mrb[0].mxu0
      %v1066 = vadd.f32 %v841, %v1065
      %v1067 = vpop.f32.mrb[0].mxu0
      %1068 = vmatprep.mubr.f32.mxu0 0.0
      %1069 = vmatmul.mubr.f32.gmra.mrb[0].mxu0 %v678
      %v1070 = vpop.f32.mrb[0].mxu0
      %v1071 = vadd.f32 %v846, %v1070
      %v1072 = vpop.f32.mrb[0].mxu0
      %1073 = vmatprep.mubr.f32.mxu0 0.0
      %1074 = vmatmul.mubr.f32.gmra.mrb[0].mxu0 %v679
      %v1075 = vpop.f32.mrb[0].mxu0
      %v1076 = vadd.f32 %v851, %v1075
      %v1077 = vpop.f32.mrb[0].mxu0
      %1078 = vmatprep.mubr.f32.mxu0 0.0
      %1079 = vmatmul.mubr.f32.gmra.mrb[0].mxu0 %v680
      %v1080 = vpop.f32.mrb[0].mxu0
      %v1081 = vadd.f32 %v856, %v1080
      %v1082 = vpop.f32.mrb[0].mxu0
      %1083 = vmatprep.mubr.f32.mxu0 0.0
      %1084 = vmatmul.mubr.f32.gmra.mrb[0].mxu0 %v681
      %v1085 = vpop.f32.mrb[0].mxu0
      %v1086 = vadd.f32 %v861, %v1085
      %v1087 = vpop.f32.mrb[0].mxu0
      %1088 = vmatprep.mubr.f32.mxu0 0.0
      %1089 = vmatmul.mubr.f32.gmra.mrb[0].mxu0 %v682
      %v1090 = vpop.f32.mrb[0].mxu0
      %v1091 = vadd.f32 %v866, %v1090
      %v1092 = vpop.f32.mrb[0].mxu0
      %1093 = vmatprep.mubr.f32.mxu0 0.0
      %1094 = vmatmul.mubr.f32.gmra.mrb[0].mxu0 %v683
      %v1095 = vpop.f32.mrb[0].mxu0
      %v1096 = vadd.f32 %v871, %v1095
      %v1097 = vpop.f32.mrb[0].mxu0
      %1098 = vmatprep.mubr.f32.mxu0 0.0
      %1099 = vmatmul.mubr.f32.gmra.mrb[0].mxu0 %v684
      %v1100 = vpop.f32.mrb[0].mxu0
      %v1101 = vadd.f32 %v876, %v1100
      %v1102 = vpop.f32.mrb[0].mxu0
      %1103 = vmatprep.mubr.f32.mxu0 0.0
      %1104 = vmatmul.mubr.f32.gmra.mrb[0].mxu0 %v685
      %v1105 = vpop.f32.mrb[0].mxu0
      %v1106 = vadd.f32 %v881, %v1105
      %v1107 = vpop.f32.mrb[0].mxu0
      %1108 = vmatprep.mubr.f32.mxu0 0.0
      %1109 = vmatmul.mubr.f32.gmra.mrb[0].mxu0 %v686
      %v1110 = vpop.f32.mrb[0].mxu0
      %v1111 = vadd.f32 %v886, %v1110
      %v1112 = vpop.f32.mrb[0].mxu0
      %1113 = vmatprep.mubr.f32.mxu0 0.0
      %1114 = vmatmul.mubr.f32.gmra.mrb[0].mxu0 %v687
      %v1115 = vpop.f32.mrb[0].mxu0
      %v1116 = vadd.f32 %v891, %v1115
      %v1117 = vpop.f32.mrb[0].mxu0
      %1118 = vmatprep.mubr.f32.mxu0 0.0
      %1119 = vmatmul.mubr.f32.gmra.mrb[0].mxu0 %v688
      %v1120 = vpop.f32.mrb[0].mxu0
      %v1121 = vadd.f32 %v896, %v1120
      %v1122 = vpop.f32.mrb[0].mxu0
      %1123 = vmatprep.mubr.f32.mxu0 0.0
      %1124 = vmatmul.mubr.f32.gmra.mrb[0].mxu0 %v689
      %v1125 = vpop.f32.mrb[0].mxu0
      %v1126 = vadd.f32 %v901, %v1125
      %v1127 = vpop.f32.mrb[0].mxu0
      %1128 = vmatprep.mubr.f32.mxu0 0.0
      %1129 = vmatmul.mubr.f32.gmra.mrb[0].mxu0 %v690
      %v1130 = vpop.f32.mrb[0].mxu0
      %v1131 = vadd.f32 %v906, %v1130
      %v1132 = vpop.f32.mrb[0].mxu0
      %1133 = vmatprep.mubr.f32.mxu0 0.0
      %1134 = vmatmul.mubr.f32.gmra.mrb[0].mxu0 %v691
      %v1135 = vpop.f32.mrb[0].mxu0
      %v1136 = vadd.f32 %v911, %v1135
      %v1137 = vpop.f32.mrb[0].mxu0
      %1138 = vmatprep.mubr.f32.mxu0 0.0
      %1139 = vmatmul.mubr.f32.gmra.mrb[0].mxu0 %v692
      %v1140 = vpop.f32.mrb[0].mxu0
      %v1141 = vadd.f32 %v916, %v1140
      %v1142 = vpop.f32.mrb[0].mxu0
      %1143 = vmatprep.mubr.f32.mxu0 0.0
      %1144 = vmatmul.mubr.f32.gmra.mrb[0].mxu0 %v693
      %v1145 = vpop.f32.mrb[0].mxu0
      %v1146 = vadd.f32 %v921, %v1145
      %v1147 = vpop.f32.mrb[0].mxu0
      %1148 = vmatprep.mubr.f32.mxu0 0.0
      %1149 = vmatmul.mubr.f32.gmra.mrb[0].mxu0 %v694
      %v1150 = vpop.f32.mrb[0].mxu0
      %v1151 = vadd.f32 %v926, %v1150
      %v1152 = vpop.f32.mrb[0].mxu0
      %1153 = vmatprep.mubr.f32.mxu0 0.0
      %1154 = vmatmul.mubr.f32.gmra.mrb[0].mxu0 %v695
      %v1155 = vpop.f32.mrb[0].mxu0
      %v1156 = vadd.f32 %v931, %v1155
      %v1157 = vpop.f32.mrb[0].mxu0
      %1158 = vmatprep.mubr.f32.mxu0 0.0
      %1159 = vmatmul.mubr.f32.gmra.mrb[0].mxu0 %v696
      %v1160 = vpop.f32.mrb[0].mxu0
      %v1161 = vadd.f32 %v936, %v1160
      %v1162 = vpop.f32.mrb[0].mxu0
      %1163 = vmatprep.mubr.f32.mxu0 0.0
      %1164 = vmatmul.mubr.f32.gmra.mrb[0].mxu0 %v697
      %v1165 = vpop.f32.mrb[0].mxu0
      %v1166 = vadd.f32 %v941, %v1165
      %v1167 = vpop.f32.mrb[0].mxu0
      %1168 = vmatprep.mubr.f32.mxu0 0.0
      %1169 = vmatmul.mubr.f32.gmra.mrb[0].mxu0 %v698
      %v1170 = vpop.f32.mrb[0].mxu0
      %v1171 = vadd.f32 %v946, %v1170
      %v1172 = vpop.f32.mrb[0].mxu0
      %1173 = vmatprep.mubr.f32.mxu0 0.0
      %1174 = vmatmul.mubr.f32.gmra.mrb[0].mxu0 %v699
      %v1175 = vpop.f32.mrb[0].mxu0
      %v1176 = vadd.f32 %v951, %v1175
      %v1177 = vpop.f32.mrb[0].mxu0
      %1178 = vmatprep.mubr.f32.mxu0 0.0
      %1179 = vmatmul.mubr.f32.gmra.mrb[0].mxu0 %v700
      %v1180 = vpop.f32.mrb[0].mxu0
      %v1181 = vadd.f32 %v956, %v1180
      %v1182 = vpop.f32.mrb[0].mxu0
      %1183 = vmatprep.mubr.f32.mxu0 0.0
      %1184 = vmatmul.mubr.f32.gmra.mrb[0].mxu0 %v701
      %v1185 = vpop.f32.mrb[0].mxu0
      %v1186 = vadd.f32 %v961, %v1185
      %v1187 = vpop.f32.mrb[0].mxu0
      %1188 = vmatprep.mubr.f32.mxu0 0.0
      %1189 = vmatmul.mubr.f32.gmra.mrb[0].mxu0 %v702
      %v1190 = vpop.f32.mrb[0].mxu0
      %v1191 = vadd.f32 %v966, %v1190
      %v1192 = vpop.f32.mrb[0].mxu0
      %1193 = vmatprep.mubr.f32.mxu0 0.0
      %1194 = vmatmul.mubr.f32.gmra.mrb[0].mxu0 %v703
      %v1195 = vpop.f32.mrb[0].mxu0
      %v1196 = vadd.f32 %v971, %v1195
      %v1197 = vpop.f32.mrb[0].mxu0
      %1198 = vmatprep.mubr.f32.mxu0 0.0
      %1199 = vmatmul.mubr.f32.gmra.mrb[0].mxu0 %v704
      %v1200 = vpop.f32.mrb[0].mxu0
      %v1201 = vadd.f32 %v976, %v1200
      %v1202 = vpop.f32.mrb[0].mxu0
      %1203 = vdwg.mxu0
      %1204 = vmatprep.subr.mxu0 0.0
      %1205 = vmatpush1.msra.mxu0 %v561
      %1206 = vmatprep.subr.mxu0 0.0
      %1207 = vmatpush1.msra.mxu0 %v562
      %1208 = vmatprep.subr.mxu0 0.0
      %1209 = vmatpush1.msra.mxu0 %v563
      %1210 = vmatprep.subr.mxu0 0.0
      %1211 = vmatpush1.msra.mxu0 %v564
      %1212 = vmatprep.subr.mxu0 0.0
      %1213 = vmatpush1.msra.mxu0 %v565
      %1214 = vmatprep.subr.mxu0 0.0
      %1215 = vmatpush1.msra.mxu0 %v566
      %1216 = vmatprep.subr.mxu0 0.0
      %1217 = vmatpush1.msra.mxu0 %v567
      %1218 = vmatprep.subr.mxu0 0.0
      %1219 = vmatpush1.msra.mxu0 %v568
      %1220 = vmatprep.subr.mxu0 0.0
      %1221 = vmatpush1.msra.mxu0 %v569
      %1222 = vmatprep.subr.mxu0 0.0
      %1223 = vmatpush1.msra.mxu0 %v570
      %1224 = vmatprep.subr.mxu0 0.0
      %1225 = vmatpush1.msra.mxu0 %v571
      %1226 = vmatprep.subr.mxu0 0.0
      %1227 = vmatpush1.msra.mxu0 %v572
      %1228 = vmatprep.subr.mxu0 0.0
      %1229 = vmatpush1.msra.mxu0 %v573
      %1230 = vmatprep.subr.mxu0 0.0
      %1231 = vmatpush1.msra.mxu0 %v574
      %1232 = vmatprep.subr.mxu0 0.0
      %1233 = vmatpush1.msra.mxu0 %v575
      %1234 = vmatprep.subr.mxu0 0.0
      %1235 = vmatpush1.msra.mxu0 %v576
      %1236 = vmatprep.subr.mxu0 0.0
      %1237 = vmatpush1.msra.mxu0 %v577
      %1238 = vmatprep.subr.mxu0 0.0
      %1239 = vmatpush1.msra.mxu0 %v578
      %1240 = vmatprep.subr.mxu0 0.0
      %1241 = vmatpush1.msra.mxu0 %v579
      %1242 = vmatprep.subr.mxu0 0.0
      %1243 = vmatpush1.msra.mxu0 %v580
      %1244 = vmatprep.subr.mxu0 0.0
      %1245 = vmatpush1.msra.mxu0 %v581
      %1246 = vmatprep.subr.mxu0 0.0
      %1247 = vmatpush1.msra.mxu0 %v582
      %1248 = vmatprep.subr.mxu0 0.0
      %1249 = vmatpush1.msra.mxu0 %v583
      %1250 = vmatprep.subr.mxu0 0.0
      %1251 = vmatpush1.msra.mxu0 %v584
      %1252 = vmatprep.subr.mxu0 0.0
      %1253 = vmatpush1.msra.mxu0 %v585
      %1254 = vmatprep.subr.mxu0 0.0
      %1255 = vmatpush1.msra.mxu0 %v586
      %1256 = vmatprep.subr.mxu0 0.0
      %1257 = vmatpush1.msra.mxu0 %v587
      %1258 = vmatprep.subr.mxu0 0.0
      %1259 = vmatpush1.msra.mxu0 %v588
      %1260 = vmatprep.subr.mxu0 0.0
      %1261 = vmatpush1.msra.mxu0 %v589
      %1262 = vmatprep.subr.mxu0 0.0
      %1263 = vmatpush1.msra.mxu0 %v590
      %1264 = vmatprep.subr.mxu0 0.0
      %1265 = vmatpush1.msra.mxu0 %v591
      %1266 = vmatprep.subr.mxu0 0.0
      %1267 = vmatpush1.msra.mxu0 %v592
      %1268 = vmatprep.mubr.f32.mxu0 %v497
      %1269 = vmatmul.mubr.f32.gmra.mrb[0].mxu0 %v465
      %v1270 = vpop.f32.mrb[0].mxu0
      %v1271 = vadd.f32 %v1046, %v1270
      %v1272 = vpop.f32.mrb[0].mxu0
      %1273 = vmatprep.mubr.f32.mxu0 %v498
      %1274 = vmatmul.mubr.f32.gmra.mrb[0].mxu0 %v466
      %v1275 = vpop.f32.mrb[0].mxu0
      %v1276 = vadd.f32 %v1051, %v1275
      %v1277 = vpop.f32.mrb[0].mxu0
      %1278 = vmatprep.mubr.f32.mxu0 %v499
      %1279 = vmatmul.mubr.f32.gmra.mrb[0].mxu0 %v467
      %v1280 = vpop.f32.mrb[0].mxu0
      %v1281 = vadd.f32 %v1056, %v1280
      %v1282 = vpop.f32.mrb[0].mxu0
      %1283 = vmatprep.mubr.f32.mxu0 %v500
      %1284 = vmatmul.mubr.f32.gmra.mrb[0].mxu0 %v468
      %v1285 = vpop.f32.mrb[0].mxu0
      %v1286 = vadd.f32 %v1061, %v1285
      %v1287 = vpop.f32.mrb[0].mxu0
      %1288 = vmatprep.mubr.f32.mxu0 %v501
      %1289 = vmatmul.mubr.f32.gmra.mrb[0].mxu0 %v469
      %v1290 = vpop.f32.mrb[0].mxu0
      %v1291 = vadd.f32 %v1066, %v1290
      %v1292 = vpop.f32.mrb[0].mxu0
      %1293 = vmatprep.mubr.f32.mxu0 %v502
      %1294 = vmatmul.mubr.f32.gmra.mrb[0].mxu0 %v470
      %v1295 = vpop.f32.mrb[0].mxu0
      %v1296 = vadd.f32 %v1071, %v1295
      %v1297 = vpop.f32.mrb[0].mxu0
      %1298 = vmatprep.mubr.f32.mxu0 %v503
      %1299 = vmatmul.mubr.f32.gmra.mrb[0].mxu0 %v471
      %v1300 = vpop.f32.mrb[0].mxu0
      %v1301 = vadd.f32 %v1076, %v1300
      %v1302 = vpop.f32.mrb[0].mxu0
      %1303 = vmatprep.mubr.f32.mxu0 %v504
      %1304 = vmatmul.mubr.f32.gmra.mrb[0].mxu0 %v472
      %v1305 = vpop.f32.mrb[0].mxu0
      %v1306 = vadd.f32 %v1081, %v1305
      %v1307 = vpop.f32.mrb[0].mxu0
      %1308 = vmatprep.mubr.f32.mxu0 %v505
      %1309 = vmatmul.mubr.f32.gmra.mrb[0].mxu0 %v473
      %v1310 = vpop.f32.mrb[0].mxu0
      %v1311 = vadd.f32 %v1086, %v1310
      %v1312 = vpop.f32.mrb[0].mxu0
      %1313 = vmatprep.mubr.f32.mxu0 %v506
      %1314 = vmatmul.mubr.f32.gmra.mrb[0].mxu0 %v474
      %v1315 = vpop.f32.mrb[0].mxu0
      %v1316 = vadd.f32 %v1091, %v1315
      %v1317 = vpop.f32.mrb[0].mxu0
      %1318 = vmatprep.mubr.f32.mxu0 %v507
      %1319 = vmatmul.mubr.f32.gmra.mrb[0].mxu0 %v475
      %v1320 = vpop.f32.mrb[0].mxu0
      %v1321 = vadd.f32 %v1096, %v1320
      %v1322 = vpop.f32.mrb[0].mxu0
      %1323 = vmatprep.mubr.f32.mxu0 %v508
      %1324 = vmatmul.mubr.f32.gmra.mrb[0].mxu0 %v476
      %v1325 = vpop.f32.mrb[0].mxu0
      %v1326 = vadd.f32 %v1101, %v1325
      %v1327 = vpop.f32.mrb[0].mxu0
      %1328 = vmatprep.mubr.f32.mxu0 %v509
      %1329 = vmatmul.mubr.f32.gmra.mrb[0].mxu0 %v477
      %v1330 = vpop.f32.mrb[0].mxu0
      %v1331 = vadd.f32 %v1106, %v1330
      %v1332 = vpop.f32.mrb[0].mxu0
      %1333 = vmatprep.mubr.f32.mxu0 %v510
      %1334 = vmatmul.mubr.f32.gmra.mrb[0].mxu0 %v478
      %v1335 = vpop.f32.mrb[0].mxu0
      %v1336 = vadd.f32 %v1111, %v1335
      %v1337 = vpop.f32.mrb[0].mxu0
      %1338 = vmatprep.mubr.f32.mxu0 %v511
      %1339 = vmatmul.mubr.f32.gmra.mrb[0].mxu0 %v479
      %v1340 = vpop.f32.mrb[0].mxu0
      %v1341 = vadd.f32 %v1116, %v1340
      %v1342 = vpop.f32.mrb[0].mxu0
      %1343 = vmatprep.mubr.f32.mxu0 %v512
      %1344 = vmatmul.mubr.f32.gmra.mrb[0].mxu0 %v480
      %v1345 = vpop.f32.mrb[0].mxu0
      %v1346 = vadd.f32 %v1121, %v1345
      %v1347 = vpop.f32.mrb[0].mxu0
      %1348 = vmatprep.mubr.f32.mxu0 %v513
      %1349 = vmatmul.mubr.f32.gmra.mrb[0].mxu0 %v481
      %v1350 = vpop.f32.mrb[0].mxu0
      %v1351 = vadd.f32 %v1126, %v1350
      %v1352 = vpop.f32.mrb[0].mxu0
      %1353 = vmatprep.mubr.f32.mxu0 %v514
      %1354 = vmatmul.mubr.f32.gmra.mrb[0].mxu0 %v482
      %v1355 = vpop.f32.mrb[0].mxu0
      %v1356 = vadd.f32 %v1131, %v1355
      %v1357 = vpop.f32.mrb[0].mxu0
      %1358 = vmatprep.mubr.f32.mxu0 %v515
      %1359 = vmatmul.mubr.f32.gmra.mrb[0].mxu0 %v483
      %v1360 = vpop.f32.mrb[0].mxu0
      %v1361 = vadd.f32 %v1136, %v1360
      %v1362 = vpop.f32.mrb[0].mxu0
      %1363 = vmatprep.mubr.f32.mxu0 %v516
      %1364 = vmatmul.mubr.f32.gmra.mrb[0].mxu0 %v484
      %v1365 = vpop.f32.mrb[0].mxu0
      %v1366 = vadd.f32 %v1141, %v1365
      %v1367 = vpop.f32.mrb[0].mxu0
      %1368 = vmatprep.mubr.f32.mxu0 %v517
      %1369 = vmatmul.mubr.f32.gmra.mrb[0].mxu0 %v485
      %v1370 = vpop.f32.mrb[0].mxu0
      %v1371 = vadd.f32 %v1146, %v1370
      %v1372 = vpop.f32.mrb[0].mxu0
      %1373 = vmatprep.mubr.f32.mxu0 %v518
      %1374 = vmatmul.mubr.f32.gmra.mrb[0].mxu0 %v486
      %v1375 = vpop.f32.mrb[0].mxu0
      %v1376 = vadd.f32 %v1151, %v1375
      %v1377 = vpop.f32.mrb[0].mxu0
      %1378 = vmatprep.mubr.f32.mxu0 %v519
      %1379 = vmatmul.mubr.f32.gmra.mrb[0].mxu0 %v487
      %v1380 = vpop.f32.mrb[0].mxu0
      %v1381 = vadd.f32 %v1156, %v1380
      %v1382 = vpop.f32.mrb[0].mxu0
      %1383 = vmatprep.mubr.f32.mxu0 %v520
      %1384 = vmatmul.mubr.f32.gmra.mrb[0].mxu0 %v488
      %v1385 = vpop.f32.mrb[0].mxu0
      %v1386 = vadd.f32 %v1161, %v1385
      %v1387 = vpop.f32.mrb[0].mxu0
      %1388 = vmatprep.mubr.f32.mxu0 %v521
      %1389 = vmatmul.mubr.f32.gmra.mrb[0].mxu0 %v489
      %v1390 = vpop.f32.mrb[0].mxu0
      %v1391 = vadd.f32 %v1166, %v1390
      %v1392 = vpop.f32.mrb[0].mxu0
      %1393 = vmatprep.mubr.f32.mxu0 %v522
      %1394 = vmatmul.mubr.f32.gmra.mrb[0].mxu0 %v490
      %v1395 = vpop.f32.mrb[0].mxu0
      %v1396 = vadd.f32 %v1171, %v1395
      %v1397 = vpop.f32.mrb[0].mxu0
      %1398 = vmatprep.mubr.f32.mxu0 %v523
      %1399 = vmatmul.mubr.f32.gmra.mrb[0].mxu0 %v491
      %v1400 = vpop.f32.mrb[0].mxu0
      %v1401 = vadd.f32 %v1176, %v1400
      %v1402 = vpop.f32.mrb[0].mxu0
      %1403 = vmatprep.mubr.f32.mxu0 %v524
      %1404 = vmatmul.mubr.f32.gmra.mrb[0].mxu0 %v492
      %v1405 = vpop.f32.mrb[0].mxu0
      %v1406 = vadd.f32 %v1181, %v1405
      %v1407 = vpop.f32.mrb[0].mxu0
      %1408 = vmatprep.mubr.f32.mxu0 %v525
      %1409 = vmatmul.mubr.f32.gmra.mrb[0].mxu0 %v493
      %v1410 = vpop.f32.mrb[0].mxu0
      %v1411 = vadd.f32 %v1186, %v1410
      %v1412 = vpop.f32.mrb[0].mxu0
      %1413 = vmatprep.mubr.f32.mxu0 %v526
      %1414 = vmatmul.mubr.f32.gmra.mrb[0].mxu0 %v494
      %v1415 = vpop.f32.mrb[0].mxu0
      %v1416 = vadd.f32 %v1191, %v1415
      %v1417 = vpop.f32.mrb[0].mxu0
      %1418 = vmatprep.mubr.f32.mxu0 %v527
      %1419 = vmatmul.mubr.f32.gmra.mrb[0].mxu0 %v495
      %v1420 = vpop.f32.mrb[0].mxu0
      %v1421 = vadd.f32 %v1196, %v1420
      %v1422 = vpop.f32.mrb[0].mxu0
      %1423 = vmatprep.mubr.f32.mxu0 %v528
      %1424 = vmatmul.mubr.f32.gmra.mrb[0].mxu0 %v496
      %v1425 = vpop.f32.mrb[0].mxu0
      %v1426 = vadd.f32 %v1201, %v1425
      %v1427 = vpop.f32.mrb[0].mxu0
      %1428 = vdwg.mxu0
      %1429 = vmatprep.subr.mxu0 0.0
      %1430 = vmatpush1.msra.mxu0 %v593
      %1431 = vmatprep.subr.mxu0 0.0
      %1432 = vmatpush1.msra.mxu0 %v594
      %1433 = vmatprep.subr.mxu0 0.0
      %1434 = vmatpush1.msra.mxu0 %v595
      %1435 = vmatprep.subr.mxu0 0.0
      %1436 = vmatpush1.msra.mxu0 %v596
      %1437 = vmatprep.subr.mxu0 0.0
      %1438 = vmatpush1.msra.mxu0 %v597
      %1439 = vmatprep.subr.mxu0 0.0
      %1440 = vmatpush1.msra.mxu0 %v598
      %1441 = vmatprep.subr.mxu0 0.0
      %1442 = vmatpush1.msra.mxu0 %v599
      %1443 = vmatprep.subr.mxu0 0.0
      %1444 = vmatpush1.msra.mxu0 %v600
      %1445 = vmatprep.subr.mxu0 0.0
      %1446 = vmatpush1.msra.mxu0 %v601
      %1447 = vmatprep.subr.mxu0 0.0
      %1448 = vmatpush1.msra.mxu0 %v602
      %1449 = vmatprep.subr.mxu0 0.0
      %1450 = vmatpush1.msra.mxu0 %v603
      %1451 = vmatprep.subr.mxu0 0.0
      %1452 = vmatpush1.msra.mxu0 %v604
      %1453 = vmatprep.subr.mxu0 0.0
      %1454 = vmatpush1.msra.mxu0 %v605
      %1455 = vmatprep.subr.mxu0 0.0
      %1456 = vmatpush1.msra.mxu0 %v606
      %1457 = vmatprep.subr.mxu0 0.0
      %1458 = vmatpush1.msra.mxu0 %v607
      %1459 = vmatprep.subr.mxu0 0.0
      %1460 = vmatpush1.msra.mxu0 %v608
      %1461 = vmatprep.subr.mxu0 0.0
      %1462 = vmatpush1.msra.mxu0 0.0
      %1463 = vmatprep.subr.mxu0 0.0
      %1464 = vmatpush1.msra.mxu0 0.0
      %1465 = vmatprep.subr.mxu0 0.0
      %1466 = vmatpush1.msra.mxu0 0.0
      %1467 = vmatprep.subr.mxu0 0.0
      %1468 = vmatpush1.msra.mxu0 0.0
      %1469 = vmatprep.subr.mxu0 0.0
      %1470 = vmatpush1.msra.mxu0 0.0
      %1471 = vmatprep.subr.mxu0 0.0
      %1472 = vmatpush1.msra.mxu0 0.0
      %1473 = vmatprep.subr.mxu0 0.0
      %1474 = vmatpush1.msra.mxu0 0.0
      %1475 = vmatprep.subr.mxu0 0.0
      %1476 = vmatpush1.msra.mxu0 0.0
      %1477 = vmatprep.subr.mxu0 0.0
      %1478 = vmatpush1.msra.mxu0 0.0
      %1479 = vmatprep.subr.mxu0 0.0
      %1480 = vmatpush1.msra.mxu0 0.0
      %1481 = vmatprep.subr.mxu0 0.0
      %1482 = vmatpush1.msra.mxu0 0.0
      %1483 = vmatprep.subr.mxu0 0.0
      %1484 = vmatpush1.msra.mxu0 0.0
      %1485 = vmatprep.subr.mxu0 0.0
      %1486 = vmatpush1.msra.mxu0 0.0
      %1487 = vmatprep.subr.mxu0 0.0
      %1488 = vmatpush1.msra.mxu0 0.0
      %1489 = vmatprep.subr.mxu0 0.0
      %1490 = vmatpush1.msra.mxu0 0.0
      %1491 = vmatprep.subr.mxu0 0.0
      %1492 = vmatpush1.msra.mxu0 0.0
      %1493 = vmatprep.mubr.f32.mxu0 0.0
      %1494 = vmatmul.mubr.f32.gmra.mrb[0].mxu0 %v529
      %v1495 = vpop.f32.mrb[0].mxu0
      %v1496 = vadd.f32 %v1271, %v1495
      %v1497 = vpop.f32.mrb[0].mxu0
      %1498 = vmatprep.mubr.f32.mxu0 0.0
      %1499 = vmatmul.mubr.f32.gmra.mrb[0].mxu0 %v530
      %v1500 = vpop.f32.mrb[0].mxu0
      %v1501 = vadd.f32 %v1276, %v1500
      %v1502 = vpop.f32.mrb[0].mxu0
      %1503 = vmatprep.mubr.f32.mxu0 0.0
      %1504 = vmatmul.mubr.f32.gmra.mrb[0].mxu0 %v531
      %v1505 = vpop.f32.mrb[0].mxu0
      %v1506 = vadd.f32 %v1281, %v1505
      %v1507 = vpop.f32.mrb[0].mxu0
      %1508 = vmatprep.mubr.f32.mxu0 0.0
      %1509 = vmatmul.mubr.f32.gmra.mrb[0].mxu0 %v532
      %v1510 = vpop.f32.mrb[0].mxu0
      %v1511 = vadd.f32 %v1286, %v1510
      %v1512 = vpop.f32.mrb[0].mxu0
      %1513 = vmatprep.mubr.f32.mxu0 0.0
      %1514 = vmatmul.mubr.f32.gmra.mrb[0].mxu0 %v533
      %v1515 = vpop.f32.mrb[0].mxu0
      %v1516 = vadd.f32 %v1291, %v1515
      %v1517 = vpop.f32.mrb[0].mxu0
      %1518 = vmatprep.mubr.f32.mxu0 0.0
      %1519 = vmatmul.mubr.f32.gmra.mrb[0].mxu0 %v534
      %v1520 = vpop.f32.mrb[0].mxu0
      %v1521 = vadd.f32 %v1296, %v1520
      %v1522 = vpop.f32.mrb[0].mxu0
      %1523 = vmatprep.mubr.f32.mxu0 0.0
      %1524 = vmatmul.mubr.f32.gmra.mrb[0].mxu0 %v535
      %v1525 = vpop.f32.mrb[0].mxu0
      %v1526 = vadd.f32 %v1301, %v1525
      %v1527 = vpop.f32.mrb[0].mxu0
      %1528 = vmatprep.mubr.f32.mxu0 0.0
      %1529 = vmatmul.mubr.f32.gmra.mrb[0].mxu0 %v536
      %v1530 = vpop.f32.mrb[0].mxu0
      %v1531 = vadd.f32 %v1306, %v1530
      %v1532 = vpop.f32.mrb[0].mxu0
      %1533 = vmatprep.mubr.f32.mxu0 0.0
      %1534 = vmatmul.mubr.f32.gmra.mrb[0].mxu0 %v537
      %v1535 = vpop.f32.mrb[0].mxu0
      %v1536 = vadd.f32 %v1311, %v1535
      %v1537 = vpop.f32.mrb[0].mxu0
      %1538 = vmatprep.mubr.f32.mxu0 0.0
      %1539 = vmatmul.mubr.f32.gmra.mrb[0].mxu0 %v538
      %v1540 = vpop.f32.mrb[0].mxu0
      %v1541 = vadd.f32 %v1316, %v1540
      %v1542 = vpop.f32.mrb[0].mxu0
      %1543 = vmatprep.mubr.f32.mxu0 0.0
      %1544 = vmatmul.mubr.f32.gmra.mrb[0].mxu0 %v539
      %v1545 = vpop.f32.mrb[0].mxu0
      %v1546 = vadd.f32 %v1321, %v1545
      %v1547 = vpop.f32.mrb[0].mxu0
      %1548 = vmatprep.mubr.f32.mxu0 0.0
      %1549 = vmatmul.mubr.f32.gmra.mrb[0].mxu0 %v540
      %v1550 = vpop.f32.mrb[0].mxu0
      %v1551 = vadd.f32 %v1326, %v1550
      %v1552 = vpop.f32.mrb[0].mxu0
      %1553 = vmatprep.mubr.f32.mxu0 0.0
      %1554 = vmatmul.mubr.f32.gmra.mrb[0].mxu0 %v541
      %v1555 = vpop.f32.mrb[0].mxu0
      %v1556 = vadd.f32 %v1331, %v1555
      %v1557 = vpop.f32.mrb[0].mxu0
      %1558 = vmatprep.mubr.f32.mxu0 0.0
      %1559 = vmatmul.mubr.f32.gmra.mrb[0].mxu0 %v542
      %v1560 = vpop.f32.mrb[0].mxu0
      %v1561 = vadd.f32 %v1336, %v1560
      %v1562 = vpop.f32.mrb[0].mxu0
      %1563 = vmatprep.mubr.f32.mxu0 0.0
      %1564 = vmatmul.mubr.f32.gmra.mrb[0].mxu0 %v543
      %v1565 = vpop.f32.mrb[0].mxu0
      %v1566 = vadd.f32 %v1341, %v1565
      %v1567 = vpop.f32.mrb[0].mxu0
      %1568 = vmatprep.mubr.f32.mxu0 0.0
      %1569 = vmatmul.mubr.f32.gmra.mrb[0].mxu0 %v544
      %v1570 = vpop.f32.mrb[0].mxu0
      %v1571 = vadd.f32 %v1346, %v1570
      %v1572 = vpop.f32.mrb[0].mxu0
      %1573 = vmatprep.mubr.f32.mxu0 0.0
      %1574 = vmatmul.mubr.f32.gmra.mrb[0].mxu0 %v545
      %v1575 = vpop.f32.mrb[0].mxu0
      %v1576 = vadd.f32 %v1351, %v1575
      %v1577 = vpop.f32.mrb[0].mxu0
      %1578 = vmatprep.mubr.f32.mxu0 0.0
      %1579 = vmatmul.mubr.f32.gmra.mrb[0].mxu0 %v546
      %v1580 = vpop.f32.mrb[0].mxu0
      %v1581 = vadd.f32 %v1356, %v1580
      %v1582 = vpop.f32.mrb[0].mxu0
      %1583 = vmatprep.mubr.f32.mxu0 0.0
      %1584 = vmatmul.mubr.f32.gmra.mrb[0].mxu0 %v547
      %v1585 = vpop.f32.mrb[0].mxu0
      %v1586 = vadd.f32 %v1361, %v1585
      %v1587 = vpop.f32.mrb[0].mxu0
      %1588 = vmatprep.mubr.f32.mxu0 0.0
      %1589 = vmatmul.mubr.f32.gmra.mrb[0].mxu0 %v548
      %v1590 = vpop.f32.mrb[0].mxu0
      %v1591 = vadd.f32 %v1366, %v1590
      %v1592 = vpop.f32.mrb[0].mxu0
      %1593 = vmatprep.mubr.f32.mxu0 0.0
      %1594 = vmatmul.mubr.f32.gmra.mrb[0].mxu0 %v549
      %v1595 = vpop.f32.mrb[0].mxu0
      %v1596 = vadd.f32 %v1371, %v1595
      %v1597 = vpop.f32.mrb[0].mxu0
      %1598 = vmatprep.mubr.f32.mxu0 0.0
      %1599 = vmatmul.mubr.f32.gmra.mrb[0].mxu0 %v550
      %v1600 = vpop.f32.mrb[0].mxu0
      %v1601 = vadd.f32 %v1376, %v1600
      %v1602 = vpop.f32.mrb[0].mxu0
      %1603 = vmatprep.mubr.f32.mxu0 0.0
      %1604 = vmatmul.mubr.f32.gmra.mrb[0].mxu0 %v551
      %v1605 = vpop.f32.mrb[0].mxu0
      %v1606 = vadd.f32 %v1381, %v1605
      %v1607 = vpop.f32.mrb[0].mxu0
      %1608 = vmatprep.mubr.f32.mxu0 0.0
      %1609 = vmatmul.mubr.f32.gmra.mrb[0].mxu0 %v552
      %v1610 = vpop.f32.mrb[0].mxu0
      %v1611 = vadd.f32 %v1386, %v1610
      %v1612 = vpop.f32.mrb[0].mxu0
      %1613 = vmatprep.mubr.f32.mxu0 0.0
      %1614 = vmatmul.mubr.f32.gmra.mrb[0].mxu0 %v553
      %v1615 = vpop.f32.mrb[0].mxu0
      %v1616 = vadd.f32 %v1391, %v1615
      %v1617 = vpop.f32.mrb[0].mxu0
      %1618 = vmatprep.mubr.f32.mxu0 0.0
      %1619 = vmatmul.mubr.f32.gmra.mrb[0].mxu0 %v554
      %v1620 = vpop.f32.mrb[0].mxu0
      %v1621 = vadd.f32 %v1396, %v1620
      %v1622 = vpop.f32.mrb[0].mxu0
      %1623 = vmatprep.mubr.f32.mxu0 0.0
      %1624 = vmatmul.mubr.f32.gmra.mrb[0].mxu0 %v555
      %v1625 = vpop.f32.mrb[0].mxu0
      %v1626 = vadd.f32 %v1401, %v1625
      %v1627 = vpop.f32.mrb[0].mxu0
      %1628 = vmatprep.mubr.f32.mxu0 0.0
      %1629 = vmatmul.mubr.f32.gmra.mrb[0].mxu0 %v556
      %v1630 = vpop.f32.mrb[0].mxu0
      %v1631 = vadd.f32 %v1406, %v1630
      %v1632 = vpop.f32.mrb[0].mxu0
      %1633 = vmatprep.mubr.f32.mxu0 0.0
      %1634 = vmatmul.mubr.f32.gmra.mrb[0].mxu0 %v557
      %v1635 = vpop.f32.mrb[0].mxu0
      %v1636 = vadd.f32 %v1411, %v1635
      %v1637 = vpop.f32.mrb[0].mxu0
      %1638 = vmatprep.mubr.f32.mxu0 0.0
      %1639 = vmatmul.mubr.f32.gmra.mrb[0].mxu0 %v558
      %v1640 = vpop.f32.mrb[0].mxu0
      %v1641 = vadd.f32 %v1416, %v1640
      %v1642 = vpop.f32.mrb[0].mxu0
      %1643 = vmatprep.mubr.f32.mxu0 0.0
      %1644 = vmatmul.mubr.f32.gmra.mrb[0].mxu0 %v559
      %v1645 = vpop.f32.mrb[0].mxu0
      %v1646 = vadd.f32 %v1421, %v1645
      %v1647 = vpop.f32.mrb[0].mxu0
      %1648 = vmatprep.mubr.f32.mxu0 0.0
      %1649 = vmatmul.mubr.f32.gmra.mrb[0].mxu0 %v560
      %v1650 = vpop.f32.mrb[0].mxu0
      %v1651 = vadd.f32 %v1426, %v1650
      %v1652 = vpop.f32.mrb[0].mxu0
      %1653 = vdwg.mxu0
      %s1654 = scalar_lea.vmem [#allocation2], 48
      %v1655 = vld [vmem:[%s1654] sm:$0xff]
      %v1656 = vld [vmem:[%s1654 + $0x8] sm:$0xff]
      %v1657 = vld [vmem:[%s1654 + $0x18] sm:$0xff]
      %v1658 = vld [vmem:[%s1654 + $0x20] sm:$0xff]
      %v1659 = vld [vmem:[%s1654 + $0x30] sm:$0xff]
      %v1660 = vld [vmem:[%s1654 + $0x38] sm:$0xff]
      %v1661 = vld [vmem:[%s1654 + $0x48] sm:$0xff]
      %v1662 = vld [vmem:[%s1654 + $0x50] sm:$0xff]
      %v1663 = vld [vmem:[%s1654 + $0x60] sm:$0xff]
      %v1664 = vld [vmem:[%s1654 + $0x68] sm:$0xff]
      %v1665 = vld [vmem:[%s1654 + $0x78] sm:$0xff]
      %v1666 = vld [vmem:[%s1654 + $0x80] sm:$0xff]
      %v1667 = vld [vmem:[%s1654 + $0x90] sm:$0xff]
      %v1668 = vld [vmem:[%s1654 + $0x98] sm:$0xff]
      %v1669 = vld [vmem:[%s1654 + $0xa8] sm:$0xff]
      %v1670 = vld [vmem:[%s1654 + $0xb0] sm:$0xff]
      %v1671 = vld [vmem:[%s1654 + $0xc0] sm:$0xff]
      %v1672 = vld [vmem:[%s1654 + $0xc8] sm:$0xff]
      %v1673 = vld [vmem:[%s1654 + $0xd8] sm:$0xff]
      %v1674 = vld [vmem:[%s1654 + $0xe0] sm:$0xff]
      %v1675 = vld [vmem:[%s1654 + $0xf0] sm:$0xff]
      %v1676 = vld [vmem:[%s1654 + $0xf8] sm:$0xff]
      %v1677 = vld [vmem:[%s1654 + $0x108] sm:$0xff]
      %v1678 = vld [vmem:[%s1654 + $0x110] sm:$0xff]
      %v1679 = vld [vmem:[%s1654 + $0x120] sm:$0xff]
      %v1680 = vld [vmem:[%s1654 + $0x128] sm:$0xff]
      %v1681 = vld [vmem:[%s1654 + $0x138] sm:$0xff]
      %v1682 = vld [vmem:[%s1654 + $0x140] sm:$0xff]
      %v1683 = vld [vmem:[%s1654 + $0x150] sm:$0xff]
      %v1684 = vld [vmem:[%s1654 + $0x158] sm:$0xff]
      %v1685 = vld [vmem:[%s1654 + $0x168] sm:$0xff]
      %v1686 = vld [vmem:[%s1654 + $0x170] sm:$0xff]
      %v1687 = vld [vmem:[%s1654 + $0x1] sm:$0xff]
      %v1688 = vld [vmem:[%s1654 + $0x9] sm:$0xff]
      %v1689 = vld [vmem:[%s1654 + $0x19] sm:$0xff]
      %v1690 = vld [vmem:[%s1654 + $0x21] sm:$0xff]
      %v1691 = vld [vmem:[%s1654 + $0x31] sm:$0xff]
      %v1692 = vld [vmem:[%s1654 + $0x39] sm:$0xff]
      %v1693 = vld [vmem:[%s1654 + $0x49] sm:$0xff]
      %v1694 = vld [vmem:[%s1654 + $0x51] sm:$0xff]
      %v1695 = vld [vmem:[%s1654 + $0x61] sm:$0xff]
      %v1696 = vld [vmem:[%s1654 + $0x69] sm:$0xff]
      %v1697 = vld [vmem:[%s1654 + $0x79] sm:$0xff]
      %v1698 = vld [vmem:[%s1654 + $0x81] sm:$0xff]
      %v1699 = vld [vmem:[%s1654 + $0x91] sm:$0xff]
      %v1700 = vld [vmem:[%s1654 + $0x99] sm:$0xff]
      %v1701 = vld [vmem:[%s1654 + $0xa9] sm:$0xff]
      %v1702 = vld [vmem:[%s1654 + $0xb1] sm:$0xff]
      %v1703 = vld [vmem:[%s1654 + $0xc1] sm:$0xff]
      %v1704 = vld [vmem:[%s1654 + $0xc9] sm:$0xff]
      %v1705 = vld [vmem:[%s1654 + $0xd9] sm:$0xff]
      %v1706 = vld [vmem:[%s1654 + $0xe1] sm:$0xff]
      %v1707 = vld [vmem:[%s1654 + $0xf1] sm:$0xff]
      %v1708 = vld [vmem:[%s1654 + $0xf9] sm:$0xff]
      %v1709 = vld [vmem:[%s1654 + $0x109] sm:$0xff]
      %v1710 = vld [vmem:[%s1654 + $0x111] sm:$0xff]
      %v1711 = vld [vmem:[%s1654 + $0x121] sm:$0xff]
      %v1712 = vld [vmem:[%s1654 + $0x129] sm:$0xff]
      %v1713 = vld [vmem:[%s1654 + $0x139] sm:$0xff]
      %v1714 = vld [vmem:[%s1654 + $0x141] sm:$0xff]
      %v1715 = vld [vmem:[%s1654 + $0x151] sm:$0xff]
      %v1716 = vld [vmem:[%s1654 + $0x159] sm:$0xff]
      %v1717 = vld [vmem:[%s1654 + $0x169] sm:$0xff]
      %v1718 = vld [vmem:[%s1654 + $0x171] sm:$0xff]
      %v1719 = vld [vmem:[%s1654 + $0x2] sm:$0xff]
      %v1720 = vld [vmem:[%s1654 + $0xa] sm:$0xff]
      %v1721 = vld [vmem:[%s1654 + $0x1a] sm:$0xff]
      %v1722 = vld [vmem:[%s1654 + $0x22] sm:$0xff]
      %v1723 = vld [vmem:[%s1654 + $0x32] sm:$0xff]
      %v1724 = vld [vmem:[%s1654 + $0x3a] sm:$0xff]
      %v1725 = vld [vmem:[%s1654 + $0x4a] sm:$0xff]
      %v1726 = vld [vmem:[%s1654 + $0x52] sm:$0xff]
      %v1727 = vld [vmem:[%s1654 + $0x62] sm:$0xff]
      %v1728 = vld [vmem:[%s1654 + $0x6a] sm:$0xff]
      %v1729 = vld [vmem:[%s1654 + $0x7a] sm:$0xff]
      %v1730 = vld [vmem:[%s1654 + $0x82] sm:$0xff]
      %v1731 = vld [vmem:[%s1654 + $0x92] sm:$0xff]
      %v1732 = vld [vmem:[%s1654 + $0x9a] sm:$0xff]
      %v1733 = vld [vmem:[%s1654 + $0xaa] sm:$0xff]
      %v1734 = vld [vmem:[%s1654 + $0xb2] sm:$0xff]
      %v1735 = vld [vmem:[%s1654 + $0xc2] sm:$0xff]
      %v1736 = vld [vmem:[%s1654 + $0xca] sm:$0xff]
      %v1737 = vld [vmem:[%s1654 + $0xda] sm:$0xff]
      %v1738 = vld [vmem:[%s1654 + $0xe2] sm:$0xff]
      %v1739 = vld [vmem:[%s1654 + $0xf2] sm:$0xff]
      %v1740 = vld [vmem:[%s1654 + $0xfa] sm:$0xff]
      %v1741 = vld [vmem:[%s1654 + $0x10a] sm:$0xff]
      %v1742 = vld [vmem:[%s1654 + $0x112] sm:$0xff]
      %v1743 = vld [vmem:[%s1654 + $0x122] sm:$0xff]
      %v1744 = vld [vmem:[%s1654 + $0x12a] sm:$0xff]
      %v1745 = vld [vmem:[%s1654 + $0x13a] sm:$0xff]
      %v1746 = vld [vmem:[%s1654 + $0x142] sm:$0xff]
      %v1747 = vld [vmem:[%s1654 + $0x152] sm:$0xff]
      %v1748 = vld [vmem:[%s1654 + $0x15a] sm:$0xff]
      %v1749 = vld [vmem:[%s1654 + $0x16a] sm:$0xff]
      %v1750 = vld [vmem:[%s1654 + $0x172] sm:$0xff]
      %s1751 = scalar_lea.vmem %s3, 768
      %v1752 = vld [vmem:[%s1751] sm:$0xff]
      %v1753 = vld [vmem:[%s1751 + $0x8] sm:$0xff]
      %v1754 = vld [vmem:[%s1751 + $0x10] sm:$0xff]
      %v1755 = vld [vmem:[%s1751 + $0x18] sm:$0xff]
      %v1756 = vld [vmem:[%s1751 + $0x20] sm:$0xff]
      %v1757 = vld [vmem:[%s1751 + $0x28] sm:$0xff]
      %v1758 = vld [vmem:[%s1751 + $0x30] sm:$0xff]
      %v1759 = vld [vmem:[%s1751 + $0x38] sm:$0xff]
      %v1760 = vld [vmem:[%s1751 + $0x40] sm:$0xff]
      %v1761 = vld [vmem:[%s1751 + $0x48] sm:$0xff]
      %v1762 = vld [vmem:[%s1751 + $0x50] sm:$0xff]
      %v1763 = vld [vmem:[%s1751 + $0x58] sm:$0xff]
      %v1764 = vld [vmem:[%s1751 + $0x60] sm:$0xff]
      %v1765 = vld [vmem:[%s1751 + $0x68] sm:$0xff]
      %v1766 = vld [vmem:[%s1751 + $0x70] sm:$0xff]
      %v1767 = vld [vmem:[%s1751 + $0x78] sm:$0xff]
      %v1768 = vld [vmem:[%s1751 + $0x80] sm:$0xff]
      %v1769 = vld [vmem:[%s1751 + $0x88] sm:$0xff]
      %v1770 = vld [vmem:[%s1751 + $0x90] sm:$0xff]
      %v1771 = vld [vmem:[%s1751 + $0x98] sm:$0xff]
      %v1772 = vld [vmem:[%s1751 + $0xa0] sm:$0xff]
      %v1773 = vld [vmem:[%s1751 + $0xa8] sm:$0xff]
      %v1774 = vld [vmem:[%s1751 + $0xb0] sm:$0xff]
      %v1775 = vld [vmem:[%s1751 + $0xb8] sm:$0xff]
      %v1776 = vld [vmem:[%s1751 + $0xc0] sm:$0xff]
      %v1777 = vld [vmem:[%s1751 + $0xc8] sm:$0xff]
      %v1778 = vld [vmem:[%s1751 + $0xd0] sm:$0xff]
      %v1779 = vld [vmem:[%s1751 + $0xd8] sm:$0xff]
      %v1780 = vld [vmem:[%s1751 + $0xe0] sm:$0xff]
      %v1781 = vld [vmem:[%s1751 + $0xe8] sm:$0xff]
      %v1782 = vld [vmem:[%s1751 + $0xf0] sm:$0xff]
      %v1783 = vld [vmem:[%s1751 + $0xf8] sm:$0xff]
      %v1784 = vld [vmem:[%s1751 + $0x100] sm:$0xff]
      %v1785 = vld [vmem:[%s1751 + $0x108] sm:$0xff]
      %v1786 = vld [vmem:[%s1751 + $0x110] sm:$0xff]
      %v1787 = vld [vmem:[%s1751 + $0x118] sm:$0xff]
      %v1788 = vld [vmem:[%s1751 + $0x120] sm:$0xff]
      %v1789 = vld [vmem:[%s1751 + $0x128] sm:$0xff]
      %v1790 = vld [vmem:[%s1751 + $0x130] sm:$0xff]
      %v1791 = vld [vmem:[%s1751 + $0x138] sm:$0xff]
      %v1792 = vld [vmem:[%s1751 + $0x140] sm:$0xff]
      %v1793 = vld [vmem:[%s1751 + $0x148] sm:$0xff]
      %v1794 = vld [vmem:[%s1751 + $0x150] sm:$0xff]
      %v1795 = vld [vmem:[%s1751 + $0x158] sm:$0xff]
      %v1796 = vld [vmem:[%s1751 + $0x160] sm:$0xff]
      %v1797 = vld [vmem:[%s1751 + $0x168] sm:$0xff]
      %v1798 = vld [vmem:[%s1751 + $0x170] sm:$0xff]
      %v1799 = vld [vmem:[%s1751 + $0x178] sm:$0xff]
      %1800 = vmatprep.subr.mxu0 0.0
      %1801 = vmatpush1.msra.mxu0 %v1752
      %1802 = vmatprep.subr.mxu0 0.0
      %1803 = vmatpush1.msra.mxu0 %v1753
      %1804 = vmatprep.subr.mxu0 0.0
      %1805 = vmatpush1.msra.mxu0 %v1754
      %1806 = vmatprep.subr.mxu0 0.0
      %1807 = vmatpush1.msra.mxu0 %v1755
      %1808 = vmatprep.subr.mxu0 0.0
      %1809 = vmatpush1.msra.mxu0 %v1756
      %1810 = vmatprep.subr.mxu0 0.0
      %1811 = vmatpush1.msra.mxu0 %v1757
      %1812 = vmatprep.subr.mxu0 0.0
      %1813 = vmatpush1.msra.mxu0 %v1758
      %1814 = vmatprep.subr.mxu0 0.0
      %1815 = vmatpush1.msra.mxu0 %v1759
      %1816 = vmatprep.subr.mxu0 0.0
      %1817 = vmatpush1.msra.mxu0 %v1760
      %1818 = vmatprep.subr.mxu0 0.0
      %1819 = vmatpush1.msra.mxu0 %v1761
      %1820 = vmatprep.subr.mxu0 0.0
      %1821 = vmatpush1.msra.mxu0 %v1762
      %1822 = vmatprep.subr.mxu0 0.0
      %1823 = vmatpush1.msra.mxu0 %v1763
      %1824 = vmatprep.subr.mxu0 0.0
      %1825 = vmatpush1.msra.mxu0 %v1764
      %1826 = vmatprep.subr.mxu0 0.0
      %1827 = vmatpush1.msra.mxu0 %v1765
      %1828 = vmatprep.subr.mxu0 0.0
      %1829 = vmatpush1.msra.mxu0 %v1766
      %1830 = vmatprep.subr.mxu0 0.0
      %1831 = vmatpush1.msra.mxu0 %v1767
      %1832 = vmatprep.subr.mxu0 0.0
      %1833 = vmatpush1.msra.mxu0 %v1768
      %1834 = vmatprep.subr.mxu0 0.0
      %1835 = vmatpush1.msra.mxu0 %v1769
      %1836 = vmatprep.subr.mxu0 0.0
      %1837 = vmatpush1.msra.mxu0 %v1770
      %1838 = vmatprep.subr.mxu0 0.0
      %1839 = vmatpush1.msra.mxu0 %v1771
      %1840 = vmatprep.subr.mxu0 0.0
      %1841 = vmatpush1.msra.mxu0 %v1772
      %1842 = vmatprep.subr.mxu0 0.0
      %1843 = vmatpush1.msra.mxu0 %v1773
      %1844 = vmatprep.subr.mxu0 0.0
      %1845 = vmatpush1.msra.mxu0 %v1774
      %1846 = vmatprep.subr.mxu0 0.0
      %1847 = vmatpush1.msra.mxu0 %v1775
      %1848 = vmatprep.subr.mxu0 0.0
      %1849 = vmatpush1.msra.mxu0 %v1776
      %1850 = vmatprep.subr.mxu0 0.0
      %1851 = vmatpush1.msra.mxu0 %v1777
      %1852 = vmatprep.subr.mxu0 0.0
      %1853 = vmatpush1.msra.mxu0 %v1778
      %1854 = vmatprep.subr.mxu0 0.0
      %1855 = vmatpush1.msra.mxu0 %v1779
      %1856 = vmatprep.subr.mxu0 0.0
      %1857 = vmatpush1.msra.mxu0 %v1780
      %1858 = vmatprep.subr.mxu0 0.0
      %1859 = vmatpush1.msra.mxu0 %v1781
      %1860 = vmatprep.subr.mxu0 0.0
      %1861 = vmatpush1.msra.mxu0 %v1782
      %1862 = vmatprep.subr.mxu0 0.0
      %1863 = vmatpush1.msra.mxu0 %v1783
      %1864 = vmatprep.mubr.f32.mxu0 %v1687
      %1865 = vmatmul.mubr.f32.gmra.mrb[0].mxu0 %v1655
      %v1866 = vpop.f32.mrb[0].mxu0
      %v1867 = vadd.f32 0.0, %v1866
      %v1868 = vpop.f32.mrb[0].mxu0
      %1869 = vmatprep.mubr.f32.mxu0 %v1688
      %1870 = vmatmul.mubr.f32.gmra.mrb[0].mxu0 %v1656
      %v1871 = vpop.f32.mrb[0].mxu0
      %v1872 = vadd.f32 0.0, %v1871
      %v1873 = vpop.f32.mrb[0].mxu0
      %1874 = vmatprep.mubr.f32.mxu0 %v1689
      %1875 = vmatmul.mubr.f32.gmra.mrb[0].mxu0 %v1657
      %v1876 = vpop.f32.mrb[0].mxu0
      %v1877 = vadd.f32 0.0, %v1876
      %v1878 = vpop.f32.mrb[0].mxu0
      %1879 = vmatprep.mubr.f32.mxu0 %v1690
      %1880 = vmatmul.mubr.f32.gmra.mrb[0].mxu0 %v1658
      %v1881 = vpop.f32.mrb[0].mxu0
      %v1882 = vadd.f32 0.0, %v1881
      %v1883 = vpop.f32.mrb[0].mxu0
      %1884 = vmatprep.mubr.f32.mxu0 %v1691
      %1885 = vmatmul.mubr.f32.gmra.mrb[0].mxu0 %v1659
      %v1886 = vpop.f32.mrb[0].mxu0
      %v1887 = vadd.f32 0.0, %v1886
      %v1888 = vpop.f32.mrb[0].mxu0
      %1889 = vmatprep.mubr.f32.mxu0 %v1692
      %1890 = vmatmul.mubr.f32.gmra.mrb[0].mxu0 %v1660
      %v1891 = vpop.f32.mrb[0].mxu0
      %v1892 = vadd.f32 0.0, %v1891
      %v1893 = vpop.f32.mrb[0].mxu0
      %1894 = vmatprep.mubr.f32.mxu0 %v1693
      %1895 = vmatmul.mubr.f32.gmra.mrb[0].mxu0 %v1661
      %v1896 = vpop.f32.mrb[0].mxu0
      %v1897 = vadd.f32 0.0, %v1896
      %v1898 = vpop.f32.mrb[0].mxu0
      %1899 = vmatprep.mubr.f32.mxu0 %v1694
      %1900 = vmatmul.mubr.f32.gmra.mrb[0].mxu0 %v1662
      %v1901 = vpop.f32.mrb[0].mxu0
      %v1902 = vadd.f32 0.0, %v1901
      %v1903 = vpop.f32.mrb[0].mxu0
      %1904 = vmatprep.mubr.f32.mxu0 %v1695
      %1905 = vmatmul.mubr.f32.gmra.mrb[0].mxu0 %v1663
      %v1906 = vpop.f32.mrb[0].mxu0
      %v1907 = vadd.f32 0.0, %v1906
      %v1908 = vpop.f32.mrb[0].mxu0
      %1909 = vmatprep.mubr.f32.mxu0 %v1696
      %1910 = vmatmul.mubr.f32.gmra.mrb[0].mxu0 %v1664
      %v1911 = vpop.f32.mrb[0].mxu0
      %v1912 = vadd.f32 0.0, %v1911
      %v1913 = vpop.f32.mrb[0].mxu0
      %1914 = vmatprep.mubr.f32.mxu0 %v1697
      %1915 = vmatmul.mubr.f32.gmra.mrb[0].mxu0 %v1665
      %v1916 = vpop.f32.mrb[0].mxu0
      %v1917 = vadd.f32 0.0, %v1916
      %v1918 = vpop.f32.mrb[0].mxu0
      %1919 = vmatprep.mubr.f32.mxu0 %v1698
      %1920 = vmatmul.mubr.f32.gmra.mrb[0].mxu0 %v1666
      %v1921 = vpop.f32.mrb[0].mxu0
      %v1922 = vadd.f32 0.0, %v1921
      %v1923 = vpop.f32.mrb[0].mxu0
      %1924 = vmatprep.mubr.f32.mxu0 %v1699
      %1925 = vmatmul.mubr.f32.gmra.mrb[0].mxu0 %v1667
      %v1926 = vpop.f32.mrb[0].mxu0
      %v1927 = vadd.f32 0.0, %v1926
      %v1928 = vpop.f32.mrb[0].mxu0
      %1929 = vmatprep.mubr.f32.mxu0 %v1700
      %1930 = vmatmul.mubr.f32.gmra.mrb[0].mxu0 %v1668
      %v1931 = vpop.f32.mrb[0].mxu0
      %v1932 = vadd.f32 0.0, %v1931
      %v1933 = vpop.f32.mrb[0].mxu0
      %1934 = vmatprep.mubr.f32.mxu0 %v1701
      %1935 = vmatmul.mubr.f32.gmra.mrb[0].mxu0 %v1669
      %v1936 = vpop.f32.mrb[0].mxu0
      %v1937 = vadd.f32 0.0, %v1936
      %v1938 = vpop.f32.mrb[0].mxu0
      %1939 = vmatprep.mubr.f32.mxu0 %v1702
      %1940 = vmatmul.mubr.f32.gmra.mrb[0].mxu0 %v1670
      %v1941 = vpop.f32.mrb[0].mxu0
      %v1942 = vadd.f32 0.0, %v1941
      %v1943 = vpop.f32.mrb[0].mxu0
      %1944 = vmatprep.mubr.f32.mxu0 %v1703
      %1945 = vmatmul.mubr.f32.gmra.mrb[0].mxu0 %v1671
      %v1946 = vpop.f32.mrb[0].mxu0
      %v1947 = vadd.f32 0.0, %v1946
      %v1948 = vpop.f32.mrb[0].mxu0
      %1949 = vmatprep.mubr.f32.mxu0 %v1704
      %1950 = vmatmul.mubr.f32.gmra.mrb[0].mxu0 %v1672
      %v1951 = vpop.f32.mrb[0].mxu0
      %v1952 = vadd.f32 0.0, %v1951
      %v1953 = vpop.f32.mrb[0].mxu0
      %1954 = vmatprep.mubr.f32.mxu0 %v1705
      %1955 = vmatmul.mubr.f32.gmra.mrb[0].mxu0 %v1673
      %v1956 = vpop.f32.mrb[0].mxu0
      %v1957 = vadd.f32 0.0, %v1956
      %v1958 = vpop.f32.mrb[0].mxu0
      %1959 = vmatprep.mubr.f32.mxu0 %v1706
      %1960 = vmatmul.mubr.f32.gmra.mrb[0].mxu0 %v1674
      %v1961 = vpop.f32.mrb[0].mxu0
      %v1962 = vadd.f32 0.0, %v1961
      %v1963 = vpop.f32.mrb[0].mxu0
      %1964 = vmatprep.mubr.f32.mxu0 %v1707
      %1965 = vmatmul.mubr.f32.gmra.mrb[0].mxu0 %v1675
      %v1966 = vpop.f32.mrb[0].mxu0
      %v1967 = vadd.f32 0.0, %v1966
      %v1968 = vpop.f32.mrb[0].mxu0
      %1969 = vmatprep.mubr.f32.mxu0 %v1708
      %1970 = vmatmul.mubr.f32.gmra.mrb[0].mxu0 %v1676
      %v1971 = vpop.f32.mrb[0].mxu0
      %v1972 = vadd.f32 0.0, %v1971
      %v1973 = vpop.f32.mrb[0].mxu0
      %1974 = vmatprep.mubr.f32.mxu0 %v1709
      %1975 = vmatmul.mubr.f32.gmra.mrb[0].mxu0 %v1677
      %v1976 = vpop.f32.mrb[0].mxu0
      %v1977 = vadd.f32 0.0, %v1976
      %v1978 = vpop.f32.mrb[0].mxu0
      %1979 = vmatprep.mubr.f32.mxu0 %v1710
      %1980 = vmatmul.mubr.f32.gmra.mrb[0].mxu0 %v1678
      %v1981 = vpop.f32.mrb[0].mxu0
      %v1982 = vadd.f32 0.0, %v1981
      %v1983 = vpop.f32.mrb[0].mxu0
      %1984 = vmatprep.mubr.f32.mxu0 %v1711
      %1985 = vmatmul.mubr.f32.gmra.mrb[0].mxu0 %v1679
      %v1986 = vpop.f32.mrb[0].mxu0
      %v1987 = vadd.f32 0.0, %v1986
      %v1988 = vpop.f32.mrb[0].mxu0
      %1989 = vmatprep.mubr.f32.mxu0 %v1712
      %1990 = vmatmul.mubr.f32.gmra.mrb[0].mxu0 %v1680
      %v1991 = vpop.f32.mrb[0].mxu0
      %v1992 = vadd.f32 0.0, %v1991
      %v1993 = vpop.f32.mrb[0].mxu0
      %1994 = vmatprep.mubr.f32.mxu0 %v1713
      %1995 = vmatmul.mubr.f32.gmra.mrb[0].mxu0 %v1681
      %v1996 = vpop.f32.mrb[0].mxu0
      %v1997 = vadd.f32 0.0, %v1996
      %v1998 = vpop.f32.mrb[0].mxu0
      %1999 = vmatprep.mubr.f32.mxu0 %v1714
      %2000 = vmatmul.mubr.f32.gmra.mrb[0].mxu0 %v1682
      %v2001 = vpop.f32.mrb[0].mxu0
      %v2002 = vadd.f32 0.0, %v2001
      %v2003 = vpop.f32.mrb[0].mxu0
      %2004 = vmatprep.mubr.f32.mxu0 %v1715
      %2005 = vmatmul.mubr.f32.gmra.mrb[0].mxu0 %v1683
      %v2006 = vpop.f32.mrb[0].mxu0
      %v2007 = vadd.f32 0.0, %v2006
      %v2008 = vpop.f32.mrb[0].mxu0
      %2009 = vmatprep.mubr.f32.mxu0 %v1716
      %2010 = vmatmul.mubr.f32.gmra.mrb[0].mxu0 %v1684
      %v2011 = vpop.f32.mrb[0].mxu0
      %v2012 = vadd.f32 0.0, %v2011
      %v2013 = vpop.f32.mrb[0].mxu0
      %2014 = vmatprep.mubr.f32.mxu0 %v1717
      %2015 = vmatmul.mubr.f32.gmra.mrb[0].mxu0 %v1685
      %v2016 = vpop.f32.mrb[0].mxu0
      %v2017 = vadd.f32 0.0, %v2016
      %v2018 = vpop.f32.mrb[0].mxu0
      %2019 = vmatprep.mubr.f32.mxu0 %v1718
      %2020 = vmatmul.mubr.f32.gmra.mrb[0].mxu0 %v1686
      %v2021 = vpop.f32.mrb[0].mxu0
      %v2022 = vadd.f32 0.0, %v2021
      %v2023 = vpop.f32.mrb[0].mxu0
      %2024 = vdwg.mxu0
      %2025 = vmatprep.subr.mxu0 0.0
      %2026 = vmatpush1.msra.mxu0 %v1784
      %2027 = vmatprep.subr.mxu0 0.0
      %2028 = vmatpush1.msra.mxu0 %v1785
      %2029 = vmatprep.subr.mxu0 0.0
      %2030 = vmatpush1.msra.mxu0 %v1786
      %2031 = vmatprep.subr.mxu0 0.0
      %2032 = vmatpush1.msra.mxu0 %v1787
      %2033 = vmatprep.subr.mxu0 0.0
      %2034 = vmatpush1.msra.mxu0 %v1788
      %2035 = vmatprep.subr.mxu0 0.0
      %2036 = vmatpush1.msra.mxu0 %v1789
      %2037 = vmatprep.subr.mxu0 0.0
      %2038 = vmatpush1.msra.mxu0 %v1790
      %2039 = vmatprep.subr.mxu0 0.0
      %2040 = vmatpush1.msra.mxu0 %v1791
      %2041 = vmatprep.subr.mxu0 0.0
      %2042 = vmatpush1.msra.mxu0 %v1792
      %2043 = vmatprep.subr.mxu0 0.0
      %2044 = vmatpush1.msra.mxu0 %v1793
      %2045 = vmatprep.subr.mxu0 0.0
      %2046 = vmatpush1.msra.mxu0 %v1794
      %2047 = vmatprep.subr.mxu0 0.0
      %2048 = vmatpush1.msra.mxu0 %v1795
      %2049 = vmatprep.subr.mxu0 0.0
      %2050 = vmatpush1.msra.mxu0 %v1796
      %2051 = vmatprep.subr.mxu0 0.0
      %2052 = vmatpush1.msra.mxu0 %v1797
      %2053 = vmatprep.subr.mxu0 0.0
      %2054 = vmatpush1.msra.mxu0 %v1798
      %2055 = vmatprep.subr.mxu0 0.0
      %2056 = vmatpush1.msra.mxu0 %v1799
      %2057 = vmatprep.subr.mxu0 0.0
      %2058 = vmatpush1.msra.mxu0 0.0
      %2059 = vmatprep.subr.mxu0 0.0
      %2060 = vmatpush1.msra.mxu0 0.0
      %2061 = vmatprep.subr.mxu0 0.0
      %2062 = vmatpush1.msra.mxu0 0.0
      %2063 = vmatprep.subr.mxu0 0.0
      %2064 = vmatpush1.msra.mxu0 0.0
      %2065 = vmatprep.subr.mxu0 0.0
      %2066 = vmatpush1.msra.mxu0 0.0
      %2067 = vmatprep.subr.mxu0 0.0
      %2068 = vmatpush1.msra.mxu0 0.0
      %2069 = vmatprep.subr.mxu0 0.0
      %2070 = vmatpush1.msra.mxu0 0.0
      %2071 = vmatprep.subr.mxu0 0.0
      %2072 = vmatpush1.msra.mxu0 0.0
      %2073 = vmatprep.subr.mxu0 0.0
      %2074 = vmatpush1.msra.mxu0 0.0
      %2075 = vmatprep.subr.mxu0 0.0
      %2076 = vmatpush1.msra.mxu0 0.0
      %2077 = vmatprep.subr.mxu0 0.0
      %2078 = vmatpush1.msra.mxu0 0.0
      %2079 = vmatprep.subr.mxu0 0.0
      %2080 = vmatpush1.msra.mxu0 0.0
      %2081 = vmatprep.subr.mxu0 0.0
      %2082 = vmatpush1.msra.mxu0 0.0
      %2083 = vmatprep.subr.mxu0 0.0
      %2084 = vmatpush1.msra.mxu0 0.0
      %2085 = vmatprep.subr.mxu0 0.0
      %2086 = vmatpush1.msra.mxu0 0.0
      %2087 = vmatprep.subr.mxu0 0.0
      %2088 = vmatpush1.msra.mxu0 0.0
      %2089 = vmatprep.mubr.f32.mxu0 0.0
      %2090 = vmatmul.mubr.f32.gmra.mrb[0].mxu0 %v1719
      %v2091 = vpop.f32.mrb[0].mxu0
      %v2092 = vadd.f32 %v1867, %v2091
      %v2093 = vpop.f32.mrb[0].mxu0
      %2094 = vmatprep.mubr.f32.mxu0 0.0
      %2095 = vmatmul.mubr.f32.gmra.mrb[0].mxu0 %v1720
      %v2096 = vpop.f32.mrb[0].mxu0
      %v2097 = vadd.f32 %v1872, %v2096
      %v2098 = vpop.f32.mrb[0].mxu0
      %2099 = vmatprep.mubr.f32.mxu0 0.0
      %2100 = vmatmul.mubr.f32.gmra.mrb[0].mxu0 %v1721
      %v2101 = vpop.f32.mrb[0].mxu0
      %v2102 = vadd.f32 %v1877, %v2101
      %v2103 = vpop.f32.mrb[0].mxu0
      %2104 = vmatprep.mubr.f32.mxu0 0.0
      %2105 = vmatmul.mubr.f32.gmra.mrb[0].mxu0 %v1722
      %v2106 = vpop.f32.mrb[0].mxu0
      %v2107 = vadd.f32 %v1882, %v2106
      %v2108 = vpop.f32.mrb[0].mxu0
      %2109 = vmatprep.mubr.f32.mxu0 0.0
      %2110 = vmatmul.mubr.f32.gmra.mrb[0].mxu0 %v1723
      %v2111 = vpop.f32.mrb[0].mxu0
      %v2112 = vadd.f32 %v1887, %v2111
      %v2113 = vpop.f32.mrb[0].mxu0
      %2114 = vmatprep.mubr.f32.mxu0 0.0
      %2115 = vmatmul.mubr.f32.gmra.mrb[0].mxu0 %v1724
      %v2116 = vpop.f32.mrb[0].mxu0
      %v2117 = vadd.f32 %v1892, %v2116
      %v2118 = vpop.f32.mrb[0].mxu0
      %2119 = vmatprep.mubr.f32.mxu0 0.0
      %2120 = vmatmul.mubr.f32.gmra.mrb[0].mxu0 %v1725
      %v2121 = vpop.f32.mrb[0].mxu0
      %v2122 = vadd.f32 %v1897, %v2121
      %v2123 = vpop.f32.mrb[0].mxu0
      %2124 = vmatprep.mubr.f32.mxu0 0.0
      %2125 = vmatmul.mubr.f32.gmra.mrb[0].mxu0 %v1726
      %v2126 = vpop.f32.mrb[0].mxu0
      %v2127 = vadd.f32 %v1902, %v2126
      %v2128 = vpop.f32.mrb[0].mxu0
      %2129 = vmatprep.mubr.f32.mxu0 0.0
      %2130 = vmatmul.mubr.f32.gmra.mrb[0].mxu0 %v1727
      %v2131 = vpop.f32.mrb[0].mxu0
      %v2132 = vadd.f32 %v1907, %v2131
      %v2133 = vpop.f32.mrb[0].mxu0
      %2134 = vmatprep.mubr.f32.mxu0 0.0
      %2135 = vmatmul.mubr.f32.gmra.mrb[0].mxu0 %v1728
      %v2136 = vpop.f32.mrb[0].mxu0
      %v2137 = vadd.f32 %v1912, %v2136
      %v2138 = vpop.f32.mrb[0].mxu0
      %2139 = vmatprep.mubr.f32.mxu0 0.0
      %2140 = vmatmul.mubr.f32.gmra.mrb[0].mxu0 %v1729
      %v2141 = vpop.f32.mrb[0].mxu0
      %v2142 = vadd.f32 %v1917, %v2141
      %v2143 = vpop.f32.mrb[0].mxu0
      %2144 = vmatprep.mubr.f32.mxu0 0.0
      %2145 = vmatmul.mubr.f32.gmra.mrb[0].mxu0 %v1730
      %v2146 = vpop.f32.mrb[0].mxu0
      %v2147 = vadd.f32 %v1922, %v2146
      %v2148 = vpop.f32.mrb[0].mxu0
      %2149 = vmatprep.mubr.f32.mxu0 0.0
      %2150 = vmatmul.mubr.f32.gmra.mrb[0].mxu0 %v1731
      %v2151 = vpop.f32.mrb[0].mxu0
      %v2152 = vadd.f32 %v1927, %v2151
      %v2153 = vpop.f32.mrb[0].mxu0
      %2154 = vmatprep.mubr.f32.mxu0 0.0
      %2155 = vmatmul.mubr.f32.gmra.mrb[0].mxu0 %v1732
      %v2156 = vpop.f32.mrb[0].mxu0
      %v2157 = vadd.f32 %v1932, %v2156
      %v2158 = vpop.f32.mrb[0].mxu0
      %2159 = vmatprep.mubr.f32.mxu0 0.0
      %2160 = vmatmul.mubr.f32.gmra.mrb[0].mxu0 %v1733
      %v2161 = vpop.f32.mrb[0].mxu0
      %v2162 = vadd.f32 %v1937, %v2161
      %v2163 = vpop.f32.mrb[0].mxu0
      %2164 = vmatprep.mubr.f32.mxu0 0.0
      %2165 = vmatmul.mubr.f32.gmra.mrb[0].mxu0 %v1734
      %v2166 = vpop.f32.mrb[0].mxu0
      %v2167 = vadd.f32 %v1942, %v2166
      %v2168 = vpop.f32.mrb[0].mxu0
      %2169 = vmatprep.mubr.f32.mxu0 0.0
      %2170 = vmatmul.mubr.f32.gmra.mrb[0].mxu0 %v1735
      %v2171 = vpop.f32.mrb[0].mxu0
      %v2172 = vadd.f32 %v1947, %v2171
      %v2173 = vpop.f32.mrb[0].mxu0
      %2174 = vmatprep.mubr.f32.mxu0 0.0
      %2175 = vmatmul.mubr.f32.gmra.mrb[0].mxu0 %v1736
      %v2176 = vpop.f32.mrb[0].mxu0
      %v2177 = vadd.f32 %v1952, %v2176
      %v2178 = vpop.f32.mrb[0].mxu0
      %2179 = vmatprep.mubr.f32.mxu0 0.0
      %2180 = vmatmul.mubr.f32.gmra.mrb[0].mxu0 %v1737
      %v2181 = vpop.f32.mrb[0].mxu0
      %v2182 = vadd.f32 %v1957, %v2181
      %v2183 = vpop.f32.mrb[0].mxu0
      %2184 = vmatprep.mubr.f32.mxu0 0.0
      %2185 = vmatmul.mubr.f32.gmra.mrb[0].mxu0 %v1738
      %v2186 = vpop.f32.mrb[0].mxu0
      %v2187 = vadd.f32 %v1962, %v2186
      %v2188 = vpop.f32.mrb[0].mxu0
      %2189 = vmatprep.mubr.f32.mxu0 0.0
      %2190 = vmatmul.mubr.f32.gmra.mrb[0].mxu0 %v1739
      %v2191 = vpop.f32.mrb[0].mxu0
      %v2192 = vadd.f32 %v1967, %v2191
      %v2193 = vpop.f32.mrb[0].mxu0
      %2194 = vmatprep.mubr.f32.mxu0 0.0
      %2195 = vmatmul.mubr.f32.gmra.mrb[0].mxu0 %v1740
      %v2196 = vpop.f32.mrb[0].mxu0
      %v2197 = vadd.f32 %v1972, %v2196
      %v2198 = vpop.f32.mrb[0].mxu0
      %2199 = vmatprep.mubr.f32.mxu0 0.0
      %2200 = vmatmul.mubr.f32.gmra.mrb[0].mxu0 %v1741
      %v2201 = vpop.f32.mrb[0].mxu0
      %v2202 = vadd.f32 %v1977, %v2201
      %v2203 = vpop.f32.mrb[0].mxu0
      %2204 = vmatprep.mubr.f32.mxu0 0.0
      %2205 = vmatmul.mubr.f32.gmra.mrb[0].mxu0 %v1742
      %v2206 = vpop.f32.mrb[0].mxu0
      %v2207 = vadd.f32 %v1982, %v2206
      %v2208 = vpop.f32.mrb[0].mxu0
      %2209 = vmatprep.mubr.f32.mxu0 0.0
      %2210 = vmatmul.mubr.f32.gmra.mrb[0].mxu0 %v1743
      %v2211 = vpop.f32.mrb[0].mxu0
      %v2212 = vadd.f32 %v1987, %v2211
      %v2213 = vpop.f32.mrb[0].mxu0
      %2214 = vmatprep.mubr.f32.mxu0 0.0
      %2215 = vmatmul.mubr.f32.gmra.mrb[0].mxu0 %v1744
      %v2216 = vpop.f32.mrb[0].mxu0
      %v2217 = vadd.f32 %v1992, %v2216
      %v2218 = vpop.f32.mrb[0].mxu0
      %2219 = vmatprep.mubr.f32.mxu0 0.0
      %2220 = vmatmul.mubr.f32.gmra.mrb[0].mxu0 %v1745
      %v2221 = vpop.f32.mrb[0].mxu0
      %v2222 = vadd.f32 %v1997, %v2221
      %v2223 = vpop.f32.mrb[0].mxu0
      %2224 = vmatprep.mubr.f32.mxu0 0.0
      %2225 = vmatmul.mubr.f32.gmra.mrb[0].mxu0 %v1746
      %v2226 = vpop.f32.mrb[0].mxu0
      %v2227 = vadd.f32 %v2002, %v2226
      %v2228 = vpop.f32.mrb[0].mxu0
      %2229 = vmatprep.mubr.f32.mxu0 0.0
      %2230 = vmatmul.mubr.f32.gmra.mrb[0].mxu0 %v1747
      %v2231 = vpop.f32.mrb[0].mxu0
      %v2232 = vadd.f32 %v2007, %v2231
      %v2233 = vpop.f32.mrb[0].mxu0
      %2234 = vmatprep.mubr.f32.mxu0 0.0
      %2235 = vmatmul.mubr.f32.gmra.mrb[0].mxu0 %v1748
      %v2236 = vpop.f32.mrb[0].mxu0
      %v2237 = vadd.f32 %v2012, %v2236
      %v2238 = vpop.f32.mrb[0].mxu0
      %2239 = vmatprep.mubr.f32.mxu0 0.0
      %2240 = vmatmul.mubr.f32.gmra.mrb[0].mxu0 %v1749
      %v2241 = vpop.f32.mrb[0].mxu0
      %v2242 = vadd.f32 %v2017, %v2241
      %v2243 = vpop.f32.mrb[0].mxu0
      %2244 = vmatprep.mubr.f32.mxu0 0.0
      %2245 = vmatmul.mubr.f32.gmra.mrb[0].mxu0 %v1750
      %v2246 = vpop.f32.mrb[0].mxu0
      %v2247 = vadd.f32 %v2022, %v2246
      %v2248 = vpop.f32.mrb[0].mxu0
      %2249 = vdwg.mxu0
      %v2250 = vadd.f32 %v1496, %v2092
      %v2251 = vadd.f32 %v1501, %v2097
      %v2252 = vadd.f32 %v1506, %v2102
      %v2253 = vadd.f32 %v1511, %v2107
      %v2254 = vadd.f32 %v1516, %v2112
      %v2255 = vadd.f32 %v1521, %v2117
      %v2256 = vadd.f32 %v1526, %v2122
      %v2257 = vadd.f32 %v1531, %v2127
      %v2258 = vadd.f32 %v1536, %v2132
      %v2259 = vadd.f32 %v1541, %v2137
      %v2260 = vadd.f32 %v1546, %v2142
      %v2261 = vadd.f32 %v1551, %v2147
      %v2262 = vadd.f32 %v1556, %v2152
      %v2263 = vadd.f32 %v1561, %v2157
      %v2264 = vadd.f32 %v1566, %v2162
      %v2265 = vadd.f32 %v1571, %v2167
      %v2266 = vadd.f32 %v1576, %v2172
      %v2267 = vadd.f32 %v1581, %v2177
      %v2268 = vadd.f32 %v1586, %v2182
      %v2269 = vadd.f32 %v1591, %v2187
      %v2270 = vadd.f32 %v1596, %v2192
      %v2271 = vadd.f32 %v1601, %v2197
      %v2272 = vadd.f32 %v1606, %v2202
      %v2273 = vadd.f32 %v1611, %v2207
      %v2274 = vadd.f32 %v1616, %v2212
      %v2275 = vadd.f32 %v1621, %v2217
      %v2276 = vadd.f32 %v1626, %v2222
      %v2277 = vadd.f32 %v1631, %v2227
      %v2278 = vadd.f32 %v1636, %v2232
      %v2279 = vadd.f32 %v1641, %v2237
      %v2280 = vadd.f32 %v1646, %v2242
      %v2281 = vadd.f32 %v1651, %v2247
      %2282 = vst [vmem:[%s231] sm:$0xff] %v2250
      %2283 = vst [vmem:[%s231 + $0x8] sm:$0xff] %v2251
      %2284 = vst [vmem:[%s231 + $0x10] sm:$0xff] %v2252
      %2285 = vst [vmem:[%s231 + $0x18] sm:$0xff] %v2253
      %2286 = vst [vmem:[%s231 + $0x20] sm:$0xff] %v2254
      %2287 = vst [vmem:[%s231 + $0x28] sm:$0xff] %v2255
      %2288 = vst [vmem:[%s231 + $0x30] sm:$0xff] %v2256
      %2289 = vst [vmem:[%s231 + $0x38] sm:$0xff] %v2257
      %2290 = vst [vmem:[%s231 + $0x40] sm:$0xff] %v2258
      %2291 = vst [vmem:[%s231 + $0x48] sm:$0xff] %v2259
      %2292 = vst [vmem:[%s231 + $0x50] sm:$0xff] %v2260
      %2293 = vst [vmem:[%s231 + $0x58] sm:$0xff] %v2261
      %2294 = vst [vmem:[%s231 + $0x60] sm:$0xff] %v2262
      %2295 = vst [vmem:[%s231 + $0x68] sm:$0xff] %v2263
      %2296 = vst [vmem:[%s231 + $0x70] sm:$0xff] %v2264
      %2297 = vst [vmem:[%s231 + $0x78] sm:$0xff] %v2265
      %2298 = vst [vmem:[%s231 + $0x80] sm:$0xff] %v2266
      %2299 = vst [vmem:[%s231 + $0x88] sm:$0xff] %v2267
      %2300 = vst [vmem:[%s231 + $0x90] sm:$0xff] %v2268
      %2301 = vst [vmem:[%s231 + $0x98] sm:$0xff] %v2269
      %2302 = vst [vmem:[%s231 + $0xa0] sm:$0xff] %v2270
      %2303 = vst [vmem:[%s231 + $0xa8] sm:$0xff] %v2271
      %2304 = vst [vmem:[%s231 + $0xb0] sm:$0xff] %v2272
      %2305 = vst [vmem:[%s231 + $0xb8] sm:$0xff] %v2273
      %2306 = vst [vmem:[%s231 + $0xc0] sm:$0xff] %v2274
      %2307 = vst [vmem:[%s231 + $0xc8] sm:$0xff] %v2275
      %2308 = vst [vmem:[%s231 + $0xd0] sm:$0xff] %v2276
      %2309 = vst [vmem:[%s231 + $0xd8] sm:$0xff] %v2277
      %2310 = vst [vmem:[%s231 + $0xe0] sm:$0xff] %v2278
      %2311 = vst [vmem:[%s231 + $0xe8] sm:$0xff] %v2279
      %2312 = vst [vmem:[%s231 + $0xf0] sm:$0xff] %v2280
      %2313 = vst [vmem:[%s231 + $0xf8] sm:$0xff] %v2281
      %v2314 = vadd.f32 %v2250, %v2251
      %v2315 = vadd.f32 %v2314, %v2252
      %v2316 = vadd.f32 %v2315, %v2253
      %v2317 = vadd.f32 %v2316, %v2254
      %v2318 = vadd.f32 %v2317, %v2255
      %v2319 = vadd.f32 %v2318, %v2256
      %v2320 = vadd.f32 %v2319, %v2257
      %v2321 = vadd.f32 %v2320, %v2258
      %v2322 = vadd.f32 %v2321, %v2259
      %v2323 = vadd.f32 %v2322, %v2260
      %v2324 = vadd.f32 %v2323, %v2261
      %v2325 = vadd.f32 %v2324, %v2262
      %v2326 = vadd.f32 %v2325, %v2263
      %v2327 = vadd.f32 %v2326, %v2264
      %v2328 = vadd.f32 %v2327, %v2265
      %v2329 = vadd.f32 %v2328, %v2266
      %v2330 = vadd.f32 %v2329, %v2267
      %v2331 = vadd.f32 %v2330, %v2268
      %v2332 = vadd.f32 %v2331, %v2269
      %v2333 = vadd.f32 %v2332, %v2270
      %v2334 = vadd.f32 %v2333, %v2271
      %v2335 = vadd.f32 %v2334, %v2272
      %v2336 = vadd.f32 %v2335, %v2273
      %v2337 = vadd.f32 %v2336, %v2274
      %v2338 = vadd.f32 %v2337, %v2275
      %v2339 = vadd.f32 %v2338, %v2276
      %v2340 = vadd.f32 %v2339, %v2277
      %v2341 = vadd.f32 %v2340, %v2278
      %v2342 = vadd.f32 %v2341, %v2279
      %v2343 = vadd.f32 %v2342, %v2280
      %v2344 = vadd.f32 %v2343, %v2281
      %v2345 = vrot.slane %v2344, 4
      %v2346 = vadd.f32 %v2344, %v2345
      %v2347 = vrot.slane %v2346, 2
      %v2348 = vadd.f32 %v2346, %v2347
      %v2349 = vrot.slane %v2348, 1
      %v2350 = vadd.f32 %v2348, %v2349
      %2351 = vst [vmem:[%s235] sm:$0x1] %v2350
      %v2352 = vmul.f32 %v2250, %v2250
      %v2353 = vmul.f32 %v2251, %v2251
      %v2354 = vmul.f32 %v2252, %v2252
      %v2355 = vmul.f32 %v2253, %v2253
      %v2356 = vmul.f32 %v2254, %v2254
      %v2357 = vmul.f32 %v2255, %v2255
      %v2358 = vmul.f32 %v2256, %v2256
      %v2359 = vmul.f32 %v2257, %v2257
      %v2360 = vmul.f32 %v2258, %v2258
      %v2361 = vmul.f32 %v2259, %v2259
      %v2362 = vmul.f32 %v2260, %v2260
      %v2363 = vmul.f32 %v2261, %v2261
      %v2364 = vmul.f32 %v2262, %v2262
      %v2365 = vmul.f32 %v2263, %v2263
      %v2366 = vmul.f32 %v2264, %v2264
      %v2367 = vmul.f32 %v2265, %v2265
      %v2368 = vmul.f32 %v2266, %v2266
      %v2369 = vmul.f32 %v2267, %v2267
      %v2370 = vmul.f32 %v2268, %v2268
      %v2371 = vmul.f32 %v2269, %v2269
      %v2372 = vmul.f32 %v2270, %v2270
      %v2373 = vmul.f32 %v2271, %v2271
      %v2374 = vmul.f32 %v2272, %v2272
      %v2375 = vmul.f32 %v2273, %v2273
      %v2376 = vmul.f32 %v2274, %v2274
      %v2377 = vmul.f32 %v2275, %v2275
      %v2378 = vmul.f32 %v2276, %v2276
      %v2379 = vmul.f32 %v2277, %v2277
      %v2380 = vmul.f32 %v2278, %v2278
      %v2381 = vmul.f32 %v2279, %v2279
      %v2382 = vmul.f32 %v2280, %v2280
      %v2383 = vmul.f32 %v2281, %v2281
      %v2384 = vadd.f32 %v2352, %v2353
      %v2385 = vadd.f32 %v2384, %v2354
      %v2386 = vadd.f32 %v2385, %v2355
      %v2387 = vadd.f32 %v2386, %v2356
      %v2388 = vadd.f32 %v2387, %v2357
      %v2389 = vadd.f32 %v2388, %v2358
      %v2390 = vadd.f32 %v2389, %v2359
      %v2391 = vadd.f32 %v2390, %v2360
      %v2392 = vadd.f32 %v2391, %v2361
      %v2393 = vadd.f32 %v2392, %v2362
      %v2394 = vadd.f32 %v2393, %v2363
      %v2395 = vadd.f32 %v2394, %v2364
      %v2396 = vadd.f32 %v2395, %v2365
      %v2397 = vadd.f32 %v2396, %v2366
      %v2398 = vadd.f32 %v2397, %v2367
      %v2399 = vadd.f32 %v2398, %v2368
      %v2400 = vadd.f32 %v2399, %v2369
      %v2401 = vadd.f32 %v2400, %v2370
      %v2402 = vadd.f32 %v2401, %v2371
      %v2403 = vadd.f32 %v2402, %v2372
      %v2404 = vadd.f32 %v2403, %v2373
      %v2405 = vadd.f32 %v2404, %v2374
      %v2406 = vadd.f32 %v2405, %v2375
      %v2407 = vadd.f32 %v2406, %v2376
      %v2408 = vadd.f32 %v2407, %v2377
      %v2409 = vadd.f32 %v2408, %v2378
      %v2410 = vadd.f32 %v2409, %v2379
      %v2411 = vadd.f32 %v2410, %v2380
      %v2412 = vadd.f32 %v2411, %v2381
      %v2413 = vadd.f32 %v2412, %v2382
      %v2414 = vadd.f32 %v2413, %v2383
      %v2415 = vrot.slane %v2414, 4
      %v2416 = vadd.f32 %v2414, %v2415
      %v2417 = vrot.slane %v2416, 2
      %v2418 = vadd.f32 %v2416, %v2417
      %v2419 = vrot.slane %v2418, 1
      %v2420 = vadd.f32 %v2418, %v2419
      %2421 = vst [vmem:[%s235 + $0x1] sm:$0x1] %v2420
      %p2422 = scmp.lt.s32.totalorder %s17, 1
      %s2423 = scalar_select %p2422, %s17, 1
      %s2424 = smul.addr %s2423, 32
      %s2425 = smul.addr %s2424, 8
      %s2426 = scalar_lea.vmem %s4, %s2425
      %p2427 = scmp.lt.s32.totalorder %s17, 1
      %s2428 = scalar_select %p2427, %s17, 1
      %s2429 = smul.addr %s2428, 2
      %s2430 = scalar_lea.vmem %s5, %s2429
      // Predicated region
      $region37: #{bottleneck_forward.5} parent=35 // pred_check
        %p2431 = pneg %p124
      $region38: #{bottleneck_forward.5} parent=35 // pred_check_branch
        %2433 = sbr.rel (%p2431) target = $region40
      $region39: #{bottleneck_forward.5} parent=35 // pred_region
        _
      $region40: #{bottleneck_forward.5} parent=35 // pred_fallthru
        _
      // Predicated region
      $region41: #{bottleneck_forward.5} parent=35 // pred_check
        %p2434 = pneg %p150
      $region42: #{bottleneck_forward.5} parent=35 // pred_check_branch
        %2436 = sbr.rel (%p2434) target = $region44
      $region43: #{bottleneck_forward.5} parent=35 // pred_region
        _
      $region44: #{bottleneck_forward.5} parent=35 // pred_fallthru
        _
    $region36: #{bottleneck_forward.5} parent=5 // pred_fallthru
      _
    %p2437 = scmp.le.s32.totalorder 2, %s12
    // Predicated region
    $region45: #{bottleneck_forward.5} parent=5 // pred_check
      %p2438 = pneg %p2437
    $region46: #{bottleneck_forward.5} parent=5 // pred_check_branch
      %2440 = sbr.rel (%p2438) target = $region48
    $region47: #{bottleneck_forward.5} parent=5 // pred_region
      %s2441 = ssub.s32 %s12, 2
      // Predicated region
      $region49: #{bottleneck_forward.5} parent=47 // pred_check
        %p2442 = pneg %p130
      $region50: #{bottleneck_forward.5} parent=47 // pred_check_branch
        %2444 = sbr.rel (%p2442) target = $region52
      $region51: #{bottleneck_forward.5} parent=47 // pred_region
        %p2445 = scmp.lt.s32.totalorder %s18, 1
        %s2446 = scalar_select %p2445, %s18, 1
        %s2447 = smul.addr %s2446, 32
        %s2448 = smul.addr %s2447, 8
        %s2449 = scalar_lea.vmem %s4, %s2448
      $region52: #{bottleneck_forward.5} parent=47 // pred_fallthru
        _
      // Predicated region
      $region53: #{bottleneck_forward.5} parent=47 // pred_check
        %p2450 = pneg %p156
      $region54: #{bottleneck_forward.5} parent=47 // pred_check_branch
        %2452 = sbr.rel (%p2450) target = $region56
      $region55: #{bottleneck_forward.5} parent=47 // pred_region
        %p2453 = scmp.lt.s32.totalorder %s18, 1
        %s2454 = scalar_select %p2453, %s18, 1
        %s2455 = smul.addr %s2454, 2
        %s2456 = scalar_lea.vmem %s5, %s2455
      $region56: #{bottleneck_forward.5} parent=47 // pred_fallthru
        _
    $region48: #{bottleneck_forward.5} parent=5 // pred_fallthru
      _
  $region6: #{bottleneck_forward.5} parent=0 // loop_footer
    %s16 = sadd.s32 1, %s12
  $region7: #{bottleneck_forward.5} parent=0 // loop_footer_branch
    %11 = sbr.rel target = $region3
  $region8: #{bottleneck_forward.5} parent=0 // loop_exit
    _

</llo_original>
